<compile_context>
chip_gen: v5e
topology: v5e:2x2
jax: 0.10.0
libtpu: 0.0.40
codegen_flags: <defaults>
</compile_context>

<pallas_src>
import numpy as np
import jax
import jax.numpy as jnp
from jax.experimental import pallas as pl
from jax.experimental.pallas import tpu as pltpu


# --------------------------- deterministic parameters ---------------------------

class KeyGen:
    def __init__(self, seed):
        self._key = jax.random.PRNGKey(seed)

    def __call__(self):
        self._key, sub = jax.random.split(self._key)
        return sub


def conv_weight(kg, k, cin, cout):
    w = np.asarray(jax.random.normal(kg(), (k, k, cin, cout), jnp.float32))
    return w / np.sqrt(k * k * cin)


def bn_scale_shift(kg, c, eps=1e-5):
    # Eval-mode BatchNorm folded into per-channel scale/shift.
    gamma = 1.0 + 0.1 * np.asarray(jax.random.normal(kg(), (c,), jnp.float32))
    beta = 0.1 * np.asarray(jax.random.normal(kg(), (c,), jnp.float32))
    mean = 0.1 * np.asarray(jax.random.normal(kg(), (c,), jnp.float32))
    var = np.asarray(jax.random.uniform(kg(), (c,), jnp.float32, minval=0.5, maxval=1.5))
    scale = gamma / np.sqrt(var + eps)
    shift = beta - mean * scale
    return scale.astype(np.float32), shift.astype(np.float32)


# ----------------- constant matrices for the (N*H, W*C) layout -----------------

def conv3_band_cat(w, width, stride=1):
    """w: (3,3,cin,cout), BN scale folded.
    Returns (width*cin, 3*wout*cout): banded blocks for kernel rows dy=0,1,2
    concatenated along the output axis (one matmul per conv).  Only output
    columns with wo % stride == 0 are emitted (folds the horizontal stride)."""
    _, _, cin, cout = w.shape
    wout = width // stride
    ncol = wout * cout
    b = np.zeros((width * cin, 3 * ncol), np.float32)
    for dy in range(3):
        for wo_i in range(wout):
            wo = wo_i * stride
            for dx in range(3):
                wi = wo + dx - 1
                if 0 <= wi < width:
                    b[wi * cin:(wi + 1) * cin,
                      dy * ncol + wo_i * cout: dy * ncol + (wo_i + 1) * cout] = w[dy, dx]
    return b


def conv1_block_mat(w1, width):
    cin, cout = w1.shape
    b = np.zeros((width * cin, width * cout), np.float32)
    for i in range(width):
        b[i * cin:(i + 1) * cin, i * cout:(i + 1) * cout] = w1
    return b


def row_subsample_mat(n, h):
    ho = h // 2
    m = np.zeros((n * ho, n * h), np.float32)
    for b in range(n):
        for i in range(ho):
            m[b * ho + i, b * h + 2 * i] = 1.0
    return m


def row_pool_mat(n, h):
    ho = h // 2
    m = np.zeros((n * ho, n * h), np.float32)
    for b in range(n):
        for i in range(ho):
            m[b * ho + i, b * h + 2 * i] = 0.5
            m[b * ho + i, b * h + 2 * i + 1] = 0.5
    return m


def col_pool_conv_mat(width, w1):
    """2x2 avg-pool (column half, 0.5) fused with the downsample 1x1 conv."""
    cin, cout = w1.shape
    wo = width // 2
    m = np.zeros((width * cin, wo * cout), np.float32)
    for i in range(wo):
        m[(2 * i) * cin:(2 * i + 1) * cin, i * cout:(i + 1) * cout] = 0.5 * w1
        m[(2 * i + 1) * cin:(2 * i + 2) * cin, i * cout:(i + 1) * cout] = 0.5 * w1
    return m


def row_gap_mat(n, h):
    m = np.zeros((n, n * h), np.float32)
    for b in range(n):
        m[b, b * h:(b + 1) * h] = 1.0 / h
    return m


def col_gap_mat(width, c):
    m = np.zeros((width * c, c), np.float32)
    for i in range(width):
        m[i * c:(i + 1) * c, :] = np.eye(c, dtype=np.float32) / width
    return m


# ----------------------------- network builder -----------------------------

def build_probed_tiny_network(seed, C, N, genotype, num_classes, probes,
                              batch=2, height=16, width=16, in_ch=3):
    kg = KeyGen(seed)
    params = []
    flops = [0.0]

    def add(arr, dtype):
        params.append(jnp.asarray(np.asarray(arr), dtype))
        return len(params) - 1

    def matmul_flops(m, k, n):
        flops[0] += 2.0 * m * k * n

    # ---- stem: Conv3x3(3->C) + BN (no ReLU) ----
    stem_w = conv_weight(kg, 3, in_ch, C)
    stem_scale, stem_shift = bn_scale_shift(kg, C)
    stem_spec = {'relu': False, 'h': height, 'ncol': width * C,
                 'W': add(conv3_band_cat(stem_w * stem_scale[None, None, None, :], width),
                          jnp.bfloat16),
                 'bias': add(np.tile(stem_shift, width)[None, :], jnp.float32)}
    matmul_flops(batch * height, width * in_ch, 3 * width * C)

    # ---- cells ----
    layer_channels = [C] * N + [C * 2] + [C * 2] * N + [C * 4] + [C * 4] * N
    layer_reductions = [False] * N + [True] + [False] * N + [True] + [False] * N

    c_prev, h_cur, w_cur = C, height, width
    cell_specs, probe_2d, probe_nhwc = [], [], []
    probe_set = set(probes)

    for ci, (c_curr, reduction) in enumerate(zip(layer_channels, layer_reductions)):
        if reduction:
            wo, ho = w_cur // 2, h_cur // 2
            # conv_a: ReLU-Conv3x3(stride 2)-BN; horizontal stride folded into the bands.
            wa = conv_weight(kg, 3, c_prev, c_curr)
            sa, ba = bn_scale_shift(kg, c_curr)
            conv_a = {'relu': True, 'h': h_cur, 'ncol': wo * c_curr,
                      'W': add(conv3_band_cat(wa * sa[None, None, None, :], w_cur, stride=2),
                               jnp.bfloat16),
                      'bias': add(np.tile(ba, wo)[None, :], jnp.float32),
                      'Srow': add(row_subsample_mat(batch, h_cur), jnp.bfloat16)}
            matmul_flops(batch * h_cur, w_cur * c_prev, 3 * wo * c_curr)
            matmul_flops(batch * ho, batch * h_cur, wo * c_curr)
            # conv_b: ReLU-Conv3x3(stride 1)-BN at the reduced resolution.
            wb = conv_weight(kg, 3, c_curr, c_curr)
            sb, bb = bn_scale_shift(kg, c_curr)
            conv_b = {'relu': True, 'h': ho, 'ncol': wo * c_curr,
                      'W': add(conv3_band_cat(wb * sb[None, None, None, :], wo),
                               jnp.bfloat16),
                      'bias': add(np.tile(bb, wo)[None, :], jnp.float32)}
            matmul_flops(batch * ho, wo * c_curr, 3 * wo * c_curr)
            # downsample: AvgPool2x2 + Conv1x1 (no BN / ReLU) -> D (cols) / Prow (rows).
            w1 = conv_weight(kg, 1, c_prev, c_curr)[0, 0]
            cell_specs.append({'kind': 'res', 'conv_a': conv_a, 'conv_b': conv_b,
                               'D': add(col_pool_conv_mat(w_cur, w1), jnp.bfloat16),
                               'Prow': add(row_pool_mat(batch, h_cur), jnp.bfloat16)})
            matmul_flops(batch * h_cur, w_cur * c_prev, wo * c_curr)
            matmul_flops(batch * ho, batch * h_cur, wo * c_curr)
            h_cur, w_cur = ho, wo
        else:
            ncol = w_cur * c_curr
            nodes, group_blocks, group_cols = [], {}, {}
            for node_info in genotype:
                node_ops = []
                for op_name, op_in in node_info:
                    cin = c_prev if op_in == 0 else c_curr
                    if op_name == 'skip_connect':
                        assert cin == c_curr, "skip_connect here must be Identity"
                        node_ops.append({'type': 'skip', 'src': op_in})
                        continue
                    if op_name == 'nor_conv_3x3':
                        wgt = conv_weight(kg, 3, cin, c_curr)
                        scale, shift = bn_scale_shift(kg, c_curr)
                        blk = conv3_band_cat(wgt * scale[None, None, None, :], w_cur)
                        op = {'type': 'conv3', 'src': op_in, 'ncol': ncol, 'h': h_cur,
                              'bias': add(np.tile(shift, w_cur)[None, :], jnp.float32)}
                    elif op_name == 'nor_conv_1x1':
                        wgt = conv_weight(kg, 1, cin, c_curr)[0, 0]
                        scale, shift = bn_scale_shift(kg, c_curr)
                        blk = conv1_block_mat(wgt * scale[None, :], w_cur)
                        op = {'type': 'conv1', 'src': op_in, 'ncol': ncol,
                              'bias': add(np.tile(shift, w_cur)[None, :], jnp.float32)}
                    else:
                        # TODO(synk): pooling / sep-conv / factorized-reduce / zero NAS
                        # ops are not needed for this genotype.
                        raise NotImplementedError(op_name)
                    # ops sharing the same source node are concatenated along the
                    # output axis -> one big matmul, sliced per op in the kernel.
                    op['off'] = group_cols.get(op_in, 0)
                    group_cols[op_in] = op['off'] + blk.shape[1]
                    group_blocks.setdefault(op_in, []).append(blk)
                    matmul_flops(batch * h_cur, w_cur * cin, blk.shape[1])
                    node_ops.append(op)
                nodes.append(node_ops)
            groups = {src: add(np.concatenate(blks, axis=1), jnp.bfloat16)
                      for src, blks in group_blocks.items()}
            cell_specs.append({'kind': 'infer', 'nodes': nodes, 'groups': groups})
        c_prev = c_curr
        if ci in probe_set:
            probe_2d.append((batch * h_cur, w_cur * c_prev))
            probe_nhwc.append((batch, h_cur, w_cur, c_prev))

    # ---- head: BN -> ReLU -> global average pool -> Linear ----
    hf, wf, cf = h_cur, w_cur, c_prev
    h_scale, h_shift = bn_scale_shift(kg, cf)
    fc_w = np.asarray(jax.random.normal(kg(), (cf, num_classes), jnp.float32)) / np.sqrt(cf)
    fc_b = 0.1 * np.asarray(jax.random.normal(kg(), (1, num_classes), jnp.float32))
    head = {'scale': add(np.tile(h_scale, wf)[None, :], jnp.float32),
            'shift': add(np.tile(h_shift, wf)[None, :], jnp.float32),
            'Grow': add(row_gap_mat(batch, hf), jnp.bfloat16),
            'Gcol': add(col_gap_mat(wf, cf), jnp.bfloat16),
            'fcw': add(fc_w, jnp.float32),
            'fcb': add(fc_b, jnp.float32)}
    matmul_flops(batch * hf, wf * cf, cf)
    matmul_flops(batch, batch * hf, cf)
    matmul_flops(batch, cf, num_classes)

    n_prm = len(params)

    # --------------------------- the fused Pallas kernel ---------------------------
    def kernel(*refs):
        x_ref = refs[0]
        prm = refs[1:1 + n_prm]
        out_refs = refs[1 + n_prm:]

        mask_cache = {}   # (rows, H) -> per-image boundary masks, built once per trace

        def dot(a, b):
            return jnp.dot(a, b, preferred_element_type=jnp.float32)

        def row_masks(rows, h):
            key = (rows, h)
            if key not in mask_cache:
                yi = jax.lax.broadcasted_iota(jnp.int32, (rows, 1), 0) % h
                m0 = jnp.where(yi != 0, 1.0, 0.0)          # zero first row of each image
                m2 = jnp.where(yi != h - 1, 1.0, 0.0)      # zero last row of each image
                mask_cache[key] = (m0, m2)
            return mask_cache[key]

        def conv3_post(u, off, ncol, h, bias, srow=None):
            # u holds [u_dy0 | u_dy1 | u_dy2] (+ other ops' columns) at 128-aligned offsets.
            rows = u.shape[0]
            u0 = u[:, off:off + ncol]
            u1 = u[:, off + ncol:off + 2 * ncol]
            u2 = u[:, off + 2 * ncol:off + 3 * ncol]
            m0, m2 = row_masks(rows, h)
            # Row shifts on the XLU (roll) + VPU masks replace the old fp32 matmuls.
            v = (u1
                 + m0 * pltpu.roll(u0, 1, 0)
                 + m2 * pltpu.roll(u2, rows - 1, 0))
            if srow is not None:                            # vertical stride-2 pick
                v = dot(srow, v.astype(jnp.bfloat16))
            return v + bias

        def conv3_full(x, spec):
            z = jnp.maximum(x, 0.0) if spec['relu'] else x
            u = dot(z.astype(jnp.bfloat16), prm[spec['W']][...])
            srow = prm[spec['Srow']][...] if 'Srow' in spec else None
            return conv3_post(u, 0, spec['ncol'], spec['h'], prm[spec['bias']][...], srow)

        def res_block(x, spec):
            ya = conv3_full(x, spec['conv_a'])              # stride-2 conv + BN (folded)
            yb = conv3_full(ya, spec['conv_b'])
            inner = dot(x.astype(jnp.bfloat16), prm[spec['D']][...])      # col pool + 1x1
            res = dot(prm[spec['Prow']][...], inner.astype(jnp.bfloat16)) # row pool
            return res + yb

        def infer_cell(x, spec):
            nodes = [x]
            gout = {}                                       # src -> grouped matmul result
            for node in spec['nodes']:
                feat = None
                for op in node:
                    src = op['src']
                    if op['type'] == 'skip':
                        o = nodes[src]
                    else:
                        if src not in gout:                 # one matmul per source node
                            z = jnp.maximum(nodes[src], 0.0).astype(jnp.bfloat16)
                            gout[src] = dot(z, prm[spec['groups'][src]][...])
                        u = gout[src]
                        if op['type'] == 'conv3':
                            o = conv3_post(u, op['off'], op['ncol'], op['h'],
                                           prm[op['bias']][...])
                        else:                               # conv1
                            o = u[:, op['off']:op['off'] + op['ncol']] + prm[op['bias']][...]
                    feat = o if feat is None else feat + o  # fused node sum
                nodes.append(feat)
            return nodes[-1]

        feat = conv3_full(x_ref[...], stem_spec)
        probe_k = 0
        for ci, cs in enumerate(cell_specs):
            feat = res_block(feat, cs) if cs['kind'] == 'res' else infer_cell(feat, cs)
            if ci in probe_set:
                out_refs[2 + probe_k][...] = feat
                probe_k += 1

        y = jnp.maximum(feat * prm[head['scale']][...] + prm[head['shift']][...], 0.0)
        col = dot(y.astype(jnp.bfloat16), prm[head['Gcol']][...])
        pooled = dot(prm[head['Grow']][...], col.astype(jnp.bfloat16))
        out_refs[0][...] = pooled
        out_refs[1][...] = dot(pooled, prm[head['fcw']][...]) + prm[head['fcb']][...]

    # --------------------------- pallas_call wrapper ---------------------------
    x_shape = (batch * height, width * in_ch)

    def full_spec(shape):
        return pl.BlockSpec(shape, lambda i: (0,) * len(shape))

    out_shape = (jax.ShapeDtypeStruct((batch, cf), jnp.float32),
                 jax.ShapeDtypeStruct((batch, num_classes), jnp.float32)) + tuple(
        jax.ShapeDtypeStruct(s, jnp.float32) for s in probe_2d)

    in_specs = [full_spec(x_shape)] + [full_spec(tuple(p.shape)) for p in params]
    out_specs = tuple(full_spec(tuple(s.shape)) for s in out_shape)

    bytes_accessed = int(np.prod(x_shape)) * 4
    bytes_accessed += sum(int(np.prod(p.shape)) * p.dtype.itemsize for p in params)
    bytes_accessed += sum(int(np.prod(s.shape)) * 4 for s in out_shape)

    fused = pl.pallas_call(
        kernel,
        grid=(1,),
        out_shape=out_shape,
        in_specs=in_specs,
        out_specs=out_specs,
        compiler_params=pltpu.CompilerParams(dimension_semantics=("arbitrary",)),
        cost_estimate=pl.CostEstimate(flops=int(flops[0]), transcendentals=0,
                                      bytes_accessed=int(bytes_accessed)),
    )

    @jax.jit
    def forward(x_nhwc):
        x2d = x_nhwc.reshape(x_shape)                  # (N*H, W*C) lane-dense layout
        outs = fused(x2d, *params)
        pooled, logits = outs[0], outs[1]
        probe_feats = tuple(o.reshape(s) for o, s in zip(outs[2:], probe_nhwc))
        return pooled, logits, probe_feats

    return forward


# ----------------------------------- main -----------------------------------

if __name__ == "__main__":
    C, N, num_classes = 8, 1, 10
    # NAS-Bench-201-style genotype: 3 intermediate nodes, each entry is a tuple of
    # (op_name, input_node_index).
    genotype = (
        (('nor_conv_3x3', 0),),
        (('skip_connect', 0), ('nor_conv_1x1', 1)),
        (('nor_conv_3x3', 0), ('skip_connect', 1), ('nor_conv_1x1', 2)),
    )
    probes = [1, 3]  # probe after both reduction (ResNetBasicblock) cells

    net = build_probed_tiny_network(seed=1, C=C, N=N, genotype=genotype,
                                    num_classes=num_classes, probes=probes,
                                    batch=2, height=16, width=16, in_ch=3)

    x_nchw = jax.random.normal(jax.random.PRNGKey(0), (2, 3, 16, 16), jnp.float32)
    x_nhwc = jnp.transpose(x_nchw, (0, 2, 3, 1))       # NCHW (PyTorch) -> NHWC

    out, logits, probe_feats = net(x_nhwc)
    jax.block_until_ready((out, logits, probe_feats))

    assert out.shape == (2, 4 * C)
    assert logits.shape == (2, num_classes)
    assert probe_feats[0].shape == (2, 8, 8, 2 * C)    # NHWC probe of cell 1
    assert probe_feats[1].shape == (2, 4, 4, 4 * C)    # NHWC probe of cell 3
    print("KERNEL_OK")
</pallas_src>

<mosaic_0001>
module attributes {stable_mosaic.version = 11 : i64} {
  func.func @kernel(%arg0: i32, %arg1: memref<32x48xf32, #tpu.memory_space<vmem>>, %arg2: memref<48x384xbf16, #tpu.memory_space<vmem>>, %arg3: memref<1x128xf32, #tpu.memory_space<vmem>>, %arg4: memref<1x128xf32, #tpu.memory_space<vmem>>, %arg5: memref<1x128xf32, #tpu.memory_space<vmem>>, %arg6: memref<1x128xf32, #tpu.memory_space<vmem>>, %arg7: memref<1x128xf32, #tpu.memory_space<vmem>>, %arg8: memref<128x768xbf16, #tpu.memory_space<vmem>>, %arg9: memref<128x128xbf16, #tpu.memory_space<vmem>>, %arg10: memref<128x128xbf16, #tpu.memory_space<vmem>>, %arg11: memref<128x384xbf16, #tpu.memory_space<vmem>>, %arg12: memref<1x128xf32, #tpu.memory_space<vmem>>, %arg13: memref<16x32xbf16, #tpu.memory_space<vmem>>, %arg14: memref<128x384xbf16, #tpu.memory_space<vmem>>, %arg15: memref<1x128xf32, #tpu.memory_space<vmem>>, %arg16: memref<128x128xbf16, #tpu.memory_space<vmem>>, %arg17: memref<16x32xbf16, #tpu.memory_space<vmem>>, %arg18: memref<1x128xf32, #tpu.memory_space<vmem>>, %arg19: memref<1x128xf32, #tpu.memory_space<vmem>>, %arg20: memref<1x128xf32, #tpu.memory_space<vmem>>, %arg21: memref<1x128xf32, #tpu.memory_space<vmem>>, %arg22: memref<128x768xbf16, #tpu.memory_space<vmem>>, %arg23: memref<128x128xbf16, #tpu.memory_space<vmem>>, %arg24: memref<128x128xbf16, #tpu.memory_space<vmem>>, %arg25: memref<128x384xbf16, #tpu.memory_space<vmem>>, %arg26: memref<1x128xf32, #tpu.memory_space<vmem>>, %arg27: memref<8x16xbf16, #tpu.memory_space<vmem>>, %arg28: memref<128x384xbf16, #tpu.memory_space<vmem>>, %arg29: memref<1x128xf32, #tpu.memory_space<vmem>>, %arg30: memref<128x128xbf16, #tpu.memory_space<vmem>>, %arg31: memref<8x16xbf16, #tpu.memory_space<vmem>>, %arg32: memref<1x128xf32, #tpu.memory_space<vmem>>, %arg33: memref<1x128xf32, #tpu.memory_space<vmem>>, %arg34: memref<1x128xf32, #tpu.memory_space<vmem>>, %arg35: memref<1x128xf32, #tpu.memory_space<vmem>>, %arg36: memref<128x768xbf16, #tpu.memory_space<vmem>>, %arg37: memref<128x128xbf16, #tpu.memory_space<vmem>>, %arg38: memref<128x128xbf16, #tpu.memory_space<vmem>>, %arg39: memref<1x128xf32, #tpu.memory_space<vmem>>, %arg40: memref<1x128xf32, #tpu.memory_space<vmem>>, %arg41: memref<2x8xbf16, #tpu.memory_space<vmem>>, %arg42: memref<128x32xbf16, #tpu.memory_space<vmem>>, %arg43: memref<32x10xf32, #tpu.memory_space<vmem>>, %arg44: memref<1x10xf32, #tpu.memory_space<vmem>>, %arg45: memref<2x32xf32, #tpu.memory_space<vmem>>, %arg46: memref<2x10xf32, #tpu.memory_space<vmem>>, %arg47: memref<16x128xf32, #tpu.memory_space<vmem>>, %arg48: memref<8x128xf32, #tpu.memory_space<vmem>>) attributes {dimension_semantics = [#tpu.dimension_semantics<arbitrary>], iteration_bounds = array<i64: 1>, scalar_prefetch = 0 : i64, scratch_operands = 0 : i64, tpu.core_type = #tpu.core_type<tc>, window_params = [{pipeline_mode = #tpu.pipeline_mode<synchronous>, transform_indices = @transform_0, window_bounds = array<i64: 32, 48>}, {pipeline_mode = #tpu.pipeline_mode<synchronous>, transform_indices = @transform_1, window_bounds = array<i64: 48, 384>}, {pipeline_mode = #tpu.pipeline_mode<synchronous>, transform_indices = @transform_2, window_bounds = array<i64: 1, 128>}, {pipeline_mode = #tpu.pipeline_mode<synchronous>, transform_indices = @transform_3, window_bounds = array<i64: 1, 128>}, {pipeline_mode = #tpu.pipeline_mode<synchronous>, transform_indices = @transform_4, window_bounds = array<i64: 1, 128>}, {pipeline_mode = #tpu.pipeline_mode<synchronous>, transform_indices = @transform_5, window_bounds = array<i64: 1, 128>}, {pipeline_mode = #tpu.pipeline_mode<synchronous>, transform_indices = @transform_6, window_bounds = array<i64: 1, 128>}, {pipeline_mode = #tpu.pipeline_mode<synchronous>, transform_indices = @transform_7, window_bounds = array<i64: 128, 768>}, {pipeline_mode = #tpu.pipeline_mode<synchronous>, transform_indices = @transform_8, window_bounds = array<i64: 128, 128>}, {pipeline_mode = #tpu.pipeline_mode<synchronous>, transform_indices = @transform_9, window_bounds = array<i64: 128, 128>}, {pipeline_mode = #tpu.pipeline_mode<synchronous>, transform_indices = @transform_10, window_bounds = array<i64: 128, 384>}, {pipeline_mode = #tpu.pipeline_mode<synchronous>, transform_indices = @transform_11, window_bounds = array<i64: 1, 128>}, {pipeline_mode = #tpu.pipeline_mode<synchronous>, transform_indices = @transform_12, window_bounds = array<i64: 16, 32>}, {pipeline_mode = #tpu.pipeline_mode<synchronous>, transform_indices = @transform_13, window_bounds = array<i64: 128, 384>}, {pipeline_mode = #tpu.pipeline_mode<synchronous>, transform_indices = @transform_14, window_bounds = array<i64: 1, 128>}, {pipeline_mode = #tpu.pipeline_mode<synchronous>, transform_indices = @transform_15, window_bounds = array<i64: 128, 128>}, {pipeline_mode = #tpu.pipeline_mode<synchronous>, transform_indices = @transform_16, window_bounds = array<i64: 16, 32>}, {pipeline_mode = #tpu.pipeline_mode<synchronous>, transform_indices = @transform_17, window_bounds = array<i64: 1, 128>}, {pipeline_mode = #tpu.pipeline_mode<synchronous>, transform_indices = @transform_18, window_bounds = array<i64: 1, 128>}, {pipeline_mode = #tpu.pipeline_mode<synchronous>, transform_indices = @transform_19, window_bounds = array<i64: 1, 128>}, {pipeline_mode = #tpu.pipeline_mode<synchronous>, transform_indices = @transform_20, window_bounds = array<i64: 1, 128>}, {pipeline_mode = #tpu.pipeline_mode<synchronous>, transform_indices = @transform_21, window_bounds = array<i64: 128, 768>}, {pipeline_mode = #tpu.pipeline_mode<synchronous>, transform_indices = @transform_22, window_bounds = array<i64: 128, 128>}, {pipeline_mode = #tpu.pipeline_mode<synchronous>, transform_indices = @transform_23, window_bounds = array<i64: 128, 128>}, {pipeline_mode = #tpu.pipeline_mode<synchronous>, transform_indices = @transform_24, window_bounds = array<i64: 128, 384>}, {pipeline_mode = #tpu.pipeline_mode<synchronous>, transform_indices = @transform_25, window_bounds = array<i64: 1, 128>}, {pipeline_mode = #tpu.pipeline_mode<synchronous>, transform_indices = @transform_26, window_bounds = array<i64: 8, 16>}, {pipeline_mode = #tpu.pipeline_mode<synchronous>, transform_indices = @transform_27, window_bounds = array<i64: 128, 384>}, {pipeline_mode = #tpu.pipeline_mode<synchronous>, transform_indices = @transform_28, window_bounds = array<i64: 1, 128>}, {pipeline_mode = #tpu.pipeline_mode<synchronous>, transform_indices = @transform_29, window_bounds = array<i64: 128, 128>}, {pipeline_mode = #tpu.pipeline_mode<synchronous>, transform_indices = @transform_30, window_bounds = array<i64: 8, 16>}, {pipeline_mode = #tpu.pipeline_mode<synchronous>, transform_indices = @transform_31, window_bounds = array<i64: 1, 128>}, {pipeline_mode = #tpu.pipeline_mode<synchronous>, transform_indices = @transform_32, window_bounds = array<i64: 1, 128>}, {pipeline_mode = #tpu.pipeline_mode<synchronous>, transform_indices = @transform_33, window_bounds = array<i64: 1, 128>}, {pipeline_mode = #tpu.pipeline_mode<synchronous>, transform_indices = @transform_34, window_bounds = array<i64: 1, 128>}, {pipeline_mode = #tpu.pipeline_mode<synchronous>, transform_indices = @transform_35, window_bounds = array<i64: 128, 768>}, {pipeline_mode = #tpu.pipeline_mode<synchronous>, transform_indices = @transform_36, window_bounds = array<i64: 128, 128>}, {pipeline_mode = #tpu.pipeline_mode<synchronous>, transform_indices = @transform_37, window_bounds = array<i64: 128, 128>}, {pipeline_mode = #tpu.pipeline_mode<synchronous>, transform_indices = @transform_38, window_bounds = array<i64: 1, 128>}, {pipeline_mode = #tpu.pipeline_mode<synchronous>, transform_indices = @transform_39, window_bounds = array<i64: 1, 128>}, {pipeline_mode = #tpu.pipeline_mode<synchronous>, transform_indices = @transform_40, window_bounds = array<i64: 2, 8>}, {pipeline_mode = #tpu.pipeline_mode<synchronous>, transform_indices = @transform_41, window_bounds = array<i64: 128, 32>}, {pipeline_mode = #tpu.pipeline_mode<synchronous>, transform_indices = @transform_42, window_bounds = array<i64: 32, 10>}, {pipeline_mode = #tpu.pipeline_mode<synchronous>, transform_indices = @transform_43, window_bounds = array<i64: 1, 10>}, {pipeline_mode = #tpu.pipeline_mode<synchronous>, transform_indices = @transform_44, window_bounds = array<i64: 2, 32>}, {pipeline_mode = #tpu.pipeline_mode<synchronous>, transform_indices = @transform_45, window_bounds = array<i64: 2, 10>}, {pipeline_mode = #tpu.pipeline_mode<synchronous>, transform_indices = @transform_46, window_bounds = array<i64: 16, 128>}, {pipeline_mode = #tpu.pipeline_mode<synchronous>, transform_indices = @transform_47, window_bounds = array<i64: 8, 128>}]} {
    %c0 = arith.constant 0 : index
    %c0_0 = arith.constant 0 : index
    %0 = vector.load %arg1[%c0, %c0_0] : memref<32x48xf32, #tpu.memory_space<vmem>>, vector<32x48xf32>
    %1 = arith.truncf %0 : vector<32x48xf32> to vector<32x48xbf16>
    %c0_1 = arith.constant 0 : index
    %c0_2 = arith.constant 0 : index
    %2 = vector.load %arg2[%c0_1, %c0_2] : memref<48x384xbf16, #tpu.memory_space<vmem>>, vector<48x384xbf16>
    %cst = arith.constant dense<0.000000e+00> : vector<32x384xf32>
    %3 = tpu.matmul %1, %2, %cst {dimension_numbers = #tpu.dot_dimension_numbers<[1], [0], [0], [1], [0, 0, 1, 1], [], []>} : vector<32x48xbf16>, vector<48x384xbf16>, vector<32x384xf32> -> vector<32x384xf32>
    %c0_3 = arith.constant 0 : index
    %c0_4 = arith.constant 0 : index
    %4 = vector.load %arg3[%c0_3, %c0_4] : memref<1x128xf32, #tpu.memory_space<vmem>>, vector<1x128xf32>
    %5 = vector.extract_strided_slice %3 {offsets = [0, 0], sizes = [32, 128], strides = [1, 1]} : vector<32x384xf32> to vector<32x128xf32>
    %6 = vector.extract_strided_slice %3 {offsets = [0, 128], sizes = [32, 128], strides = [1, 1]} : vector<32x384xf32> to vector<32x128xf32>
    %7 = vector.extract_strided_slice %3 {offsets = [0, 256], sizes = [32, 128], strides = [1, 1]} : vector<32x384xf32> to vector<32x128xf32>
    %8 = tpu.iota {dimensions = array<i32: 0>} : vector<32x1xi32>
    %c16_i32 = arith.constant 16 : i32
    %c0_i32 = arith.constant 0 : i32
    %9 = arith.cmpi eq, %c16_i32, %c0_i32 : i32
    %c1_i32 = arith.constant 1 : i32
    %10 = arith.select %9, %c1_i32, %c16_i32 : i32
    %11 = vector.broadcast %10 : i32 to vector<32x1xi32>
    %12 = arith.remsi %8, %11 : vector<32x1xi32>
    %c0_i32_5 = arith.constant 0 : i32
    %13 = vector.broadcast %c0_i32_5 : i32 to vector<32x1xi32>
    %14 = arith.cmpi ne, %12, %13 : vector<32x1xi32>
    %c0_i32_6 = arith.constant 0 : i32
    %15 = vector.broadcast %c0_i32_6 : i32 to vector<32x1xi32>
    %16 = arith.cmpi slt, %12, %15 : vector<32x1xi32>
    %c0_i32_7 = arith.constant 0 : i32
    %17 = arith.cmpi slt, %10, %c0_i32_7 : i32
    %18 = vector.broadcast %17 : i1 to vector<32x1xi1>
    %19 = vector.broadcast %18 : vector<32x1xi1> to vector<32x1xi1>
    %20 = arith.xori %16, %19 : vector<32x1xi1>
    %21 = arith.andi %20, %14 : vector<32x1xi1>
    %22 = vector.broadcast %10 : i32 to vector<32x1xi32>
    %23 = arith.addi %12, %22 : vector<32x1xi32>
    %24 = arith.select %21, %23, %12 : vector<32x1xi1>, vector<32x1xi32>
    %c0_i32_8 = arith.constant 0 : i32
    %25 = vector.broadcast %c0_i32_8 : i32 to vector<32x1xi32>
    %26 = arith.cmpi ne, %24, %25 : vector<32x1xi32>
    %cst_9 = arith.constant 1.000000e+00 : f32
    %cst_10 = arith.constant 0.000000e+00 : f32
    %27 = vector.broadcast %cst_9 : f32 to vector<32x1xf32>
    %28 = vector.broadcast %cst_10 : f32 to vector<32x1xf32>
    %29 = arith.select %26, %27, %28 : vector<32x1xi1>, vector<32x1xf32>
    %c15_i32 = arith.constant 15 : i32
    %30 = vector.broadcast %c15_i32 : i32 to vector<32x1xi32>
    %31 = arith.cmpi ne, %24, %30 : vector<32x1xi32>
    %cst_11 = arith.constant 1.000000e+00 : f32
    %cst_12 = arith.constant 0.000000e+00 : f32
    %32 = vector.broadcast %cst_11 : f32 to vector<32x1xf32>
    %33 = vector.broadcast %cst_12 : f32 to vector<32x1xf32>
    %34 = arith.select %31, %32, %33 : vector<32x1xi1>, vector<32x1xf32>
    %c1_i32_13 = arith.constant 1 : i32
    %35 = tpu.dynamic_rotate %5 by %c1_i32_13 dim 0 : vector<32x128xf32>, i32 -> vector<32x128xf32>
    %36 = vector.broadcast %29 : vector<32x1xf32> to vector<32x128xf32>
    %37 = arith.mulf %36, %35 : vector<32x128xf32>
    %38 = arith.addf %6, %37 : vector<32x128xf32>
    %c31_i32 = arith.constant 31 : i32
    %39 = tpu.dynamic_rotate %7 by %c31_i32 dim 0 : vector<32x128xf32>, i32 -> vector<32x128xf32>
    %40 = vector.broadcast %34 : vector<32x1xf32> to vector<32x128xf32>
    %41 = arith.mulf %40, %39 : vector<32x128xf32>
    %42 = arith.addf %38, %41 : vector<32x128xf32>
    %43 = vector.broadcast %4 : vector<1x128xf32> to vector<32x128xf32>
    %44 = arith.addf %42, %43 : vector<32x128xf32>
    %cst_14 = arith.constant 0.000000e+00 : f32
    %45 = vector.broadcast %cst_14 : f32 to vector<32x128xf32>
    %46 = arith.maximumf %44, %45 : vector<32x128xf32>
    %47 = arith.truncf %46 : vector<32x128xf32> to vector<32x128xbf16>
    %c0_15 = arith.constant 0 : index
    %c0_16 = arith.constant 0 : index
    %48 = vector.load %arg8[%c0_15, %c0_16] : memref<128x768xbf16, #tpu.memory_space<vmem>>, vector<128x768xbf16>
    %cst_17 = arith.constant dense<0.000000e+00> : vector<32x768xf32>
    %49 = tpu.matmul %47, %48, %cst_17 {dimension_numbers = #tpu.dot_dimension_numbers<[1], [0], [0], [1], [0, 0, 1, 1], [], []>} : vector<32x128xbf16>, vector<128x768xbf16>, vector<32x768xf32> -> vector<32x768xf32>
    %c0_18 = arith.constant 0 : index
    %c0_19 = arith.constant 0 : index
    %50 = vector.load %arg4[%c0_18, %c0_19] : memref<1x128xf32, #tpu.memory_space<vmem>>, vector<1x128xf32>
    %51 = vector.extract_strided_slice %49 {offsets = [0, 0], sizes = [32, 128], strides = [1, 1]} : vector<32x768xf32> to vector<32x128xf32>
    %52 = vector.extract_strided_slice %49 {offsets = [0, 128], sizes = [32, 128], strides = [1, 1]} : vector<32x768xf32> to vector<32x128xf32>
    %53 = vector.extract_strided_slice %49 {offsets = [0, 256], sizes = [32, 128], strides = [1, 1]} : vector<32x768xf32> to vector<32x128xf32>
    %c1_i32_20 = arith.constant 1 : i32
    %54 = tpu.dynamic_rotate %51 by %c1_i32_20 dim 0 : vector<32x128xf32>, i32 -> vector<32x128xf32>
    %55 = vector.broadcast %29 : vector<32x1xf32> to vector<32x128xf32>
    %56 = arith.mulf %55, %54 : vector<32x128xf32>
    %57 = arith.addf %52, %56 : vector<32x128xf32>
    %c31_i32_21 = arith.constant 31 : i32
    %58 = tpu.dynamic_rotate %53 by %c31_i32_21 dim 0 : vector<32x128xf32>, i32 -> vector<32x128xf32>
    %59 = vector.broadcast %34 : vector<32x1xf32> to vector<32x128xf32>
    %60 = arith.mulf %59, %58 : vector<32x128xf32>
    %61 = arith.addf %57, %60 : vector<32x128xf32>
    %62 = vector.broadcast %50 : vector<1x128xf32> to vector<32x128xf32>
    %63 = arith.addf %61, %62 : vector<32x128xf32>
    %cst_22 = arith.constant 0.000000e+00 : f32
    %64 = vector.broadcast %cst_22 : f32 to vector<32x128xf32>
    %65 = arith.maximumf %63, %64 : vector<32x128xf32>
    %66 = arith.truncf %65 : vector<32x128xf32> to vector<32x128xbf16>
    %c0_23 = arith.constant 0 : index
    %c0_24 = arith.constant 0 : index
    %67 = vector.load %arg9[%c0_23, %c0_24] : memref<128x128xbf16, #tpu.memory_space<vmem>>, vector<128x128xbf16>
    %cst_25 = arith.constant dense<0.000000e+00> : vector<32x128xf32>
    %68 = tpu.matmul %66, %67, %cst_25 {dimension_numbers = #tpu.dot_dimension_numbers<[1], [0], [0], [1], [0, 0, 1, 1], [], []>} : vector<32x128xbf16>, vector<128x128xbf16>, vector<32x128xf32> -> vector<32x128xf32>
    %c0_26 = arith.constant 0 : index
    %c0_27 = arith.constant 0 : index
    %69 = vector.load %arg5[%c0_26, %c0_27] : memref<1x128xf32, #tpu.memory_space<vmem>>, vector<1x128xf32>
    %70 = vector.broadcast %69 : vector<1x128xf32> to vector<32x128xf32>
    %71 = arith.addf %68, %70 : vector<32x128xf32>
    %72 = arith.addf %44, %71 : vector<32x128xf32>
    %c0_28 = arith.constant 0 : index
    %c0_29 = arith.constant 0 : index
    %73 = vector.load %arg6[%c0_28, %c0_29] : memref<1x128xf32, #tpu.memory_space<vmem>>, vector<1x128xf32>
    %74 = vector.extract_strided_slice %49 {offsets = [0, 384], sizes = [32, 128], strides = [1, 1]} : vector<32x768xf32> to vector<32x128xf32>
    %75 = vector.extract_strided_slice %49 {offsets = [0, 512], sizes = [32, 128], strides = [1, 1]} : vector<32x768xf32> to vector<32x128xf32>
    %76 = vector.extract_strided_slice %49 {offsets = [0, 640], sizes = [32, 128], strides = [1, 1]} : vector<32x768xf32> to vector<32x128xf32>
    %c1_i32_30 = arith.constant 1 : i32
    %77 = tpu.dynamic_rotate %74 by %c1_i32_30 dim 0 : vector<32x128xf32>, i32 -> vector<32x128xf32>
    %78 = vector.broadcast %29 : vector<32x1xf32> to vector<32x128xf32>
    %79 = arith.mulf %78, %77 : vector<32x128xf32>
    %80 = arith.addf %75, %79 : vector<32x128xf32>
    %c31_i32_31 = arith.constant 31 : i32
    %81 = tpu.dynamic_rotate %76 by %c31_i32_31 dim 0 : vector<32x128xf32>, i32 -> vector<32x128xf32>
    %82 = vector.broadcast %34 : vector<32x1xf32> to vector<32x128xf32>
    %83 = arith.mulf %82, %81 : vector<32x128xf32>
    %84 = arith.addf %80, %83 : vector<32x128xf32>
    %85 = vector.broadcast %73 : vector<1x128xf32> to vector<32x128xf32>
    %86 = arith.addf %84, %85 : vector<32x128xf32>
    %87 = arith.addf %86, %63 : vector<32x128xf32>
    %cst_32 = arith.constant 0.000000e+00 : f32
    %88 = vector.broadcast %cst_32 : f32 to vector<32x128xf32>
    %89 = arith.maximumf %72, %88 : vector<32x128xf32>
    %90 = arith.truncf %89 : vector<32x128xf32> to vector<32x128xbf16>
    %c0_33 = arith.constant 0 : index
    %c0_34 = arith.constant 0 : index
    %91 = vector.load %arg10[%c0_33, %c0_34] : memref<128x128xbf16, #tpu.memory_space<vmem>>, vector<128x128xbf16>
    %cst_35 = arith.constant dense<0.000000e+00> : vector<32x128xf32>
    %92 = tpu.matmul %90, %91, %cst_35 {dimension_numbers = #tpu.dot_dimension_numbers<[1], [0], [0], [1], [0, 0, 1, 1], [], []>} : vector<32x128xbf16>, vector<128x128xbf16>, vector<32x128xf32> -> vector<32x128xf32>
    %c0_36 = arith.constant 0 : index
    %c0_37 = arith.constant 0 : index
    %93 = vector.load %arg7[%c0_36, %c0_37] : memref<1x128xf32, #tpu.memory_space<vmem>>, vector<1x128xf32>
    %94 = vector.broadcast %93 : vector<1x128xf32> to vector<32x128xf32>
    %95 = arith.addf %92, %94 : vector<32x128xf32>
    %96 = arith.addf %87, %95 : vector<32x128xf32>
    %cst_38 = arith.constant 0.000000e+00 : f32
    %97 = vector.broadcast %cst_38 : f32 to vector<32x128xf32>
    %98 = arith.maximumf %96, %97 : vector<32x128xf32>
    %99 = arith.truncf %98 : vector<32x128xf32> to vector<32x128xbf16>
    %c0_39 = arith.constant 0 : index
    %c0_40 = arith.constant 0 : index
    %100 = vector.load %arg11[%c0_39, %c0_40] : memref<128x384xbf16, #tpu.memory_space<vmem>>, vector<128x384xbf16>
    %cst_41 = arith.constant dense<0.000000e+00> : vector<32x384xf32>
    %101 = tpu.matmul %99, %100, %cst_41 {dimension_numbers = #tpu.dot_dimension_numbers<[1], [0], [0], [1], [0, 0, 1, 1], [], []>} : vector<32x128xbf16>, vector<128x384xbf16>, vector<32x384xf32> -> vector<32x384xf32>
    %c0_42 = arith.constant 0 : index
    %c0_43 = arith.constant 0 : index
    %102 = vector.load %arg13[%c0_42, %c0_43] : memref<16x32xbf16, #tpu.memory_space<vmem>>, vector<16x32xbf16>
    %c0_44 = arith.constant 0 : index
    %c0_45 = arith.constant 0 : index
    %103 = vector.load %arg12[%c0_44, %c0_45] : memref<1x128xf32, #tpu.memory_space<vmem>>, vector<1x128xf32>
    %104 = vector.extract_strided_slice %101 {offsets = [0, 0], sizes = [32, 128], strides = [1, 1]} : vector<32x384xf32> to vector<32x128xf32>
    %105 = vector.extract_strided_slice %101 {offsets = [0, 128], sizes = [32, 128], strides = [1, 1]} : vector<32x384xf32> to vector<32x128xf32>
    %106 = vector.extract_strided_slice %101 {offsets = [0, 256], sizes = [32, 128], strides = [1, 1]} : vector<32x384xf32> to vector<32x128xf32>
    %c1_i32_46 = arith.constant 1 : i32
    %107 = tpu.dynamic_rotate %104 by %c1_i32_46 dim 0 : vector<32x128xf32>, i32 -> vector<32x128xf32>
    %108 = vector.broadcast %29 : vector<32x1xf32> to vector<32x128xf32>
    %109 = arith.mulf %108, %107 : vector<32x128xf32>
    %110 = arith.addf %105, %109 : vector<32x128xf32>
    %c31_i32_47 = arith.constant 31 : i32
    %111 = tpu.dynamic_rotate %106 by %c31_i32_47 dim 0 : vector<32x128xf32>, i32 -> vector<32x128xf32>
    %112 = vector.broadcast %34 : vector<32x1xf32> to vector<32x128xf32>
    %113 = arith.mulf %112, %111 : vector<32x128xf32>
    %114 = arith.addf %110, %113 : vector<32x128xf32>
    %115 = arith.truncf %114 : vector<32x128xf32> to vector<32x128xbf16>
    %cst_48 = arith.constant dense<0.000000e+00> : vector<16x128xf32>
    %116 = tpu.matmul %102, %115, %cst_48 {dimension_numbers = #tpu.dot_dimension_numbers<[1], [0], [0], [1], [0, 0, 1, 1], [], []>} : vector<16x32xbf16>, vector<32x128xbf16>, vector<16x128xf32> -> vector<16x128xf32>
    %117 = vector.broadcast %103 : vector<1x128xf32> to vector<16x128xf32>
    %118 = arith.addf %116, %117 : vector<16x128xf32>
    %cst_49 = arith.constant 0.000000e+00 : f32
    %119 = vector.broadcast %cst_49 : f32 to vector<16x128xf32>
    %120 = arith.maximumf %118, %119 : vector<16x128xf32>
    %121 = arith.truncf %120 : vector<16x128xf32> to vector<16x128xbf16>
    %c0_50 = arith.constant 0 : index
    %c0_51 = arith.constant 0 : index
    %122 = vector.load %arg14[%c0_50, %c0_51] : memref<128x384xbf16, #tpu.memory_space<vmem>>, vector<128x384xbf16>
    %cst_52 = arith.constant dense<0.000000e+00> : vector<16x384xf32>
    %123 = tpu.matmul %121, %122, %cst_52 {dimension_numbers = #tpu.dot_dimension_numbers<[1], [0], [0], [1], [0, 0, 1, 1], [], []>} : vector<16x128xbf16>, vector<128x384xbf16>, vector<16x384xf32> -> vector<16x384xf32>
    %c0_53 = arith.constant 0 : index
    %c0_54 = arith.constant 0 : index
    %124 = vector.load %arg15[%c0_53, %c0_54] : memref<1x128xf32, #tpu.memory_space<vmem>>, vector<1x128xf32>
    %125 = vector.extract_strided_slice %123 {offsets = [0, 0], sizes = [16, 128], strides = [1, 1]} : vector<16x384xf32> to vector<16x128xf32>
    %126 = vector.extract_strided_slice %123 {offsets = [0, 128], sizes = [16, 128], strides = [1, 1]} : vector<16x384xf32> to vector<16x128xf32>
    %127 = vector.extract_strided_slice %123 {offsets = [0, 256], sizes = [16, 128], strides = [1, 1]} : vector<16x384xf32> to vector<16x128xf32>
    %128 = tpu.iota {dimensions = array<i32: 0>} : vector<16x1xi32>
    %c8_i32 = arith.constant 8 : i32
    %c0_i32_55 = arith.constant 0 : i32
    %129 = arith.cmpi eq, %c8_i32, %c0_i32_55 : i32
    %c1_i32_56 = arith.constant 1 : i32
    %130 = arith.select %129, %c1_i32_56, %c8_i32 : i32
    %131 = vector.broadcast %130 : i32 to vector<16x1xi32>
    %132 = arith.remsi %128, %131 : vector<16x1xi32>
    %c0_i32_57 = arith.constant 0 : i32
    %133 = vector.broadcast %c0_i32_57 : i32 to vector<16x1xi32>
    %134 = arith.cmpi ne, %132, %133 : vector<16x1xi32>
    %c0_i32_58 = arith.constant 0 : i32
    %135 = vector.broadcast %c0_i32_58 : i32 to vector<16x1xi32>
    %136 = arith.cmpi slt, %132, %135 : vector<16x1xi32>
    %c0_i32_59 = arith.constant 0 : i32
    %137 = arith.cmpi slt, %130, %c0_i32_59 : i32
    %138 = vector.broadcast %137 : i1 to vector<16x1xi1>
    %139 = vector.broadcast %138 : vector<16x1xi1> to vector<16x1xi1>
    %140 = arith.xori %136, %139 : vector<16x1xi1>
    %141 = arith.andi %140, %134 : vector<16x1xi1>
    %142 = vector.broadcast %130 : i32 to vector<16x1xi32>
    %143 = arith.addi %132, %142 : vector<16x1xi32>
    %144 = arith.select %141, %143, %132 : vector<16x1xi1>, vector<16x1xi32>
    %c0_i32_60 = arith.constant 0 : i32
    %145 = vector.broadcast %c0_i32_60 : i32 to vector<16x1xi32>
    %146 = arith.cmpi ne, %144, %145 : vector<16x1xi32>
    %cst_61 = arith.constant 1.000000e+00 : f32
    %cst_62 = arith.constant 0.000000e+00 : f32
    %147 = vector.broadcast %cst_61 : f32 to vector<16x1xf32>
    %148 = vector.broadcast %cst_62 : f32 to vector<16x1xf32>
    %149 = arith.select %146, %147, %148 : vector<16x1xi1>, vector<16x1xf32>
    %c7_i32 = arith.constant 7 : i32
    %150 = vector.broadcast %c7_i32 : i32 to vector<16x1xi32>
    %151 = arith.cmpi ne, %144, %150 : vector<16x1xi32>
    %cst_63 = arith.constant 1.000000e+00 : f32
    %cst_64 = arith.constant 0.000000e+00 : f32
    %152 = vector.broadcast %cst_63 : f32 to vector<16x1xf32>
    %153 = vector.broadcast %cst_64 : f32 to vector<16x1xf32>
    %154 = arith.select %151, %152, %153 : vector<16x1xi1>, vector<16x1xf32>
    %c1_i32_65 = arith.constant 1 : i32
    %155 = tpu.dynamic_rotate %125 by %c1_i32_65 dim 0 : vector<16x128xf32>, i32 -> vector<16x128xf32>
    %156 = vector.broadcast %149 : vector<16x1xf32> to vector<16x128xf32>
    %157 = arith.mulf %156, %155 : vector<16x128xf32>
    %158 = arith.addf %126, %157 : vector<16x128xf32>
    %c15_i32_66 = arith.constant 15 : i32
    %159 = tpu.dynamic_rotate %127 by %c15_i32_66 dim 0 : vector<16x128xf32>, i32 -> vector<16x128xf32>
    %160 = vector.broadcast %154 : vector<16x1xf32> to vector<16x128xf32>
    %161 = arith.mulf %160, %159 : vector<16x128xf32>
    %162 = arith.addf %158, %161 : vector<16x128xf32>
    %163 = vector.broadcast %124 : vector<1x128xf32> to vector<16x128xf32>
    %164 = arith.addf %162, %163 : vector<16x128xf32>
    %165 = arith.truncf %96 : vector<32x128xf32> to vector<32x128xbf16>
    %c0_67 = arith.constant 0 : index
    %c0_68 = arith.constant 0 : index
    %166 = vector.load %arg16[%c0_67, %c0_68] : memref<128x128xbf16, #tpu.memory_space<vmem>>, vector<128x128xbf16>
    %cst_69 = arith.constant dense<0.000000e+00> : vector<32x128xf32>
    %167 = tpu.matmul %165, %166, %cst_69 {dimension_numbers = #tpu.dot_dimension_numbers<[1], [0], [0], [1], [0, 0, 1, 1], [], []>} : vector<32x128xbf16>, vector<128x128xbf16>, vector<32x128xf32> -> vector<32x128xf32>
    %c0_70 = arith.constant 0 : index
    %c0_71 = arith.constant 0 : index
    %168 = vector.load %arg17[%c0_70, %c0_71] : memref<16x32xbf16, #tpu.memory_space<vmem>>, vector<16x32xbf16>
    %169 = arith.truncf %167 : vector<32x128xf32> to vector<32x128xbf16>
    %cst_72 = arith.constant dense<0.000000e+00> : vector<16x128xf32>
    %170 = tpu.matmul %168, %169, %cst_72 {dimension_numbers = #tpu.dot_dimension_numbers<[1], [0], [0], [1], [0, 0, 1, 1], [], []>} : vector<16x32xbf16>, vector<32x128xbf16>, vector<16x128xf32> -> vector<16x128xf32>
    %171 = arith.addf %170, %164 : vector<16x128xf32>
    %c0_73 = arith.constant 0 : index
    %c0_74 = arith.constant 0 : index
    %172 = vector.load %arg47[%c0_73, %c0_74] : memref<16x128xf32, #tpu.memory_space<vmem>>, vector<16x128xf32>
    tpu.vector_store %arg47[%c0_73, %c0_74], %171 {strides = array<i32>} : memref<16x128xf32, #tpu.memory_space<vmem>>, vector<16x128xf32>,
    %cst_75 = arith.constant 0.000000e+00 : f32
    %173 = vector.broadcast %cst_75 : f32 to vector<16x128xf32>
    %174 = arith.maximumf %171, %173 : vector<16x128xf32>
    %175 = arith.truncf %174 : vector<16x128xf32> to vector<16x128xbf16>
    %c0_76 = arith.constant 0 : index
    %c0_77 = arith.constant 0 : index
    %176 = vector.load %arg22[%c0_76, %c0_77] : memref<128x768xbf16, #tpu.memory_space<vmem>>, vector<128x768xbf16>
    %cst_78 = arith.constant dense<0.000000e+00> : vector<16x768xf32>
    %177 = tpu.matmul %175, %176, %cst_78 {dimension_numbers = #tpu.dot_dimension_numbers<[1], [0], [0], [1], [0, 0, 1, 1], [], []>} : vector<16x128xbf16>, vector<128x768xbf16>, vector<16x768xf32> -> vector<16x768xf32>
    %c0_79 = arith.constant 0 : index
    %c0_80 = arith.constant 0 : index
    %178 = vector.load %arg18[%c0_79, %c0_80] : memref<1x128xf32, #tpu.memory_space<vmem>>, vector<1x128xf32>
    %179 = vector.extract_strided_slice %177 {offsets = [0, 0], sizes = [16, 128], strides = [1, 1]} : vector<16x768xf32> to vector<16x128xf32>
    %180 = vector.extract_strided_slice %177 {offsets = [0, 128], sizes = [16, 128], strides = [1, 1]} : vector<16x768xf32> to vector<16x128xf32>
    %181 = vector.extract_strided_slice %177 {offsets = [0, 256], sizes = [16, 128], strides = [1, 1]} : vector<16x768xf32> to vector<16x128xf32>
    %c1_i32_81 = arith.constant 1 : i32
    %182 = tpu.dynamic_rotate %179 by %c1_i32_81 dim 0 : vector<16x128xf32>, i32 -> vector<16x128xf32>
    %183 = vector.broadcast %149 : vector<16x1xf32> to vector<16x128xf32>
    %184 = arith.mulf %183, %182 : vector<16x128xf32>
    %185 = arith.addf %180, %184 : vector<16x128xf32>
    %c15_i32_82 = arith.constant 15 : i32
    %186 = tpu.dynamic_rotate %181 by %c15_i32_82 dim 0 : vector<16x128xf32>, i32 -> vector<16x128xf32>
    %187 = vector.broadcast %154 : vector<16x1xf32> to vector<16x128xf32>
    %188 = arith.mulf %187, %186 : vector<16x128xf32>
    %189 = arith.addf %185, %188 : vector<16x128xf32>
    %190 = vector.broadcast %178 : vector<1x128xf32> to vector<16x128xf32>
    %191 = arith.addf %189, %190 : vector<16x128xf32>
    %cst_83 = arith.constant 0.000000e+00 : f32
    %192 = vector.broadcast %cst_83 : f32 to vector<16x128xf32>
    %193 = arith.maximumf %191, %192 : vector<16x128xf32>
    %194 = arith.truncf %193 : vector<16x128xf32> to vector<16x128xbf16>
    %c0_84 = arith.constant 0 : index
    %c0_85 = arith.constant 0 : index
    %195 = vector.load %arg23[%c0_84, %c0_85] : memref<128x128xbf16, #tpu.memory_space<vmem>>, vector<128x128xbf16>
    %cst_86 = arith.constant dense<0.000000e+00> : vector<16x128xf32>
    %196 = tpu.matmul %194, %195, %cst_86 {dimension_numbers = #tpu.dot_dimension_numbers<[1], [0], [0], [1], [0, 0, 1, 1], [], []>} : vector<16x128xbf16>, vector<128x128xbf16>, vector<16x128xf32> -> vector<16x128xf32>
    %c0_87 = arith.constant 0 : index
    %c0_88 = arith.constant 0 : index
    %197 = vector.load %arg19[%c0_87, %c0_88] : memref<1x128xf32, #tpu.memory_space<vmem>>, vector<1x128xf32>
    %198 = vector.broadcast %197 : vector<1x128xf32> to vector<16x128xf32>
    %199 = arith.addf %196, %198 : vector<16x128xf32>
    %200 = arith.addf %171, %199 : vector<16x128xf32>
    %c0_89 = arith.constant 0 : index
    %c0_90 = arith.constant 0 : index
    %201 = vector.load %arg20[%c0_89, %c0_90] : memref<1x128xf32, #tpu.memory_space<vmem>>, vector<1x128xf32>
    %202 = vector.extract_strided_slice %177 {offsets = [0, 384], sizes = [16, 128], strides = [1, 1]} : vector<16x768xf32> to vector<16x128xf32>
    %203 = vector.extract_strided_slice %177 {offsets = [0, 512], sizes = [16, 128], strides = [1, 1]} : vector<16x768xf32> to vector<16x128xf32>
    %204 = vector.extract_strided_slice %177 {offsets = [0, 640], sizes = [16, 128], strides = [1, 1]} : vector<16x768xf32> to vector<16x128xf32>
    %c1_i32_91 = arith.constant 1 : i32
    %205 = tpu.dynamic_rotate %202 by %c1_i32_91 dim 0 : vector<16x128xf32>, i32 -> vector<16x128xf32>
    %206 = vector.broadcast %149 : vector<16x1xf32> to vector<16x128xf32>
    %207 = arith.mulf %206, %205 : vector<16x128xf32>
    %208 = arith.addf %203, %207 : vector<16x128xf32>
    %c15_i32_92 = arith.constant 15 : i32
    %209 = tpu.dynamic_rotate %204 by %c15_i32_92 dim 0 : vector<16x128xf32>, i32 -> vector<16x128xf32>
    %210 = vector.broadcast %154 : vector<16x1xf32> to vector<16x128xf32>
    %211 = arith.mulf %210, %209 : vector<16x128xf32>
    %212 = arith.addf %208, %211 : vector<16x128xf32>
    %213 = vector.broadcast %201 : vector<1x128xf32> to vector<16x128xf32>
    %214 = arith.addf %212, %213 : vector<16x128xf32>
    %215 = arith.addf %214, %191 : vector<16x128xf32>
    %cst_93 = arith.constant 0.000000e+00 : f32
    %216 = vector.broadcast %cst_93 : f32 to vector<16x128xf32>
    %217 = arith.maximumf %200, %216 : vector<16x128xf32>
    %218 = arith.truncf %217 : vector<16x128xf32> to vector<16x128xbf16>
    %c0_94 = arith.constant 0 : index
    %c0_95 = arith.constant 0 : index
    %219 = vector.load %arg24[%c0_94, %c0_95] : memref<128x128xbf16, #tpu.memory_space<vmem>>, vector<128x128xbf16>
    %cst_96 = arith.constant dense<0.000000e+00> : vector<16x128xf32>
    %220 = tpu.matmul %218, %219, %cst_96 {dimension_numbers = #tpu.dot_dimension_numbers<[1], [0], [0], [1], [0, 0, 1, 1], [], []>} : vector<16x128xbf16>, vector<128x128xbf16>, vector<16x128xf32> -> vector<16x128xf32>
    %c0_97 = arith.constant 0 : index
    %c0_98 = arith.constant 0 : index
    %221 = vector.load %arg21[%c0_97, %c0_98] : memref<1x128xf32, #tpu.memory_space<vmem>>, vector<1x128xf32>
    %222 = vector.broadcast %221 : vector<1x128xf32> to vector<16x128xf32>
    %223 = arith.addf %220, %222 : vector<16x128xf32>
    %224 = arith.addf %215, %223 : vector<16x128xf32>
    %cst_99 = arith.constant 0.000000e+00 : f32
    %225 = vector.broadcast %cst_99 : f32 to vector<16x128xf32>
    %226 = arith.maximumf %224, %225 : vector<16x128xf32>
    %227 = arith.truncf %226 : vector<16x128xf32> to vector<16x128xbf16>
    %c0_100 = arith.constant 0 : index
    %c0_101 = arith.constant 0 : index
    %228 = vector.load %arg25[%c0_100, %c0_101] : memref<128x384xbf16, #tpu.memory_space<vmem>>, vector<128x384xbf16>
    %cst_102 = arith.constant dense<0.000000e+00> : vector<16x384xf32>
    %229 = tpu.matmul %227, %228, %cst_102 {dimension_numbers = #tpu.dot_dimension_numbers<[1], [0], [0], [1], [0, 0, 1, 1], [], []>} : vector<16x128xbf16>, vector<128x384xbf16>, vector<16x384xf32> -> vector<16x384xf32>
    %c0_103 = arith.constant 0 : index
    %c0_104 = arith.constant 0 : index
    %230 = vector.load %arg27[%c0_103, %c0_104] : memref<8x16xbf16, #tpu.memory_space<vmem>>, vector<8x16xbf16>
    %c0_105 = arith.constant 0 : index
    %c0_106 = arith.constant 0 : index
    %231 = vector.load %arg26[%c0_105, %c0_106] : memref<1x128xf32, #tpu.memory_space<vmem>>, vector<1x128xf32>
    %232 = vector.extract_strided_slice %229 {offsets = [0, 0], sizes = [16, 128], strides = [1, 1]} : vector<16x384xf32> to vector<16x128xf32>
    %233 = vector.extract_strided_slice %229 {offsets = [0, 128], sizes = [16, 128], strides = [1, 1]} : vector<16x384xf32> to vector<16x128xf32>
    %234 = vector.extract_strided_slice %229 {offsets = [0, 256], sizes = [16, 128], strides = [1, 1]} : vector<16x384xf32> to vector<16x128xf32>
    %c1_i32_107 = arith.constant 1 : i32
    %235 = tpu.dynamic_rotate %232 by %c1_i32_107 dim 0 : vector<16x128xf32>, i32 -> vector<16x128xf32>
    %236 = vector.broadcast %149 : vector<16x1xf32> to vector<16x128xf32>
    %237 = arith.mulf %236, %235 : vector<16x128xf32>
    %238 = arith.addf %233, %237 : vector<16x128xf32>
    %c15_i32_108 = arith.constant 15 : i32
    %239 = tpu.dynamic_rotate %234 by %c15_i32_108 dim 0 : vector<16x128xf32>, i32 -> vector<16x128xf32>
    %240 = vector.broadcast %154 : vector<16x1xf32> to vector<16x128xf32>
    %241 = arith.mulf %240, %239 : vector<16x128xf32>
    %242 = arith.addf %238, %241 : vector<16x128xf32>
    %243 = arith.truncf %242 : vector<16x128xf32> to vector<16x128xbf16>
    %cst_109 = arith.constant dense<0.000000e+00> : vector<8x128xf32>
    %244 = tpu.matmul %230, %243, %cst_109 {dimension_numbers = #tpu.dot_dimension_numbers<[1], [0], [0], [1], [0, 0, 1, 1], [], []>} : vector<8x16xbf16>, vector<16x128xbf16>, vector<8x128xf32> -> vector<8x128xf32>
    %245 = vector.broadcast %231 : vector<1x128xf32> to vector<8x128xf32>
    %246 = arith.addf %244, %245 : vector<8x128xf32>
    %cst_110 = arith.constant 0.000000e+00 : f32
    %247 = vector.broadcast %cst_110 : f32 to vector<8x128xf32>
    %248 = arith.maximumf %246, %247 : vector<8x128xf32>
    %249 = arith.truncf %248 : vector<8x128xf32> to vector<8x128xbf16>
    %c0_111 = arith.constant 0 : index
    %c0_112 = arith.constant 0 : index
    %250 = vector.load %arg28[%c0_111, %c0_112] : memref<128x384xbf16, #tpu.memory_space<vmem>>, vector<128x384xbf16>
    %cst_113 = arith.constant dense<0.000000e+00> : vector<8x384xf32>
    %251 = tpu.matmul %249, %250, %cst_113 {dimension_numbers = #tpu.dot_dimension_numbers<[1], [0], [0], [1], [0, 0, 1, 1], [], []>} : vector<8x128xbf16>, vector<128x384xbf16>, vector<8x384xf32> -> vector<8x384xf32>
    %c0_114 = arith.constant 0 : index
    %c0_115 = arith.constant 0 : index
    %252 = vector.load %arg29[%c0_114, %c0_115] : memref<1x128xf32, #tpu.memory_space<vmem>>, vector<1x128xf32>
    %253 = vector.extract_strided_slice %251 {offsets = [0, 0], sizes = [8, 128], strides = [1, 1]} : vector<8x384xf32> to vector<8x128xf32>
    %254 = vector.extract_strided_slice %251 {offsets = [0, 128], sizes = [8, 128], strides = [1, 1]} : vector<8x384xf32> to vector<8x128xf32>
    %255 = vector.extract_strided_slice %251 {offsets = [0, 256], sizes = [8, 128], strides = [1, 1]} : vector<8x384xf32> to vector<8x128xf32>
    %256 = tpu.iota {dimensions = array<i32: 0>} : vector<8x1xi32>
    %c4_i32 = arith.constant 4 : i32
    %c0_i32_116 = arith.constant 0 : i32
    %257 = arith.cmpi eq, %c4_i32, %c0_i32_116 : i32
    %c1_i32_117 = arith.constant 1 : i32
    %258 = arith.select %257, %c1_i32_117, %c4_i32 : i32
    %259 = vector.broadcast %258 : i32 to vector<8x1xi32>
    %260 = arith.remsi %256, %259 : vector<8x1xi32>
    %c0_i32_118 = arith.constant 0 : i32
    %261 = vector.broadcast %c0_i32_118 : i32 to vector<8x1xi32>
    %262 = arith.cmpi ne, %260, %261 : vector<8x1xi32>
    %c0_i32_119 = arith.constant 0 : i32
    %263 = vector.broadcast %c0_i32_119 : i32 to vector<8x1xi32>
    %264 = arith.cmpi slt, %260, %263 : vector<8x1xi32>
    %c0_i32_120 = arith.constant 0 : i32
    %265 = arith.cmpi slt, %258, %c0_i32_120 : i32
    %266 = vector.broadcast %265 : i1 to vector<8x1xi1>
    %267 = vector.broadcast %266 : vector<8x1xi1> to vector<8x1xi1>
    %268 = arith.xori %264, %267 : vector<8x1xi1>
    %269 = arith.andi %268, %262 : vector<8x1xi1>
    %270 = vector.broadcast %258 : i32 to vector<8x1xi32>
    %271 = arith.addi %260, %270 : vector<8x1xi32>
    %272 = arith.select %269, %271, %260 : vector<8x1xi1>, vector<8x1xi32>
    %c0_i32_121 = arith.constant 0 : i32
    %273 = vector.broadcast %c0_i32_121 : i32 to vector<8x1xi32>
    %274 = arith.cmpi ne, %272, %273 : vector<8x1xi32>
    %cst_122 = arith.constant 1.000000e+00 : f32
    %cst_123 = arith.constant 0.000000e+00 : f32
    %275 = vector.broadcast %cst_122 : f32 to vector<8x1xf32>
    %276 = vector.broadcast %cst_123 : f32 to vector<8x1xf32>
    %277 = arith.select %274, %275, %276 : vector<8x1xi1>, vector<8x1xf32>
    %c3_i32 = arith.constant 3 : i32
    %278 = vector.broadcast %c3_i32 : i32 to vector<8x1xi32>
    %279 = arith.cmpi ne, %272, %278 : vector<8x1xi32>
    %cst_124 = arith.constant 1.000000e+00 : f32
    %cst_125 = arith.constant 0.000000e+00 : f32
    %280 = vector.broadcast %cst_124 : f32 to vector<8x1xf32>
    %281 = vector.broadcast %cst_125 : f32 to vector<8x1xf32>
    %282 = arith.select %279, %280, %281 : vector<8x1xi1>, vector<8x1xf32>
    %c1_i32_126 = arith.constant 1 : i32
    %283 = tpu.dynamic_rotate %253 by %c1_i32_126 dim 0 : vector<8x128xf32>, i32 -> vector<8x128xf32>
    %284 = vector.broadcast %277 : vector<8x1xf32> to vector<8x128xf32>
    %285 = arith.mulf %284, %283 : vector<8x128xf32>
    %286 = arith.addf %254, %285 : vector<8x128xf32>
    %c7_i32_127 = arith.constant 7 : i32
    %287 = tpu.dynamic_rotate %255 by %c7_i32_127 dim 0 : vector<8x128xf32>, i32 -> vector<8x128xf32>
    %288 = vector.broadcast %282 : vector<8x1xf32> to vector<8x128xf32>
    %289 = arith.mulf %288, %287 : vector<8x128xf32>
    %290 = arith.addf %286, %289 : vector<8x128xf32>
    %291 = vector.broadcast %252 : vector<1x128xf32> to vector<8x128xf32>
    %292 = arith.addf %290, %291 : vector<8x128xf32>
    %293 = arith.truncf %224 : vector<16x128xf32> to vector<16x128xbf16>
    %c0_128 = arith.constant 0 : index
    %c0_129 = arith.constant 0 : index
    %294 = vector.load %arg30[%c0_128, %c0_129] : memref<128x128xbf16, #tpu.memory_space<vmem>>, vector<128x128xbf16>
    %cst_130 = arith.constant dense<0.000000e+00> : vector<16x128xf32>
    %295 = tpu.matmul %293, %294, %cst_130 {dimension_numbers = #tpu.dot_dimension_numbers<[1], [0], [0], [1], [0, 0, 1, 1], [], []>} : vector<16x128xbf16>, vector<128x128xbf16>, vector<16x128xf32> -> vector<16x128xf32>
    %c0_131 = arith.constant 0 : index
    %c0_132 = arith.constant 0 : index
    %296 = vector.load %arg31[%c0_131, %c0_132] : memref<8x16xbf16, #tpu.memory_space<vmem>>, vector<8x16xbf16>
    %297 = arith.truncf %295 : vector<16x128xf32> to vector<16x128xbf16>
    %cst_133 = arith.constant dense<0.000000e+00> : vector<8x128xf32>
    %298 = tpu.matmul %296, %297, %cst_133 {dimension_numbers = #tpu.dot_dimension_numbers<[1], [0], [0], [1], [0, 0, 1, 1], [], []>} : vector<8x16xbf16>, vector<16x128xbf16>, vector<8x128xf32> -> vector<8x128xf32>
    %299 = arith.addf %298, %292 : vector<8x128xf32>
    %c0_134 = arith.constant 0 : index
    %c0_135 = arith.constant 0 : index
    %300 = vector.load %arg48[%c0_134, %c0_135] : memref<8x128xf32, #tpu.memory_space<vmem>>, vector<8x128xf32>
    tpu.vector_store %arg48[%c0_134, %c0_135], %299 {strides = array<i32>} : memref<8x128xf32, #tpu.memory_space<vmem>>, vector<8x128xf32>,
    %cst_136 = arith.constant 0.000000e+00 : f32
    %301 = vector.broadcast %cst_136 : f32 to vector<8x128xf32>
    %302 = arith.maximumf %299, %301 : vector<8x128xf32>
    %303 = arith.truncf %302 : vector<8x128xf32> to vector<8x128xbf16>
    %c0_137 = arith.constant 0 : index
    %c0_138 = arith.constant 0 : index
    %304 = vector.load %arg36[%c0_137, %c0_138] : memref<128x768xbf16, #tpu.memory_space<vmem>>, vector<128x768xbf16>
    %cst_139 = arith.constant dense<0.000000e+00> : vector<8x768xf32>
    %305 = tpu.matmul %303, %304, %cst_139 {dimension_numbers = #tpu.dot_dimension_numbers<[1], [0], [0], [1], [0, 0, 1, 1], [], []>} : vector<8x128xbf16>, vector<128x768xbf16>, vector<8x768xf32> -> vector<8x768xf32>
    %c0_140 = arith.constant 0 : index
    %c0_141 = arith.constant 0 : index
    %306 = vector.load %arg32[%c0_140, %c0_141] : memref<1x128xf32, #tpu.memory_space<vmem>>, vector<1x128xf32>
    %307 = vector.extract_strided_slice %305 {offsets = [0, 0], sizes = [8, 128], strides = [1, 1]} : vector<8x768xf32> to vector<8x128xf32>
    %308 = vector.extract_strided_slice %305 {offsets = [0, 128], sizes = [8, 128], strides = [1, 1]} : vector<8x768xf32> to vector<8x128xf32>
    %309 = vector.extract_strided_slice %305 {offsets = [0, 256], sizes = [8, 128], strides = [1, 1]} : vector<8x768xf32> to vector<8x128xf32>
    %c1_i32_142 = arith.constant 1 : i32
    %310 = tpu.dynamic_rotate %307 by %c1_i32_142 dim 0 : vector<8x128xf32>, i32 -> vector<8x128xf32>
    %311 = vector.broadcast %277 : vector<8x1xf32> to vector<8x128xf32>
    %312 = arith.mulf %311, %310 : vector<8x128xf32>
    %313 = arith.addf %308, %312 : vector<8x128xf32>
    %c7_i32_143 = arith.constant 7 : i32
    %314 = tpu.dynamic_rotate %309 by %c7_i32_143 dim 0 : vector<8x128xf32>, i32 -> vector<8x128xf32>
    %315 = vector.broadcast %282 : vector<8x1xf32> to vector<8x128xf32>
    %316 = arith.mulf %315, %314 : vector<8x128xf32>
    %317 = arith.addf %313, %316 : vector<8x128xf32>
    %318 = vector.broadcast %306 : vector<1x128xf32> to vector<8x128xf32>
    %319 = arith.addf %317, %318 : vector<8x128xf32>
    %cst_144 = arith.constant 0.000000e+00 : f32
    %320 = vector.broadcast %cst_144 : f32 to vector<8x128xf32>
    %321 = arith.maximumf %319, %320 : vector<8x128xf32>
    %322 = arith.truncf %321 : vector<8x128xf32> to vector<8x128xbf16>
    %c0_145 = arith.constant 0 : index
    %c0_146 = arith.constant 0 : index
    %323 = vector.load %arg37[%c0_145, %c0_146] : memref<128x128xbf16, #tpu.memory_space<vmem>>, vector<128x128xbf16>
    %cst_147 = arith.constant dense<0.000000e+00> : vector<8x128xf32>
    %324 = tpu.matmul %322, %323, %cst_147 {dimension_numbers = #tpu.dot_dimension_numbers<[1], [0], [0], [1], [0, 0, 1, 1], [], []>} : vector<8x128xbf16>, vector<128x128xbf16>, vector<8x128xf32> -> vector<8x128xf32>
    %c0_148 = arith.constant 0 : index
    %c0_149 = arith.constant 0 : index
    %325 = vector.load %arg33[%c0_148, %c0_149] : memref<1x128xf32, #tpu.memory_space<vmem>>, vector<1x128xf32>
    %326 = vector.broadcast %325 : vector<1x128xf32> to vector<8x128xf32>
    %327 = arith.addf %324, %326 : vector<8x128xf32>
    %328 = arith.addf %299, %327 : vector<8x128xf32>
    %c0_150 = arith.constant 0 : index
    %c0_151 = arith.constant 0 : index
    %329 = vector.load %arg34[%c0_150, %c0_151] : memref<1x128xf32, #tpu.memory_space<vmem>>, vector<1x128xf32>
    %330 = vector.extract_strided_slice %305 {offsets = [0, 384], sizes = [8, 128], strides = [1, 1]} : vector<8x768xf32> to vector<8x128xf32>
    %331 = vector.extract_strided_slice %305 {offsets = [0, 512], sizes = [8, 128], strides = [1, 1]} : vector<8x768xf32> to vector<8x128xf32>
    %332 = vector.extract_strided_slice %305 {offsets = [0, 640], sizes = [8, 128], strides = [1, 1]} : vector<8x768xf32> to vector<8x128xf32>
    %c1_i32_152 = arith.constant 1 : i32
    %333 = tpu.dynamic_rotate %330 by %c1_i32_152 dim 0 : vector<8x128xf32>, i32 -> vector<8x128xf32>
    %334 = vector.broadcast %277 : vector<8x1xf32> to vector<8x128xf32>
    %335 = arith.mulf %334, %333 : vector<8x128xf32>
    %336 = arith.addf %331, %335 : vector<8x128xf32>
    %c7_i32_153 = arith.constant 7 : i32
    %337 = tpu.dynamic_rotate %332 by %c7_i32_153 dim 0 : vector<8x128xf32>, i32 -> vector<8x128xf32>
    %338 = vector.broadcast %282 : vector<8x1xf32> to vector<8x128xf32>
    %339 = arith.mulf %338, %337 : vector<8x128xf32>
    %340 = arith.addf %336, %339 : vector<8x128xf32>
    %341 = vector.broadcast %329 : vector<1x128xf32> to vector<8x128xf32>
    %342 = arith.addf %340, %341 : vector<8x128xf32>
    %343 = arith.addf %342, %319 : vector<8x128xf32>
    %cst_154 = arith.constant 0.000000e+00 : f32
    %344 = vector.broadcast %cst_154 : f32 to vector<8x128xf32>
    %345 = arith.maximumf %328, %344 : vector<8x128xf32>
    %346 = arith.truncf %345 : vector<8x128xf32> to vector<8x128xbf16>
    %c0_155 = arith.constant 0 : index
    %c0_156 = arith.constant 0 : index
    %347 = vector.load %arg38[%c0_155, %c0_156] : memref<128x128xbf16, #tpu.memory_space<vmem>>, vector<128x128xbf16>
    %cst_157 = arith.constant dense<0.000000e+00> : vector<8x128xf32>
    %348 = tpu.matmul %346, %347, %cst_157 {dimension_numbers = #tpu.dot_dimension_numbers<[1], [0], [0], [1], [0, 0, 1, 1], [], []>} : vector<8x128xbf16>, vector<128x128xbf16>, vector<8x128xf32> -> vector<8x128xf32>
    %c0_158 = arith.constant 0 : index
    %c0_159 = arith.constant 0 : index
    %349 = vector.load %arg35[%c0_158, %c0_159] : memref<1x128xf32, #tpu.memory_space<vmem>>, vector<1x128xf32>
    %350 = vector.broadcast %349 : vector<1x128xf32> to vector<8x128xf32>
    %351 = arith.addf %348, %350 : vector<8x128xf32>
    %352 = arith.addf %343, %351 : vector<8x128xf32>
    %c0_160 = arith.constant 0 : index
    %c0_161 = arith.constant 0 : index
    %353 = vector.load %arg39[%c0_160, %c0_161] : memref<1x128xf32, #tpu.memory_space<vmem>>, vector<1x128xf32>
    %354 = vector.broadcast %353 : vector<1x128xf32> to vector<8x128xf32>
    %355 = arith.mulf %352, %354 : vector<8x128xf32>
    %c0_162 = arith.constant 0 : index
    %c0_163 = arith.constant 0 : index
    %356 = vector.load %arg40[%c0_162, %c0_163] : memref<1x128xf32, #tpu.memory_space<vmem>>, vector<1x128xf32>
    %357 = vector.broadcast %356 : vector<1x128xf32> to vector<8x128xf32>
    %358 = arith.addf %355, %357 : vector<8x128xf32>
    %cst_164 = arith.constant 0.000000e+00 : f32
    %359 = vector.broadcast %cst_164 : f32 to vector<8x128xf32>
    %360 = arith.maximumf %358, %359 : vector<8x128xf32>
    %361 = arith.truncf %360 : vector<8x128xf32> to vector<8x128xbf16>
    %c0_165 = arith.constant 0 : index
    %c0_166 = arith.constant 0 : index
    %362 = vector.load %arg42[%c0_165, %c0_166] : memref<128x32xbf16, #tpu.memory_space<vmem>>, vector<128x32xbf16>
    %cst_167 = arith.constant dense<0.000000e+00> : vector<8x32xf32>
    %363 = tpu.matmul %361, %362, %cst_167 {dimension_numbers = #tpu.dot_dimension_numbers<[1], [0], [0], [1], [0, 0, 1, 1], [], []>} : vector<8x128xbf16>, vector<128x32xbf16>, vector<8x32xf32> -> vector<8x32xf32>
    %c0_168 = arith.constant 0 : index
    %c0_169 = arith.constant 0 : index
    %364 = vector.load %arg41[%c0_168, %c0_169] : memref<2x8xbf16, #tpu.memory_space<vmem>>, vector<2x8xbf16>
    %365 = arith.truncf %363 : vector<8x32xf32> to vector<8x32xbf16>
    %cst_170 = arith.constant dense<0.000000e+00> : vector<2x32xf32>
    %366 = tpu.matmul %364, %365, %cst_170 {dimension_numbers = #tpu.dot_dimension_numbers<[1], [0], [0], [1], [0, 0, 1, 1], [], []>} : vector<2x8xbf16>, vector<8x32xbf16>, vector<2x32xf32> -> vector<2x32xf32>
    %c0_171 = arith.constant 0 : index
    %c0_172 = arith.constant 0 : index
    %367 = vector.load %arg45[%c0_171, %c0_172] : memref<2x32xf32, #tpu.memory_space<vmem>>, vector<2x32xf32>
    tpu.vector_store %arg45[%c0_171, %c0_172], %366 {strides = array<i32>} : memref<2x32xf32, #tpu.memory_space<vmem>>, vector<2x32xf32>,
    %c0_173 = arith.constant 0 : index
    %c0_174 = arith.constant 0 : index
    %368 = vector.load %arg43[%c0_173, %c0_174] : memref<32x10xf32, #tpu.memory_space<vmem>>, vector<32x10xf32>
    %cst_175 = arith.constant dense<0.000000e+00> : vector<2x10xf32>
    %369 = tpu.matmul %366, %368, %cst_175 {dimension_numbers = #tpu.dot_dimension_numbers<[1], [0], [0], [1], [0, 0, 1, 1], [], []>} : vector<2x32xf32>, vector<32x10xf32>, vector<2x10xf32> -> vector<2x10xf32>
    %c0_176 = arith.constant 0 : index
    %c0_177 = arith.constant 0 : index
    %370 = vector.load %arg44[%c0_176, %c0_177] : memref<1x10xf32, #tpu.memory_space<vmem>>, vector<1x10xf32>
    %371 = vector.broadcast %370 : vector<1x10xf32> to vector<2x10xf32>
    %372 = arith.addf %369, %371 : vector<2x10xf32>
    %c0_178 = arith.constant 0 : index
    %c0_179 = arith.constant 0 : index
    %373 = vector.load %arg46[%c0_178, %c0_179] : memref<2x10xf32, #tpu.memory_space<vmem>>, vector<2x10xf32>
    tpu.vector_store %arg46[%c0_178, %c0_179], %372 {strides = array<i32>} : memref<2x10xf32, #tpu.memory_space<vmem>>, vector<2x10xf32>,
    return
  }
  func.func @transform_0(%arg0: i32) -> (i32, i32) {
    %c0_i32 = arith.constant 0 : i32
    %c0_i32_0 = arith.constant 0 : i32
    %c0_i32_1 = arith.constant 0 : i32
    return %c0_i32, %c0_i32_0 : i32, i32
  }
  func.func @transform_1(%arg0: i32) -> (i32, i32) {
    %c0_i32 = arith.constant 0 : i32
    %c0_i32_0 = arith.constant 0 : i32
    %c0_i32_1 = arith.constant 0 : i32
    return %c0_i32, %c0_i32_0 : i32, i32
  }
  func.func @transform_2(%arg0: i32) -> (i32, i32) {
    %c0_i32 = arith.constant 0 : i32
    %c0_i32_0 = arith.constant 0 : i32
    %c0_i32_1 = arith.constant 0 : i32
    return %c0_i32, %c0_i32_0 : i32, i32
  }
  func.func @transform_3(%arg0: i32) -> (i32, i32) {
    %c0_i32 = arith.constant 0 : i32
    %c0_i32_0 = arith.constant 0 : i32
    %c0_i32_1 = arith.constant 0 : i32
    return %c0_i32, %c0_i32_0 : i32, i32
  }
  func.func @transform_4(%arg0: i32) -> (i32, i32) {
    %c0_i32 = arith.constant 0 : i32
    %c0_i32_0 = arith.constant 0 : i32
    %c0_i32_1 = arith.constant 0 : i32
    return %c0_i32, %c0_i32_0 : i32, i32
  }
  func.func @transform_5(%arg0: i32) -> (i32, i32) {
    %c0_i32 = arith.constant 0 : i32
    %c0_i32_0 = arith.constant 0 : i32
    %c0_i32_1 = arith.constant 0 : i32
    return %c0_i32, %c0_i32_0 : i32, i32
  }
  func.func @transform_6(%arg0: i32) -> (i32, i32) {
    %c0_i32 = arith.constant 0 : i32
    %c0_i32_0 = arith.constant 0 : i32
    %c0_i32_1 = arith.constant 0 : i32
    return %c0_i32, %c0_i32_0 : i32, i32
  }
  func.func @transform_7(%arg0: i32) -> (i32, i32) {
    %c0_i32 = arith.constant 0 : i32
    %c0_i32_0 = arith.constant 0 : i32
    %c0_i32_1 = arith.constant 0 : i32
    return %c0_i32, %c0_i32_0 : i32, i32
  }
  func.func @transform_8(%arg0: i32) -> (i32, i32) {
    %c0_i32 = arith.constant 0 : i32
    %c0_i32_0 = arith.constant 0 : i32
    %c0_i32_1 = arith.constant 0 : i32
    return %c0_i32, %c0_i32_0 : i32, i32
  }
  func.func @transform_9(%arg0: i32) -> (i32, i32) {
    %c0_i32 = arith.constant 0 : i32
    %c0_i32_0 = arith.constant 0 : i32
    %c0_i32_1 = arith.constant 0 : i32
    return %c0_i32, %c0_i32_0 : i32, i32
  }
  func.func @transform_10(%arg0: i32) -> (i32, i32) {
    %c0_i32 = arith.constant 0 : i32
    %c0_i32_0 = arith.constant 0 : i32
    %c0_i32_1 = arith.constant 0 : i32
    return %c0_i32, %c0_i32_0 : i32, i32
  }
  func.func @transform_11(%arg0: i32) -> (i32, i32) {
    %c0_i32 = arith.constant 0 : i32
    %c0_i32_0 = arith.constant 0 : i32
    %c0_i32_1 = arith.constant 0 : i32
    return %c0_i32, %c0_i32_0 : i32, i32
  }
  func.func @transform_12(%arg0: i32) -> (i32, i32) {
    %c0_i32 = arith.constant 0 : i32
    %c0_i32_0 = arith.constant 0 : i32
    %c0_i32_1 = arith.constant 0 : i32
    return %c0_i32, %c0_i32_0 : i32, i32
  }
  func.func @transform_13(%arg0: i32) -> (i32, i32) {
    %c0_i32 = arith.constant 0 : i32
    %c0_i32_0 = arith.constant 0 : i32
    %c0_i32_1 = arith.constant 0 : i32
    return %c0_i32, %c0_i32_0 : i32, i32
  }
  func.func @transform_14(%arg0: i32) -> (i32, i32) {
    %c0_i32 = arith.constant 0 : i32
    %c0_i32_0 = arith.constant 0 : i32
    %c0_i32_1 = arith.constant 0 : i32
    return %c0_i32, %c0_i32_0 : i32, i32
  }
  func.func @transform_15(%arg0: i32) -> (i32, i32) {
    %c0_i32 = arith.constant 0 : i32
    %c0_i32_0 = arith.constant 0 : i32
    %c0_i32_1 = arith.constant 0 : i32
    return %c0_i32, %c0_i32_0 : i32, i32
  }
  func.func @transform_16(%arg0: i32) -> (i32, i32) {
    %c0_i32 = arith.constant 0 : i32
    %c0_i32_0 = arith.constant 0 : i32
    %c0_i32_1 = arith.constant 0 : i32
    return %c0_i32, %c0_i32_0 : i32, i32
  }
  func.func @transform_17(%arg0: i32) -> (i32, i32) {
    %c0_i32 = arith.constant 0 : i32
    %c0_i32_0 = arith.constant 0 : i32
    %c0_i32_1 = arith.constant 0 : i32
    return %c0_i32, %c0_i32_0 : i32, i32
  }
  func.func @transform_18(%arg0: i32) -> (i32, i32) {
    %c0_i32 = arith.constant 0 : i32
    %c0_i32_0 = arith.constant 0 : i32
    %c0_i32_1 = arith.constant 0 : i32
    return %c0_i32, %c0_i32_0 : i32, i32
  }
  func.func @transform_19(%arg0: i32) -> (i32, i32) {
    %c0_i32 = arith.constant 0 : i32
    %c0_i32_0 = arith.constant 0 : i32
    %c0_i32_1 = arith.constant 0 : i32
    return %c0_i32, %c0_i32_0 : i32, i32
  }
  func.func @transform_20(%arg0: i32) -> (i32, i32) {
    %c0_i32 = arith.constant 0 : i32
    %c0_i32_0 = arith.constant 0 : i32
    %c0_i32_1 = arith.constant 0 : i32
    return %c0_i32, %c0_i32_0 : i32, i32
  }
  func.func @transform_21(%arg0: i32) -> (i32, i32) {
    %c0_i32 = arith.constant 0 : i32
    %c0_i32_0 = arith.constant 0 : i32
    %c0_i32_1 = arith.constant 0 : i32
    return %c0_i32, %c0_i32_0 : i32, i32
  }
  func.func @transform_22(%arg0: i32) -> (i32, i32) {
    %c0_i32 = arith.constant 0 : i32
    %c0_i32_0 = arith.constant 0 : i32
    %c0_i32_1 = arith.constant 0 : i32
    return %c0_i32, %c0_i32_0 : i32, i32
  }
  func.func @transform_23(%arg0: i32) -> (i32, i32) {
    %c0_i32 = arith.constant 0 : i32
    %c0_i32_0 = arith.constant 0 : i32
    %c0_i32_1 = arith.constant 0 : i32
    return %c0_i32, %c0_i32_0 : i32, i32
  }
  func.func @transform_24(%arg0: i32) -> (i32, i32) {
    %c0_i32 = arith.constant 0 : i32
    %c0_i32_0 = arith.constant 0 : i32
    %c0_i32_1 = arith.constant 0 : i32
    return %c0_i32, %c0_i32_0 : i32, i32
  }
  func.func @transform_25(%arg0: i32) -> (i32, i32) {
    %c0_i32 = arith.constant 0 : i32
    %c0_i32_0 = arith.constant 0 : i32
    %c0_i32_1 = arith.constant 0 : i32
    return %c0_i32, %c0_i32_0 : i32, i32
  }
  func.func @transform_26(%arg0: i32) -> (i32, i32) {
    %c0_i32 = arith.constant 0 : i32
    %c0_i32_0 = arith.constant 0 : i32
    %c0_i32_1 = arith.constant 0 : i32
    return %c0_i32, %c0_i32_0 : i32, i32
  }
  func.func @transform_27(%arg0: i32) -> (i32, i32) {
    %c0_i32 = arith.constant 0 : i32
    %c0_i32_0 = arith.constant 0 : i32
    %c0_i32_1 = arith.constant 0 : i32
    return %c0_i32, %c0_i32_0 : i32, i32
  }
  func.func @transform_28(%arg0: i32) -> (i32, i32) {
    %c0_i32 = arith.constant 0 : i32
    %c0_i32_0 = arith.constant 0 : i32
    %c0_i32_1 = arith.constant 0 : i32
    return %c0_i32, %c0_i32_0 : i32, i32
  }
  func.func @transform_29(%arg0: i32) -> (i32, i32) {
    %c0_i32 = arith.constant 0 : i32
    %c0_i32_0 = arith.constant 0 : i32
    %c0_i32_1 = arith.constant 0 : i32
    return %c0_i32, %c0_i32_0 : i32, i32
  }
  func.func @transform_30(%arg0: i32) -> (i32, i32) {
    %c0_i32 = arith.constant 0 : i32
    %c0_i32_0 = arith.constant 0 : i32
    %c0_i32_1 = arith.constant 0 : i32
    return %c0_i32, %c0_i32_0 : i32, i32
  }
  func.func @transform_31(%arg0: i32) -> (i32, i32) {
    %c0_i32 = arith.constant 0 : i32
    %c0_i32_0 = arith.constant 0 : i32
    %c0_i32_1 = arith.constant 0 : i32
    return %c0_i32, %c0_i32_0 : i32, i32
  }
  func.func @transform_32(%arg0: i32) -> (i32, i32) {
    %c0_i32 = arith.constant 0 : i32
    %c0_i32_0 = arith.constant 0 : i32
    %c0_i32_1 = arith.constant 0 : i32
    return %c0_i32, %c0_i32_0 : i32, i32
  }
  func.func @transform_33(%arg0: i32) -> (i32, i32) {
    %c0_i32 = arith.constant 0 : i32
    %c0_i32_0 = arith.constant 0 : i32
    %c0_i32_1 = arith.constant 0 : i32
    return %c0_i32, %c0_i32_0 : i32, i32
  }
  func.func @transform_34(%arg0: i32) -> (i32, i32) {
    %c0_i32 = arith.constant 0 : i32
    %c0_i32_0 = arith.constant 0 : i32
    %c0_i32_1 = arith.constant 0 : i32
    return %c0_i32, %c0_i32_0 : i32, i32
  }
  func.func @transform_35(%arg0: i32) -> (i32, i32) {
    %c0_i32 = arith.constant 0 : i32
    %c0_i32_0 = arith.constant 0 : i32
    %c0_i32_1 = arith.constant 0 : i32
    return %c0_i32, %c0_i32_0 : i32, i32
  }
  func.func @transform_36(%arg0: i32) -> (i32, i32) {
    %c0_i32 = arith.constant 0 : i32
    %c0_i32_0 = arith.constant 0 : i32
    %c0_i32_1 = arith.constant 0 : i32
    return %c0_i32, %c0_i32_0 : i32, i32
  }
  func.func @transform_37(%arg0: i32) -> (i32, i32) {
    %c0_i32 = arith.constant 0 : i32
    %c0_i32_0 = arith.constant 0 : i32
    %c0_i32_1 = arith.constant 0 : i32
    return %c0_i32, %c0_i32_0 : i32, i32
  }
  func.func @transform_38(%arg0: i32) -> (i32, i32) {
    %c0_i32 = arith.constant 0 : i32
    %c0_i32_0 = arith.constant 0 : i32
    %c0_i32_1 = arith.constant 0 : i32
    return %c0_i32, %c0_i32_0 : i32, i32
  }
  func.func @transform_39(%arg0: i32) -> (i32, i32) {
    %c0_i32 = arith.constant 0 : i32
    %c0_i32_0 = arith.constant 0 : i32
    %c0_i32_1 = arith.constant 0 : i32
    return %c0_i32, %c0_i32_0 : i32, i32
  }
  func.func @transform_40(%arg0: i32) -> (i32, i32) {
    %c0_i32 = arith.constant 0 : i32
    %c0_i32_0 = arith.constant 0 : i32
    %c0_i32_1 = arith.constant 0 : i32
    return %c0_i32, %c0_i32_0 : i32, i32
  }
  func.func @transform_41(%arg0: i32) -> (i32, i32) {
    %c0_i32 = arith.constant 0 : i32
    %c0_i32_0 = arith.constant 0 : i32
    %c0_i32_1 = arith.constant 0 : i32
    return %c0_i32, %c0_i32_0 : i32, i32
  }
  func.func @transform_42(%arg0: i32) -> (i32, i32) {
    %c0_i32 = arith.constant 0 : i32
    %c0_i32_0 = arith.constant 0 : i32
    %c0_i32_1 = arith.constant 0 : i32
    return %c0_i32, %c0_i32_0 : i32, i32
  }
  func.func @transform_43(%arg0: i32) -> (i32, i32) {
    %c0_i32 = arith.constant 0 : i32
    %c0_i32_0 = arith.constant 0 : i32
    %c0_i32_1 = arith.constant 0 : i32
    return %c0_i32, %c0_i32_0 : i32, i32
  }
  func.func @transform_44(%arg0: i32) -> (i32, i32) {
    %c0_i32 = arith.constant 0 : i32
    %c0_i32_0 = arith.constant 0 : i32
    %c0_i32_1 = arith.constant 0 : i32
    return %c0_i32, %c0_i32_0 : i32, i32
  }
  func.func @transform_45(%arg0: i32) -> (i32, i32) {
    %c0_i32 = arith.constant 0 : i32
    %c0_i32_0 = arith.constant 0 : i32
    %c0_i32_1 = arith.constant 0 : i32
    return %c0_i32, %c0_i32_0 : i32, i32
  }
  func.func @transform_46(%arg0: i32) -> (i32, i32) {
    %c0_i32 = arith.constant 0 : i32
    %c0_i32_0 = arith.constant 0 : i32
    %c0_i32_1 = arith.constant 0 : i32
    return %c0_i32, %c0_i32_0 : i32, i32
  }
  func.func @transform_47(%arg0: i32) -> (i32, i32) {
    %c0_i32 = arith.constant 0 : i32
    %c0_i32_0 = arith.constant 0 : i32
    %c0_i32_1 = arith.constant 0 : i32
    return %c0_i32, %c0_i32_0 : i32, i32
  }
}

</mosaic_0001>

<llo_original>
// kernel: forward.1
$region0: #{forward.1}
  #allocation0 [shape = 'u32[]', space=smem, size = 0x4, offset = 0x4, fixed_abs, tag = 'smem constant byte address 0x4 - core index']
  #allocation1 [shape = 'u32[72,128]{1,0:T(1,128)}', space=vmem, size = 0x9000, scoped, tag = 'internal scratch']
  %s0 = inlined_call_operand.smem [shape: u32[48], index: -1, kind: input, shape index: {}]
  %s1 = sld [smem:[%s0]]
  %s2 = scalar_lea.smem %s0, 1
  %s3 = sld [smem:[%s2]]
  %s4 = scalar_lea.smem %s0, 2
  %s5 = sld [smem:[%s4]]
  %s6 = scalar_lea.smem %s0, 3
  %s7 = sld [smem:[%s6]]
  %s8 = scalar_lea.smem %s0, 4
  %s9 = sld [smem:[%s8]]
  %s10 = scalar_lea.smem %s0, 5
  %s11 = sld [smem:[%s10]]
  %s12 = scalar_lea.smem %s0, 6
  %s13 = sld [smem:[%s12]]
  %s14 = scalar_lea.smem %s0, 7
  %s15 = sld [smem:[%s14]]
  %s16 = scalar_lea.smem %s0, 8
  %s17 = sld [smem:[%s16]]
  %s18 = scalar_lea.smem %s0, 9
  %s19 = sld [smem:[%s18]]
  %s20 = scalar_lea.smem %s0, 10
  %s21 = sld [smem:[%s20]]
  %s22 = scalar_lea.smem %s0, 11
  %s23 = sld [smem:[%s22]]
  %s24 = scalar_lea.smem %s0, 12
  %s25 = sld [smem:[%s24]]
  %s26 = scalar_lea.smem %s0, 13
  %s27 = sld [smem:[%s26]]
  %s28 = scalar_lea.smem %s0, 14
  %s29 = sld [smem:[%s28]]
  %s30 = scalar_lea.smem %s0, 15
  %s31 = sld [smem:[%s30]]
  %s32 = scalar_lea.smem %s0, 16
  %s33 = sld [smem:[%s32]]
  %s34 = scalar_lea.smem %s0, 17
  %s35 = sld [smem:[%s34]]
  %s36 = scalar_lea.smem %s0, 18
  %s37 = sld [smem:[%s36]]
  %s38 = scalar_lea.smem %s0, 19
  %s39 = sld [smem:[%s38]]
  %s40 = scalar_lea.smem %s0, 20
  %s41 = sld [smem:[%s40]]
  %s42 = scalar_lea.smem %s0, 21
  %s43 = sld [smem:[%s42]]
  %s44 = scalar_lea.smem %s0, 22
  %s45 = sld [smem:[%s44]]
  %s46 = scalar_lea.smem %s0, 23
  %s47 = sld [smem:[%s46]]
  %s48 = scalar_lea.smem %s0, 24
  %s49 = sld [smem:[%s48]]
  %s50 = scalar_lea.smem %s0, 25
  %s51 = sld [smem:[%s50]]
  %s52 = scalar_lea.smem %s0, 26
  %s53 = sld [smem:[%s52]]
  %s54 = scalar_lea.smem %s0, 27
  %s55 = sld [smem:[%s54]]
  %s56 = scalar_lea.smem %s0, 28
  %s57 = sld [smem:[%s56]]
  %s58 = scalar_lea.smem %s0, 29
  %s59 = sld [smem:[%s58]]
  %s60 = scalar_lea.smem %s0, 30
  %s61 = sld [smem:[%s60]]
  %s62 = scalar_lea.smem %s0, 31
  %s63 = sld [smem:[%s62]]
  %s64 = scalar_lea.smem %s0, 32
  %s65 = sld [smem:[%s64]]
  %s66 = scalar_lea.smem %s0, 33
  %s67 = sld [smem:[%s66]]
  %s68 = scalar_lea.smem %s0, 34
  %s69 = sld [smem:[%s68]]
  %s70 = scalar_lea.smem %s0, 35
  %s71 = sld [smem:[%s70]]
  %s72 = scalar_lea.smem %s0, 36
  %s73 = sld [smem:[%s72]]
  %s74 = scalar_lea.smem %s0, 37
  %s75 = sld [smem:[%s74]]
  %s76 = scalar_lea.smem %s0, 38
  %s77 = sld [smem:[%s76]]
  %s78 = scalar_lea.smem %s0, 39
  %s79 = sld [smem:[%s78]]
  %s80 = scalar_lea.smem %s0, 40
  %s81 = sld [smem:[%s80]]
  %s82 = scalar_lea.smem %s0, 41
  %s83 = sld [smem:[%s82]]
  %s84 = scalar_lea.smem %s0, 42
  %s85 = sld [smem:[%s84]]
  %s86 = scalar_lea.smem %s0, 43
  %s87 = sld [smem:[%s86]]
  %s88 = scalar_lea.smem %s0, 44
  %s89 = sld [smem:[%s88]]
  %s90 = scalar_lea.smem %s0, 45
  %s91 = sld [smem:[%s90]]
  %s92 = scalar_lea.smem %s0, 46
  %s93 = sld [smem:[%s92]]
  %s94 = scalar_lea.smem %s0, 47
  %s95 = sld [smem:[%s94]]
  %96 = xla_tuple %s89, %s91, %s93, %s95
  %s97 = sld [smem:[#allocation0]]
  $region362: #{forward.1} parent=0
    _
  %s99 = ssub.s32 1, %s97
  %s100 = scalar_select 0, %s99, %s97
  $region1: #{forward.1} parent=0
    #allocation2 [shape = 'u8[36864]{0}', space=vmem, size = 0x9000, scoped, tag = 'input window, operand 1, single buffered']
    #allocation3 [shape = 's32[1]{0}', space=sflag, size = 0x4, scoped, tag = 'scoped memory for forward.1']
    #allocation4 [shape = 's32[1]{0}', space=sflag, size = 0x4, scoped, tag = 'scoped memory for forward.1']
    #allocation5 [shape = 'u8[512]{0}', space=vmem, size = 0x400, scoped, tag = 'input window, operand 5, single buffered']
    #allocation6 [shape = 's32[1]{0}', space=sflag, size = 0x4, scoped, tag = 'scoped memory for forward.1']
    #allocation7 [shape = 'u8[512]{0}', space=vmem, size = 0x400, scoped, tag = 'input window, operand 6, single buffered']
    #allocation8 [shape = 'u8[32768]{0}', space=vmem, size = 0x8000, scoped, tag = 'input window, operand 9, single buffered']
    #allocation9 [shape = 's32[1]{0}', space=sflag, size = 0x4, scoped, tag = 'scoped memory for forward.1']
    #allocation10 [shape = 'u8[98304]{0}', space=vmem, size = 0x18000, scoped, tag = 'input window, operand 10, single buffered']
    #allocation11 [shape = 'u8[512]{0}', space=vmem, size = 0x400, scoped, tag = 'input window, operand 11, single buffered']
    #allocation12 [shape = 's32[1]{0}', space=sflag, size = 0x4, scoped, tag = 'scoped memory for forward.1']
    #allocation13 [shape = 'u8[4096]{0}', space=vmem, size = 0x1000, scoped, tag = 'input window, operand 12, single buffered']
    #allocation14 [shape = 'u8[98304]{0}', space=vmem, size = 0x18000, scoped, tag = 'input window, operand 13, single buffered']
    #allocation15 [shape = 's32[1]{0}', space=sflag, size = 0x4, scoped, tag = 'scoped memory for forward.1']
    #allocation16 [shape = 'u8[512]{0}', space=vmem, size = 0x400, scoped, tag = 'input window, operand 14, single buffered']
    #allocation17 [shape = 'u8[32768]{0}', space=vmem, size = 0x8000, scoped, tag = 'input window, operand 15, single buffered']
    #allocation18 [shape = 's32[1]{0}', space=sflag, size = 0x4, scoped, tag = 'scoped memory for forward.1']
    #allocation19 [shape = 'u8[4096]{0}', space=vmem, size = 0x1000, scoped, tag = 'input window, operand 16, single buffered']
    #allocation20 [shape = 'u8[512]{0}', space=vmem, size = 0x400, scoped, tag = 'input window, operand 17, single buffered']
    #allocation21 [shape = 's32[1]{0}', space=sflag, size = 0x4, scoped, tag = 'scoped memory for forward.1']
    #allocation22 [shape = 'u8[512]{0}', space=vmem, size = 0x400, scoped, tag = 'input window, operand 18, single buffered']
    #allocation23 [shape = 'u8[512]{0}', space=vmem, size = 0x400, scoped, tag = 'input window, operand 19, single buffered']
    #allocation24 [shape = 's32[1]{0}', space=sflag, size = 0x4, scoped, tag = 'scoped memory for forward.1']
    #allocation25 [shape = 'u8[512]{0}', space=vmem, size = 0x400, scoped, tag = 'input window, operand 20, single buffered']
    #allocation26 [shape = 'u8[196608]{0}', space=vmem, size = 0x30000, scoped, tag = 'input window, operand 21, single buffered']
    #allocation27 [shape = 's32[1]{0}', space=sflag, size = 0x4, scoped, tag = 'scoped memory for forward.1']
    #allocation28 [shape = 'u8[32768]{0}', space=vmem, size = 0x8000, scoped, tag = 'input window, operand 22, single buffered']
    #allocation29 [shape = 'u8[32768]{0}', space=vmem, size = 0x8000, scoped, tag = 'input window, operand 23, single buffered']
    #allocation30 [shape = 's32[1]{0}', space=sflag, size = 0x4, scoped, tag = 'scoped memory for forward.1']
    #allocation31 [shape = 'u8[98304]{0}', space=vmem, size = 0x18000, scoped, tag = 'input window, operand 24, single buffered']
    #allocation32 [shape = 'u8[512]{0}', space=vmem, size = 0x400, scoped, tag = 'input window, operand 25, single buffered']
    #allocation33 [shape = 's32[1]{0}', space=sflag, size = 0x4, scoped, tag = 'scoped memory for forward.1']
    #allocation34 [shape = 'u8[2048]{0}', space=vmem, size = 0x800, scoped, tag = 'input window, operand 26, single buffered']
    #allocation35 [shape = 'u8[98304]{0}', space=vmem, size = 0x18000, scoped, tag = 'input window, operand 27, single buffered']
    #allocation36 [shape = 's32[1]{0}', space=sflag, size = 0x4, scoped, tag = 'scoped memory for forward.1']
    #allocation37 [shape = 'u8[512]{0}', space=vmem, size = 0x400, scoped, tag = 'input window, operand 28, single buffered']
    #allocation38 [shape = 'u8[32768]{0}', space=vmem, size = 0x8000, scoped, tag = 'input window, operand 29, single buffered']
    #allocation39 [shape = 's32[1]{0}', space=sflag, size = 0x4, scoped, tag = 'scoped memory for forward.1']
    #allocation40 [shape = 'u8[2048]{0}', space=vmem, size = 0x800, scoped, tag = 'input window, operand 30, single buffered']
    #allocation41 [shape = 'u8[512]{0}', space=vmem, size = 0x400, scoped, tag = 'input window, operand 31, single buffered']
    #allocation42 [shape = 's32[1]{0}', space=sflag, size = 0x4, scoped, tag = 'scoped memory for forward.1']
    #allocation43 [shape = 'u8[512]{0}', space=vmem, size = 0x400, scoped, tag = 'input window, operand 32, single buffered']
    #allocation44 [shape = 'u8[512]{0}', space=vmem, size = 0x400, scoped, tag = 'input window, operand 33, single buffered']
    #allocation45 [shape = 's32[1]{0}', space=sflag, size = 0x4, scoped, tag = 'scoped memory for forward.1']
    #allocation46 [shape = 'u8[512]{0}', space=vmem, size = 0x400, scoped, tag = 'input window, operand 34, single buffered']
    #allocation47 [shape = 'u8[196608]{0}', space=vmem, size = 0x30000, scoped, tag = 'input window, operand 35, single buffered']
    #allocation48 [shape = 's32[1]{0}', space=sflag, size = 0x4, scoped, tag = 'scoped memory for forward.1']
    #allocation49 [shape = 'u8[32768]{0}', space=vmem, size = 0x8000, scoped, tag = 'input window, operand 36, single buffered']
    #allocation50 [shape = 'u8[32768]{0}', space=vmem, size = 0x8000, scoped, tag = 'input window, operand 37, single buffered']
    #allocation51 [shape = 's32[1]{0}', space=sflag, size = 0x4, scoped, tag = 'scoped memory for forward.1']
    #allocation52 [shape = 'u8[512]{0}', space=vmem, size = 0x400, scoped, tag = 'input window, operand 38, single buffered']
    #allocation53 [shape = 'u8[512]{0}', space=vmem, size = 0x400, scoped, tag = 'input window, operand 39, single buffered']
    #allocation54 [shape = 's32[1]{0}', space=sflag, size = 0x4, scoped, tag = 'scoped memory for forward.1']
    #allocation55 [shape = 'u8[512]{0}', space=vmem, size = 0x400, scoped, tag = 'input window, operand 40, single buffered']
    #allocation56 [shape = 'u8[32768]{0}', space=vmem, size = 0x8000, scoped, tag = 'input window, operand 41, single buffered']
    #allocation57 [shape = 's32[1]{0}', space=sflag, size = 0x4, scoped, tag = 'scoped memory for forward.1']
    #allocation58 [shape = 'u8[16384]{0}', space=vmem, size = 0x4000, scoped, tag = 'input window, operand 42, single buffered']
    #allocation59 [shape = 'u8[512]{0}', space=vmem, size = 0x400, scoped, tag = 'input window, operand 43, single buffered']
    #allocation60 [shape = 's32[1]{0}', space=sflag, size = 0x4, scoped, tag = 'scoped memory for forward.1']
    #allocation61 [shape = 'u8[1024]{0}', space=vmem, size = 0x400, scoped, tag = 'output window, operand 0, single buffered']
    #allocation62 [shape = 'u8[1024]{0}', space=vmem, size = 0x400, scoped, tag = 'output window, operand 1, single buffered']
    #allocation63 [shape = 's32[1]{0}', space=sflag, size = 0x4, scoped, tag = 'scoped memory for forward.1']
    %101 = vsyncpa [#allocation3], 0
    %102 = vsyncpa [#allocation6], 0
    %103 = vsyncpa [#allocation9], 0
    %104 = vsyncpa [#allocation12], 0
    %105 = vsyncpa [#allocation15], 0
    %106 = vsyncpa [#allocation18], 0
    %107 = vsyncpa [#allocation21], 0
    %108 = vsyncpa [#allocation24], 0
    %109 = vsyncpa [#allocation27], 0
    %110 = vsyncpa [#allocation30], 0
    %111 = vsyncpa [#allocation33], 0
    %112 = vsyncpa [#allocation36], 0
    %113 = vsyncpa [#allocation39], 0
    %114 = vsyncpa [#allocation42], 0
    %115 = vsyncpa [#allocation45], 0
    %116 = vsyncpa [#allocation48], 0
    %117 = vsyncpa [#allocation51], 0
    %118 = vsyncpa [#allocation54], 0
    %119 = vsyncpa [#allocation57], 0
    %120 = vsyncpa [#allocation60], 0
    %121 = vsyncpa [#allocation4], 0
    %122 = vsyncpa [#allocation63], 0
    // Predicated region
    $region2: #{forward.1} parent=1 // pred_check
      _
    $region3: #{forward.1} parent=1 // pred_check_branch
      %124 = sbr.rel (0) target = $region5
    $region4: #{forward.1} parent=1 // pred_region
      _
    $region5: #{forward.1} parent=1 // pred_fallthru
      _
    // Predicated region
    $region6: #{forward.1} parent=1 // pred_check
      _
    $region7: #{forward.1} parent=1 // pred_check_branch
      %126 = sbr.rel (0) target = $region9
    $region8: #{forward.1} parent=1 // pred_region
      %128 = vsyncadd [#allocation3], 0
      %s129 = sshll.u32 %s3, 4
      %s130 = int_to_ptr.hbm [resolvable:$true] %s129
      %s131 = sshll.u32 [#allocation2], 4
      %s132 = int_to_ptr.vmem [resolvable:$true] %s131
      %137 = dma.hbm_to_vmem [thread:$0]  %s130, 1152, %s132, [#allocation3], 192, 192, 12
    $region9: #{forward.1} parent=1 // pred_fallthru
      _
    // Predicated region
    $region10: #{forward.1} parent=1 // pred_check
      _
    $region11: #{forward.1} parent=1 // pred_check_branch
      %139 = sbr.rel (0) target = $region13
    $region12: #{forward.1} parent=1 // pred_region
      _
    $region13: #{forward.1} parent=1 // pred_fallthru
      _
    // Predicated region
    $region14: #{forward.1} parent=1 // pred_check
      _
    $region15: #{forward.1} parent=1 // pred_check_branch
      %141 = sbr.rel (0) target = $region17
    $region16: #{forward.1} parent=1 // pred_region
      _
    $region17: #{forward.1} parent=1 // pred_fallthru
      _
    // Predicated region
    $region18: #{forward.1} parent=1 // pred_check
      _
    $region19: #{forward.1} parent=1 // pred_check_branch
      %143 = sbr.rel (0) target = $region21
    $region20: #{forward.1} parent=1 // pred_region
      _
    $region21: #{forward.1} parent=1 // pred_fallthru
      _
    // Predicated region
    $region22: #{forward.1} parent=1 // pred_check
      _
    $region23: #{forward.1} parent=1 // pred_check_branch
      %145 = sbr.rel (0) target = $region25
    $region24: #{forward.1} parent=1 // pred_region
      %147 = vsyncadd [#allocation6], 0
      %s149 = sshll.u32 %s11, 4
      %s150 = int_to_ptr.hbm [resolvable:$true] %s149
      %s151 = sshll.u32 [#allocation5], 4
      %s152 = int_to_ptr.vmem [resolvable:$true] %s151
      %154 = dma.hbm_to_vmem [thread:$0]  %s150, 16, %s152, [#allocation6]
    $region25: #{forward.1} parent=1 // pred_fallthru
      _
    // Predicated region
    $region26: #{forward.1} parent=1 // pred_check
      _
    $region27: #{forward.1} parent=1 // pred_check_branch
      %156 = sbr.rel (0) target = $region29
    $region28: #{forward.1} parent=1 // pred_region
      %158 = vsyncadd [#allocation6], 0
      %s160 = sshll.u32 %s13, 4
      %s161 = int_to_ptr.hbm [resolvable:$true] %s160
      %s162 = sshll.u32 [#allocation7], 4
      %s163 = int_to_ptr.vmem [resolvable:$true] %s162
      %165 = dma.hbm_to_vmem [thread:$0]  %s161, 16, %s163, [#allocation6]
    $region29: #{forward.1} parent=1 // pred_fallthru
      _
    // Predicated region
    $region30: #{forward.1} parent=1 // pred_check
      _
    $region31: #{forward.1} parent=1 // pred_check_branch
      %167 = sbr.rel (0) target = $region33
    $region32: #{forward.1} parent=1 // pred_region
      _
    $region33: #{forward.1} parent=1 // pred_fallthru
      _
    // Predicated region
    $region34: #{forward.1} parent=1 // pred_check
      _
    $region35: #{forward.1} parent=1 // pred_check_branch
      %169 = sbr.rel (0) target = $region37
    $region36: #{forward.1} parent=1 // pred_region
      _
    $region37: #{forward.1} parent=1 // pred_fallthru
      _
    // Predicated region
    $region38: #{forward.1} parent=1 // pred_check
      _
    $region39: #{forward.1} parent=1 // pred_check_branch
      %171 = sbr.rel (0) target = $region41
    $region40: #{forward.1} parent=1 // pred_region
      %173 = vsyncadd [#allocation9], 0
      %s174 = sshll.u32 %s19, 4
      %s175 = int_to_ptr.hbm [resolvable:$true] %s174
      %s176 = sshll.u32 [#allocation8], 4
      %s177 = int_to_ptr.vmem [resolvable:$true] %s176
      %182 = dma.hbm_to_vmem [thread:$0]  %s175, 1024, %s177, [#allocation9], 64, 64, 4
    $region41: #{forward.1} parent=1 // pred_fallthru
      _
    // Predicated region
    $region42: #{forward.1} parent=1 // pred_check
      _
    $region43: #{forward.1} parent=1 // pred_check_branch
      %184 = sbr.rel (0) target = $region45
    $region44: #{forward.1} parent=1 // pred_region
      %186 = vsyncadd [#allocation9], 0
      %s187 = sshll.u32 %s21, 4
      %s188 = int_to_ptr.hbm [resolvable:$true] %s187
      %s189 = sshll.u32 [#allocation10], 4
      %s190 = int_to_ptr.vmem [resolvable:$true] %s189
      %195 = dma.hbm_to_vmem [thread:$0]  %s188, 3072, %s190, [#allocation9], 192, 192, 12
    $region45: #{forward.1} parent=1 // pred_fallthru
      _
    // Predicated region
    $region46: #{forward.1} parent=1 // pred_check
      _
    $region47: #{forward.1} parent=1 // pred_check_branch
      %197 = sbr.rel (0) target = $region49
    $region48: #{forward.1} parent=1 // pred_region
      %199 = vsyncadd [#allocation12], 0
      %s201 = sshll.u32 %s23, 4
      %s202 = int_to_ptr.hbm [resolvable:$true] %s201
      %s203 = sshll.u32 [#allocation11], 4
      %s204 = int_to_ptr.vmem [resolvable:$true] %s203
      %206 = dma.hbm_to_vmem [thread:$0]  %s202, 16, %s204, [#allocation12]
    $region49: #{forward.1} parent=1 // pred_fallthru
      _
    // Predicated region
    $region50: #{forward.1} parent=1 // pred_check
      _
    $region51: #{forward.1} parent=1 // pred_check_branch
      %208 = sbr.rel (0) target = $region53
    $region52: #{forward.1} parent=1 // pred_region
      %210 = vsyncadd [#allocation12], 0
      %s211 = sshll.u32 %s25, 4
      %s212 = int_to_ptr.hbm [resolvable:$true] %s211
      %s213 = sshll.u32 [#allocation13], 4
      %s214 = int_to_ptr.vmem [resolvable:$true] %s213
      %219 = dma.hbm_to_vmem [thread:$0]  %s212, 128, %s214, [#allocation12], 64, 64, 4
    $region53: #{forward.1} parent=1 // pred_fallthru
      _
    // Predicated region
    $region54: #{forward.1} parent=1 // pred_check
      _
    $region55: #{forward.1} parent=1 // pred_check_branch
      %221 = sbr.rel (0) target = $region57
    $region56: #{forward.1} parent=1 // pred_region
      %223 = vsyncadd [#allocation15], 0
      %s224 = sshll.u32 %s27, 4
      %s225 = int_to_ptr.hbm [resolvable:$true] %s224
      %s226 = sshll.u32 [#allocation14], 4
      %s227 = int_to_ptr.vmem [resolvable:$true] %s226
      %232 = dma.hbm_to_vmem [thread:$0]  %s225, 3072, %s227, [#allocation15], 192, 192, 12
    $region57: #{forward.1} parent=1 // pred_fallthru
      _
    // Predicated region
    $region58: #{forward.1} parent=1 // pred_check
      _
    $region59: #{forward.1} parent=1 // pred_check_branch
      %234 = sbr.rel (0) target = $region61
    $region60: #{forward.1} parent=1 // pred_region
      %236 = vsyncadd [#allocation15], 0
      %s238 = sshll.u32 %s29, 4
      %s239 = int_to_ptr.hbm [resolvable:$true] %s238
      %s240 = sshll.u32 [#allocation16], 4
      %s241 = int_to_ptr.vmem [resolvable:$true] %s240
      %243 = dma.hbm_to_vmem [thread:$0]  %s239, 16, %s241, [#allocation15]
    $region61: #{forward.1} parent=1 // pred_fallthru
      _
    // Predicated region
    $region62: #{forward.1} parent=1 // pred_check
      _
    $region63: #{forward.1} parent=1 // pred_check_branch
      %245 = sbr.rel (0) target = $region65
    $region64: #{forward.1} parent=1 // pred_region
      %247 = vsyncadd [#allocation18], 0
      %s248 = sshll.u32 %s31, 4
      %s249 = int_to_ptr.hbm [resolvable:$true] %s248
      %s250 = sshll.u32 [#allocation17], 4
      %s251 = int_to_ptr.vmem [resolvable:$true] %s250
      %256 = dma.hbm_to_vmem [thread:$0]  %s249, 1024, %s251, [#allocation18], 64, 64, 4
    $region65: #{forward.1} parent=1 // pred_fallthru
      _
    // Predicated region
    $region66: #{forward.1} parent=1 // pred_check
      _
    $region67: #{forward.1} parent=1 // pred_check_branch
      %258 = sbr.rel (0) target = $region69
    $region68: #{forward.1} parent=1 // pred_region
      %260 = vsyncadd [#allocation18], 0
      %s261 = sshll.u32 %s33, 4
      %s262 = int_to_ptr.hbm [resolvable:$true] %s261
      %s263 = sshll.u32 [#allocation19], 4
      %s264 = int_to_ptr.vmem [resolvable:$true] %s263
      %269 = dma.hbm_to_vmem [thread:$0]  %s262, 128, %s264, [#allocation18], 64, 64, 4
    $region69: #{forward.1} parent=1 // pred_fallthru
      _
    // Predicated region
    $region70: #{forward.1} parent=1 // pred_check
      _
    $region71: #{forward.1} parent=1 // pred_check_branch
      %271 = sbr.rel (0) target = $region73
    $region72: #{forward.1} parent=1 // pred_region
      %273 = vsyncadd [#allocation21], 0
      %s275 = sshll.u32 %s35, 4
      %s276 = int_to_ptr.hbm [resolvable:$true] %s275
      %s277 = sshll.u32 [#allocation20], 4
      %s278 = int_to_ptr.vmem [resolvable:$true] %s277
      %280 = dma.hbm_to_vmem [thread:$0]  %s276, 16, %s278, [#allocation21]
    $region73: #{forward.1} parent=1 // pred_fallthru
      _
    // Predicated region
    $region74: #{forward.1} parent=1 // pred_check
      _
    $region75: #{forward.1} parent=1 // pred_check_branch
      %282 = sbr.rel (0) target = $region77
    $region76: #{forward.1} parent=1 // pred_region
      %284 = vsyncadd [#allocation21], 0
      %s286 = sshll.u32 %s37, 4
      %s287 = int_to_ptr.hbm [resolvable:$true] %s286
      %s288 = sshll.u32 [#allocation22], 4
      %s289 = int_to_ptr.vmem [resolvable:$true] %s288
      %291 = dma.hbm_to_vmem [thread:$0]  %s287, 16, %s289, [#allocation21]
    $region77: #{forward.1} parent=1 // pred_fallthru
      _
    // Predicated region
    $region78: #{forward.1} parent=1 // pred_check
      _
    $region79: #{forward.1} parent=1 // pred_check_branch
      %293 = sbr.rel (0) target = $region81
    $region80: #{forward.1} parent=1 // pred_region
      %295 = vsyncadd [#allocation24], 0
      %s297 = sshll.u32 %s39, 4
      %s298 = int_to_ptr.hbm [resolvable:$true] %s297
      %s299 = sshll.u32 [#allocation23], 4
      %s300 = int_to_ptr.vmem [resolvable:$true] %s299
      %302 = dma.hbm_to_vmem [thread:$0]  %s298, 16, %s300, [#allocation24]
    $region81: #{forward.1} parent=1 // pred_fallthru
      _
    // Predicated region
    $region82: #{forward.1} parent=1 // pred_check
      _
    $region83: #{forward.1} parent=1 // pred_check_branch
      %304 = sbr.rel (0) target = $region85
    $region84: #{forward.1} parent=1 // pred_region
      %306 = vsyncadd [#allocation24], 0
      %s308 = sshll.u32 %s41, 4
      %s309 = int_to_ptr.hbm [resolvable:$true] %s308
      %s310 = sshll.u32 [#allocation25], 4
      %s311 = int_to_ptr.vmem [resolvable:$true] %s310
      %313 = dma.hbm_to_vmem [thread:$0]  %s309, 16, %s311, [#allocation24]
    $region85: #{forward.1} parent=1 // pred_fallthru
      _
    // Predicated region
    $region86: #{forward.1} parent=1 // pred_check
      _
    $region87: #{forward.1} parent=1 // pred_check_branch
      %315 = sbr.rel (0) target = $region89
    $region88: #{forward.1} parent=1 // pred_region
      %317 = vsyncadd [#allocation27], 0
      %s318 = sshll.u32 %s43, 4
      %s319 = int_to_ptr.hbm [resolvable:$true] %s318
      %s320 = sshll.u32 [#allocation26], 4
      %s321 = int_to_ptr.vmem [resolvable:$true] %s320
      %326 = dma.hbm_to_vmem [thread:$0]  %s319, 6144, %s321, [#allocation27], 384, 384, 24
    $region89: #{forward.1} parent=1 // pred_fallthru
      _
    // Predicated region
    $region90: #{forward.1} parent=1 // pred_check
      _
    $region91: #{forward.1} parent=1 // pred_check_branch
      %328 = sbr.rel (0) target = $region93
    $region92: #{forward.1} parent=1 // pred_region
      %330 = vsyncadd [#allocation27], 0
      %s331 = sshll.u32 %s45, 4
      %s332 = int_to_ptr.hbm [resolvable:$true] %s331
      %s333 = sshll.u32 [#allocation28], 4
      %s334 = int_to_ptr.vmem [resolvable:$true] %s333
      %339 = dma.hbm_to_vmem [thread:$0]  %s332, 1024, %s334, [#allocation27], 64, 64, 4
    $region93: #{forward.1} parent=1 // pred_fallthru
      _
    // Predicated region
    $region94: #{forward.1} parent=1 // pred_check
      _
    $region95: #{forward.1} parent=1 // pred_check_branch
      %341 = sbr.rel (0) target = $region97
    $region96: #{forward.1} parent=1 // pred_region
      %343 = vsyncadd [#allocation30], 0
      %s344 = sshll.u32 %s47, 4
      %s345 = int_to_ptr.hbm [resolvable:$true] %s344
      %s346 = sshll.u32 [#allocation29], 4
      %s347 = int_to_ptr.vmem [resolvable:$true] %s346
      %352 = dma.hbm_to_vmem [thread:$0]  %s345, 1024, %s347, [#allocation30], 64, 64, 4
    $region97: #{forward.1} parent=1 // pred_fallthru
      _
    // Predicated region
    $region98: #{forward.1} parent=1 // pred_check
      _
    $region99: #{forward.1} parent=1 // pred_check_branch
      %354 = sbr.rel (0) target = $region101
    $region100: #{forward.1} parent=1 // pred_region
      %356 = vsyncadd [#allocation30], 0
      %s357 = sshll.u32 %s49, 4
      %s358 = int_to_ptr.hbm [resolvable:$true] %s357
      %s359 = sshll.u32 [#allocation31], 4
      %s360 = int_to_ptr.vmem [resolvable:$true] %s359
      %365 = dma.hbm_to_vmem [thread:$0]  %s358, 3072, %s360, [#allocation30], 192, 192, 12
    $region101: #{forward.1} parent=1 // pred_fallthru
      _
    // Predicated region
    $region102: #{forward.1} parent=1 // pred_check
      _
    $region103: #{forward.1} parent=1 // pred_check_branch
      %367 = sbr.rel (0) target = $region105
    $region104: #{forward.1} parent=1 // pred_region
      %369 = vsyncadd [#allocation33], 0
      %s371 = sshll.u32 %s51, 4
      %s372 = int_to_ptr.hbm [resolvable:$true] %s371
      %s373 = sshll.u32 [#allocation32], 4
      %s374 = int_to_ptr.vmem [resolvable:$true] %s373
      %376 = dma.hbm_to_vmem [thread:$0]  %s372, 16, %s374, [#allocation33]
    $region105: #{forward.1} parent=1 // pred_fallthru
      _
    // Predicated region
    $region106: #{forward.1} parent=1 // pred_check
      _
    $region107: #{forward.1} parent=1 // pred_check_branch
      %378 = sbr.rel (0) target = $region109
    $region108: #{forward.1} parent=1 // pred_region
      %380 = vsyncadd [#allocation33], 0
      %s382 = sshll.u32 %s53, 4
      %s383 = int_to_ptr.hbm [resolvable:$true] %s382
      %s384 = sshll.u32 [#allocation34], 4
      %s385 = int_to_ptr.vmem [resolvable:$true] %s384
      %387 = dma.hbm_to_vmem [thread:$0]  %s383, 64, %s385, [#allocation33]
    $region109: #{forward.1} parent=1 // pred_fallthru
      _
    // Predicated region
    $region110: #{forward.1} parent=1 // pred_check
      _
    $region111: #{forward.1} parent=1 // pred_check_branch
      %389 = sbr.rel (0) target = $region113
    $region112: #{forward.1} parent=1 // pred_region
      %391 = vsyncadd [#allocation36], 0
      %s392 = sshll.u32 %s55, 4
      %s393 = int_to_ptr.hbm [resolvable:$true] %s392
      %s394 = sshll.u32 [#allocation35], 4
      %s395 = int_to_ptr.vmem [resolvable:$true] %s394
      %400 = dma.hbm_to_vmem [thread:$0]  %s393, 3072, %s395, [#allocation36], 192, 192, 12
    $region113: #{forward.1} parent=1 // pred_fallthru
      _
    // Predicated region
    $region114: #{forward.1} parent=1 // pred_check
      _
    $region115: #{forward.1} parent=1 // pred_check_branch
      %402 = sbr.rel (0) target = $region117
    $region116: #{forward.1} parent=1 // pred_region
      %404 = vsyncadd [#allocation36], 0
      %s406 = sshll.u32 %s57, 4
      %s407 = int_to_ptr.hbm [resolvable:$true] %s406
      %s408 = sshll.u32 [#allocation37], 4
      %s409 = int_to_ptr.vmem [resolvable:$true] %s408
      %411 = dma.hbm_to_vmem [thread:$0]  %s407, 16, %s409, [#allocation36]
    $region117: #{forward.1} parent=1 // pred_fallthru
      _
    // Predicated region
    $region118: #{forward.1} parent=1 // pred_check
      _
    $region119: #{forward.1} parent=1 // pred_check_branch
      %413 = sbr.rel (0) target = $region121
    $region120: #{forward.1} parent=1 // pred_region
      %415 = vsyncadd [#allocation39], 0
      %s416 = sshll.u32 %s59, 4
      %s417 = int_to_ptr.hbm [resolvable:$true] %s416
      %s418 = sshll.u32 [#allocation38], 4
      %s419 = int_to_ptr.vmem [resolvable:$true] %s418
      %424 = dma.hbm_to_vmem [thread:$0]  %s417, 1024, %s419, [#allocation39], 64, 64, 4
    $region121: #{forward.1} parent=1 // pred_fallthru
      _
    // Predicated region
    $region122: #{forward.1} parent=1 // pred_check
      _
    $region123: #{forward.1} parent=1 // pred_check_branch
      %426 = sbr.rel (0) target = $region125
    $region124: #{forward.1} parent=1 // pred_region
      %428 = vsyncadd [#allocation39], 0
      %s430 = sshll.u32 %s61, 4
      %s431 = int_to_ptr.hbm [resolvable:$true] %s430
      %s432 = sshll.u32 [#allocation40], 4
      %s433 = int_to_ptr.vmem [resolvable:$true] %s432
      %435 = dma.hbm_to_vmem [thread:$0]  %s431, 64, %s433, [#allocation39]
    $region125: #{forward.1} parent=1 // pred_fallthru
      _
    // Predicated region
    $region126: #{forward.1} parent=1 // pred_check
      _
    $region127: #{forward.1} parent=1 // pred_check_branch
      %437 = sbr.rel (0) target = $region129
    $region128: #{forward.1} parent=1 // pred_region
      %439 = vsyncadd [#allocation42], 0
      %s441 = sshll.u32 %s63, 4
      %s442 = int_to_ptr.hbm [resolvable:$true] %s441
      %s443 = sshll.u32 [#allocation41], 4
      %s444 = int_to_ptr.vmem [resolvable:$true] %s443
      %446 = dma.hbm_to_vmem [thread:$0]  %s442, 16, %s444, [#allocation42]
    $region129: #{forward.1} parent=1 // pred_fallthru
      _
    // Predicated region
    $region130: #{forward.1} parent=1 // pred_check
      _
    $region131: #{forward.1} parent=1 // pred_check_branch
      %448 = sbr.rel (0) target = $region133
    $region132: #{forward.1} parent=1 // pred_region
      %450 = vsyncadd [#allocation42], 0
      %s452 = sshll.u32 %s65, 4
      %s453 = int_to_ptr.hbm [resolvable:$true] %s452
      %s454 = sshll.u32 [#allocation43], 4
      %s455 = int_to_ptr.vmem [resolvable:$true] %s454
      %457 = dma.hbm_to_vmem [thread:$0]  %s453, 16, %s455, [#allocation42]
    $region133: #{forward.1} parent=1 // pred_fallthru
      _
    // Predicated region
    $region134: #{forward.1} parent=1 // pred_check
      _
    $region135: #{forward.1} parent=1 // pred_check_branch
      %459 = sbr.rel (0) target = $region137
    $region136: #{forward.1} parent=1 // pred_region
      %461 = vsyncadd [#allocation45], 0
      %s463 = sshll.u32 %s67, 4
      %s464 = int_to_ptr.hbm [resolvable:$true] %s463
      %s465 = sshll.u32 [#allocation44], 4
      %s466 = int_to_ptr.vmem [resolvable:$true] %s465
      %468 = dma.hbm_to_vmem [thread:$0]  %s464, 16, %s466, [#allocation45]
    $region137: #{forward.1} parent=1 // pred_fallthru
      _
    // Predicated region
    $region138: #{forward.1} parent=1 // pred_check
      _
    $region139: #{forward.1} parent=1 // pred_check_branch
      %470 = sbr.rel (0) target = $region141
    $region140: #{forward.1} parent=1 // pred_region
      %472 = vsyncadd [#allocation45], 0
      %s474 = sshll.u32 %s69, 4
      %s475 = int_to_ptr.hbm [resolvable:$true] %s474
      %s476 = sshll.u32 [#allocation46], 4
      %s477 = int_to_ptr.vmem [resolvable:$true] %s476
      %479 = dma.hbm_to_vmem [thread:$0]  %s475, 16, %s477, [#allocation45]
    $region141: #{forward.1} parent=1 // pred_fallthru
      _
    // Predicated region
    $region142: #{forward.1} parent=1 // pred_check
      _
    $region143: #{forward.1} parent=1 // pred_check_branch
      %481 = sbr.rel (0) target = $region145
    $region144: #{forward.1} parent=1 // pred_region
      %483 = vsyncadd [#allocation48], 0
      %s484 = sshll.u32 %s71, 4
      %s485 = int_to_ptr.hbm [resolvable:$true] %s484
      %s486 = sshll.u32 [#allocation47], 4
      %s487 = int_to_ptr.vmem [resolvable:$true] %s486
      %492 = dma.hbm_to_vmem [thread:$0]  %s485, 6144, %s487, [#allocation48], 384, 384, 24
    $region145: #{forward.1} parent=1 // pred_fallthru
      _
    // Predicated region
    $region146: #{forward.1} parent=1 // pred_check
      _
    $region147: #{forward.1} parent=1 // pred_check_branch
      %494 = sbr.rel (0) target = $region149
    $region148: #{forward.1} parent=1 // pred_region
      %496 = vsyncadd [#allocation48], 0
      %s497 = sshll.u32 %s73, 4
      %s498 = int_to_ptr.hbm [resolvable:$true] %s497
      %s499 = sshll.u32 [#allocation49], 4
      %s500 = int_to_ptr.vmem [resolvable:$true] %s499
      %505 = dma.hbm_to_vmem [thread:$0]  %s498, 1024, %s500, [#allocation48], 64, 64, 4
    $region149: #{forward.1} parent=1 // pred_fallthru
      _
    // Predicated region
    $region150: #{forward.1} parent=1 // pred_check
      _
    $region151: #{forward.1} parent=1 // pred_check_branch
      %507 = sbr.rel (0) target = $region153
    $region152: #{forward.1} parent=1 // pred_region
      %509 = vsyncadd [#allocation51], 0
      %s510 = sshll.u32 %s75, 4
      %s511 = int_to_ptr.hbm [resolvable:$true] %s510
      %s512 = sshll.u32 [#allocation50], 4
      %s513 = int_to_ptr.vmem [resolvable:$true] %s512
      %518 = dma.hbm_to_vmem [thread:$0]  %s511, 1024, %s513, [#allocation51], 64, 64, 4
    $region153: #{forward.1} parent=1 // pred_fallthru
      _
    // Predicated region
    $region154: #{forward.1} parent=1 // pred_check
      _
    $region155: #{forward.1} parent=1 // pred_check_branch
      %520 = sbr.rel (0) target = $region157
    $region156: #{forward.1} parent=1 // pred_region
      %522 = vsyncadd [#allocation51], 0
      %s524 = sshll.u32 %s77, 4
      %s525 = int_to_ptr.hbm [resolvable:$true] %s524
      %s526 = sshll.u32 [#allocation52], 4
      %s527 = int_to_ptr.vmem [resolvable:$true] %s526
      %529 = dma.hbm_to_vmem [thread:$0]  %s525, 16, %s527, [#allocation51]
    $region157: #{forward.1} parent=1 // pred_fallthru
      _
    // Predicated region
    $region158: #{forward.1} parent=1 // pred_check
      _
    $region159: #{forward.1} parent=1 // pred_check_branch
      %531 = sbr.rel (0) target = $region161
    $region160: #{forward.1} parent=1 // pred_region
      %533 = vsyncadd [#allocation54], 0
      %s535 = sshll.u32 %s79, 4
      %s536 = int_to_ptr.hbm [resolvable:$true] %s535
      %s537 = sshll.u32 [#allocation53], 4
      %s538 = int_to_ptr.vmem [resolvable:$true] %s537
      %540 = dma.hbm_to_vmem [thread:$0]  %s536, 16, %s538, [#allocation54]
    $region161: #{forward.1} parent=1 // pred_fallthru
      _
    // Predicated region
    $region162: #{forward.1} parent=1 // pred_check
      _
    $region163: #{forward.1} parent=1 // pred_check_branch
      %542 = sbr.rel (0) target = $region165
    $region164: #{forward.1} parent=1 // pred_region
      %544 = vsyncadd [#allocation54], 0
      %s546 = sshll.u32 %s81, 4
      %s547 = int_to_ptr.hbm [resolvable:$true] %s546
      %s548 = sshll.u32 [#allocation55], 4
      %s549 = int_to_ptr.vmem [resolvable:$true] %s548
      %551 = dma.hbm_to_vmem [thread:$0]  %s547, 16, %s549, [#allocation54]
    $region165: #{forward.1} parent=1 // pred_fallthru
      _
    // Predicated region
    $region166: #{forward.1} parent=1 // pred_check
      _
    $region167: #{forward.1} parent=1 // pred_check_branch
      %553 = sbr.rel (0) target = $region169
    $region168: #{forward.1} parent=1 // pred_region
      %555 = vsyncadd [#allocation57], 0
      %s556 = sshll.u32 %s83, 4
      %s557 = int_to_ptr.hbm [resolvable:$true] %s556
      %s558 = sshll.u32 [#allocation56], 4
      %s559 = int_to_ptr.vmem [resolvable:$true] %s558
      %564 = dma.hbm_to_vmem [thread:$0]  %s557, 1024, %s559, [#allocation57], 64, 64, 4
    $region169: #{forward.1} parent=1 // pred_fallthru
      _
    // Predicated region
    $region170: #{forward.1} parent=1 // pred_check
      _
    $region171: #{forward.1} parent=1 // pred_check_branch
      %566 = sbr.rel (0) target = $region173
    $region172: #{forward.1} parent=1 // pred_region
      %568 = vsyncadd [#allocation57], 0
      %s569 = sshll.u32 %s85, 4
      %s570 = int_to_ptr.hbm [resolvable:$true] %s569
      %s571 = sshll.u32 [#allocation58], 4
      %s572 = int_to_ptr.vmem [resolvable:$true] %s571
      %577 = dma.hbm_to_vmem [thread:$0]  %s570, 512, %s572, [#allocation57], 128, 128, 8
    $region173: #{forward.1} parent=1 // pred_fallthru
      _
    // Predicated region
    $region174: #{forward.1} parent=1 // pred_check
      _
    $region175: #{forward.1} parent=1 // pred_check_branch
      %579 = sbr.rel (0) target = $region177
    $region176: #{forward.1} parent=1 // pred_region
      %581 = vsyncadd [#allocation60], 0
      %s583 = sshll.u32 %s87, 4
      %s584 = int_to_ptr.hbm [resolvable:$true] %s583
      %s585 = sshll.u32 [#allocation59], 4
      %s586 = int_to_ptr.vmem [resolvable:$true] %s585
      %588 = dma.hbm_to_vmem [thread:$0]  %s584, 16, %s586, [#allocation60]
    $region177: #{forward.1} parent=1 // pred_fallthru
      _
    // Predicated region
    $region178: #{forward.1} parent=1 // pred_check
      _
    $region179: #{forward.1} parent=1 // pred_check_branch
      %590 = sbr.rel (0) target = $region181
    $region180: #{forward.1} parent=1 // pred_region
      %592 = dma.done [#allocation3], 1152
    $region181: #{forward.1} parent=1 // pred_fallthru
      _
    // Predicated region
    $region182: #{forward.1} parent=1 // pred_check
      _
    $region183: #{forward.1} parent=1 // pred_check_branch
      %594 = sbr.rel (0) target = $region185
    $region184: #{forward.1} parent=1 // pred_region
      %596 = dma.done [#allocation6], 16
    $region185: #{forward.1} parent=1 // pred_fallthru
      _
    // Predicated region
    $region186: #{forward.1} parent=1 // pred_check
      _
    $region187: #{forward.1} parent=1 // pred_check_branch
      %598 = sbr.rel (0) target = $region189
    $region188: #{forward.1} parent=1 // pred_region
      %600 = dma.done [#allocation6], 16
    $region189: #{forward.1} parent=1 // pred_fallthru
      _
    // Predicated region
    $region190: #{forward.1} parent=1 // pred_check
      _
    $region191: #{forward.1} parent=1 // pred_check_branch
      %602 = sbr.rel (0) target = $region193
    $region192: #{forward.1} parent=1 // pred_region
      %604 = dma.done [#allocation9], 1024
    $region193: #{forward.1} parent=1 // pred_fallthru
      _
    // Predicated region
    $region194: #{forward.1} parent=1 // pred_check
      _
    $region195: #{forward.1} parent=1 // pred_check_branch
      %606 = sbr.rel (0) target = $region197
    $region196: #{forward.1} parent=1 // pred_region
      %608 = dma.done [#allocation9], 3072
    $region197: #{forward.1} parent=1 // pred_fallthru
      _
    // Predicated region
    $region198: #{forward.1} parent=1 // pred_check
      _
    $region199: #{forward.1} parent=1 // pred_check_branch
      %610 = sbr.rel (0) target = $region201
    $region200: #{forward.1} parent=1 // pred_region
      %612 = dma.done [#allocation12], 16
    $region201: #{forward.1} parent=1 // pred_fallthru
      _
    // Predicated region
    $region202: #{forward.1} parent=1 // pred_check
      _
    $region203: #{forward.1} parent=1 // pred_check_branch
      %614 = sbr.rel (0) target = $region205
    $region204: #{forward.1} parent=1 // pred_region
      %616 = dma.done [#allocation12], 128
    $region205: #{forward.1} parent=1 // pred_fallthru
      _
    // Predicated region
    $region206: #{forward.1} parent=1 // pred_check
      _
    $region207: #{forward.1} parent=1 // pred_check_branch
      %618 = sbr.rel (0) target = $region209
    $region208: #{forward.1} parent=1 // pred_region
      %620 = dma.done [#allocation15], 3072
    $region209: #{forward.1} parent=1 // pred_fallthru
      _
    // Predicated region
    $region210: #{forward.1} parent=1 // pred_check
      _
    $region211: #{forward.1} parent=1 // pred_check_branch
      %622 = sbr.rel (0) target = $region213
    $region212: #{forward.1} parent=1 // pred_region
      %624 = dma.done [#allocation15], 16
    $region213: #{forward.1} parent=1 // pred_fallthru
      _
    // Predicated region
    $region214: #{forward.1} parent=1 // pred_check
      _
    $region215: #{forward.1} parent=1 // pred_check_branch
      %626 = sbr.rel (0) target = $region217
    $region216: #{forward.1} parent=1 // pred_region
      %628 = dma.done [#allocation18], 1024
    $region217: #{forward.1} parent=1 // pred_fallthru
      _
    // Predicated region
    $region218: #{forward.1} parent=1 // pred_check
      _
    $region219: #{forward.1} parent=1 // pred_check_branch
      %630 = sbr.rel (0) target = $region221
    $region220: #{forward.1} parent=1 // pred_region
      %632 = dma.done [#allocation18], 128
    $region221: #{forward.1} parent=1 // pred_fallthru
      _
    // Predicated region
    $region222: #{forward.1} parent=1 // pred_check
      _
    $region223: #{forward.1} parent=1 // pred_check_branch
      %634 = sbr.rel (0) target = $region225
    $region224: #{forward.1} parent=1 // pred_region
      %636 = dma.done [#allocation21], 16
    $region225: #{forward.1} parent=1 // pred_fallthru
      _
    // Predicated region
    $region226: #{forward.1} parent=1 // pred_check
      _
    $region227: #{forward.1} parent=1 // pred_check_branch
      %638 = sbr.rel (0) target = $region229
    $region228: #{forward.1} parent=1 // pred_region
      %640 = dma.done [#allocation21], 16
    $region229: #{forward.1} parent=1 // pred_fallthru
      _
    // Predicated region
    $region230: #{forward.1} parent=1 // pred_check
      _
    $region231: #{forward.1} parent=1 // pred_check_branch
      %642 = sbr.rel (0) target = $region233
    $region232: #{forward.1} parent=1 // pred_region
      %644 = dma.done [#allocation24], 16
    $region233: #{forward.1} parent=1 // pred_fallthru
      _
    // Predicated region
    $region234: #{forward.1} parent=1 // pred_check
      _
    $region235: #{forward.1} parent=1 // pred_check_branch
      %646 = sbr.rel (0) target = $region237
    $region236: #{forward.1} parent=1 // pred_region
      %648 = dma.done [#allocation24], 16
    $region237: #{forward.1} parent=1 // pred_fallthru
      _
    // Predicated region
    $region238: #{forward.1} parent=1 // pred_check
      _
    $region239: #{forward.1} parent=1 // pred_check_branch
      %650 = sbr.rel (0) target = $region241
    $region240: #{forward.1} parent=1 // pred_region
      %652 = dma.done [#allocation27], 6144
    $region241: #{forward.1} parent=1 // pred_fallthru
      _
    // Predicated region
    $region242: #{forward.1} parent=1 // pred_check
      _
    $region243: #{forward.1} parent=1 // pred_check_branch
      %654 = sbr.rel (0) target = $region245
    $region244: #{forward.1} parent=1 // pred_region
      %656 = dma.done [#allocation27], 1024
    $region245: #{forward.1} parent=1 // pred_fallthru
      _
    // Predicated region
    $region246: #{forward.1} parent=1 // pred_check
      _
    $region247: #{forward.1} parent=1 // pred_check_branch
      %658 = sbr.rel (0) target = $region249
    $region248: #{forward.1} parent=1 // pred_region
      %660 = dma.done [#allocation30], 1024
    $region249: #{forward.1} parent=1 // pred_fallthru
      _
    // Predicated region
    $region250: #{forward.1} parent=1 // pred_check
      _
    $region251: #{forward.1} parent=1 // pred_check_branch
      %662 = sbr.rel (0) target = $region253
    $region252: #{forward.1} parent=1 // pred_region
      %664 = dma.done [#allocation30], 3072
    $region253: #{forward.1} parent=1 // pred_fallthru
      _
    // Predicated region
    $region254: #{forward.1} parent=1 // pred_check
      _
    $region255: #{forward.1} parent=1 // pred_check_branch
      %666 = sbr.rel (0) target = $region257
    $region256: #{forward.1} parent=1 // pred_region
      %668 = dma.done [#allocation33], 16
    $region257: #{forward.1} parent=1 // pred_fallthru
      _
    // Predicated region
    $region258: #{forward.1} parent=1 // pred_check
      _
    $region259: #{forward.1} parent=1 // pred_check_branch
      %670 = sbr.rel (0) target = $region261
    $region260: #{forward.1} parent=1 // pred_region
      %672 = dma.done [#allocation33], 64
    $region261: #{forward.1} parent=1 // pred_fallthru
      _
    // Predicated region
    $region262: #{forward.1} parent=1 // pred_check
      _
    $region263: #{forward.1} parent=1 // pred_check_branch
      %674 = sbr.rel (0) target = $region265
    $region264: #{forward.1} parent=1 // pred_region
      %676 = dma.done [#allocation36], 3072
    $region265: #{forward.1} parent=1 // pred_fallthru
      _
    // Predicated region
    $region266: #{forward.1} parent=1 // pred_check
      _
    $region267: #{forward.1} parent=1 // pred_check_branch
      %678 = sbr.rel (0) target = $region269
    $region268: #{forward.1} parent=1 // pred_region
      %680 = dma.done [#allocation36], 16
    $region269: #{forward.1} parent=1 // pred_fallthru
      _
    // Predicated region
    $region270: #{forward.1} parent=1 // pred_check
      _
    $region271: #{forward.1} parent=1 // pred_check_branch
      %682 = sbr.rel (0) target = $region273
    $region272: #{forward.1} parent=1 // pred_region
      %684 = dma.done [#allocation39], 1024
    $region273: #{forward.1} parent=1 // pred_fallthru
      _
    // Predicated region
    $region274: #{forward.1} parent=1 // pred_check
      _
    $region275: #{forward.1} parent=1 // pred_check_branch
      %686 = sbr.rel (0) target = $region277
    $region276: #{forward.1} parent=1 // pred_region
      %688 = dma.done [#allocation39], 64
    $region277: #{forward.1} parent=1 // pred_fallthru
      _
    // Predicated region
    $region278: #{forward.1} parent=1 // pred_check
      _
    $region279: #{forward.1} parent=1 // pred_check_branch
      %690 = sbr.rel (0) target = $region281
    $region280: #{forward.1} parent=1 // pred_region
      %692 = dma.done [#allocation42], 16
    $region281: #{forward.1} parent=1 // pred_fallthru
      _
    // Predicated region
    $region282: #{forward.1} parent=1 // pred_check
      _
    $region283: #{forward.1} parent=1 // pred_check_branch
      %694 = sbr.rel (0) target = $region285
    $region284: #{forward.1} parent=1 // pred_region
      %696 = dma.done [#allocation42], 16
    $region285: #{forward.1} parent=1 // pred_fallthru
      _
    // Predicated region
    $region286: #{forward.1} parent=1 // pred_check
      _
    $region287: #{forward.1} parent=1 // pred_check_branch
      %698 = sbr.rel (0) target = $region289
    $region288: #{forward.1} parent=1 // pred_region
      %700 = dma.done [#allocation45], 16
    $region289: #{forward.1} parent=1 // pred_fallthru
      _
    // Predicated region
    $region290: #{forward.1} parent=1 // pred_check
      _
    $region291: #{forward.1} parent=1 // pred_check_branch
      %702 = sbr.rel (0) target = $region293
    $region292: #{forward.1} parent=1 // pred_region
      %704 = dma.done [#allocation45], 16
    $region293: #{forward.1} parent=1 // pred_fallthru
      _
    // Predicated region
    $region294: #{forward.1} parent=1 // pred_check
      _
    $region295: #{forward.1} parent=1 // pred_check_branch
      %706 = sbr.rel (0) target = $region297
    $region296: #{forward.1} parent=1 // pred_region
      %708 = dma.done [#allocation48], 6144
    $region297: #{forward.1} parent=1 // pred_fallthru
      _
    // Predicated region
    $region298: #{forward.1} parent=1 // pred_check
      _
    $region299: #{forward.1} parent=1 // pred_check_branch
      %710 = sbr.rel (0) target = $region301
    $region300: #{forward.1} parent=1 // pred_region
      %712 = dma.done [#allocation48], 1024
    $region301: #{forward.1} parent=1 // pred_fallthru
      _
    // Predicated region
    $region302: #{forward.1} parent=1 // pred_check
      _
    $region303: #{forward.1} parent=1 // pred_check_branch
      %714 = sbr.rel (0) target = $region305
    $region304: #{forward.1} parent=1 // pred_region
      %716 = dma.done [#allocation51], 1024
    $region305: #{forward.1} parent=1 // pred_fallthru
      _
    // Predicated region
    $region306: #{forward.1} parent=1 // pred_check
      _
    $region307: #{forward.1} parent=1 // pred_check_branch
      %718 = sbr.rel (0) target = $region309
    $region308: #{forward.1} parent=1 // pred_region
      %720 = dma.done [#allocation51], 16
    $region309: #{forward.1} parent=1 // pred_fallthru
      _
    // Predicated region
    $region310: #{forward.1} parent=1 // pred_check
      _
    $region311: #{forward.1} parent=1 // pred_check_branch
      %722 = sbr.rel (0) target = $region313
    $region312: #{forward.1} parent=1 // pred_region
      %724 = dma.done [#allocation54], 16
    $region313: #{forward.1} parent=1 // pred_fallthru
      _
    // Predicated region
    $region314: #{forward.1} parent=1 // pred_check
      _
    $region315: #{forward.1} parent=1 // pred_check_branch
      %726 = sbr.rel (0) target = $region317
    $region316: #{forward.1} parent=1 // pred_region
      %728 = dma.done [#allocation54], 16
    $region317: #{forward.1} parent=1 // pred_fallthru
      _
    // Predicated region
    $region318: #{forward.1} parent=1 // pred_check
      _
    $region319: #{forward.1} parent=1 // pred_check_branch
      %730 = sbr.rel (0) target = $region321
    $region320: #{forward.1} parent=1 // pred_region
      %732 = dma.done [#allocation57], 1024
    $region321: #{forward.1} parent=1 // pred_fallthru
      _
    // Predicated region
    $region322: #{forward.1} parent=1 // pred_check
      _
    $region323: #{forward.1} parent=1 // pred_check_branch
      %734 = sbr.rel (0) target = $region325
    $region324: #{forward.1} parent=1 // pred_region
      %736 = dma.done [#allocation57], 512
    $region325: #{forward.1} parent=1 // pred_fallthru
      _
    // Predicated region
    $region326: #{forward.1} parent=1 // pred_check
      _
    $region327: #{forward.1} parent=1 // pred_check_branch
      %738 = sbr.rel (0) target = $region329
    $region328: #{forward.1} parent=1 // pred_region
      %740 = dma.done [#allocation60], 16
    $region329: #{forward.1} parent=1 // pred_fallthru
      _
    %v742 = vld [vmem:[%s1] sm:$0xff]
    %v743 = vld [vmem:[%s1 + $0x8] sm:$0xff]
    %v744 = vld [vmem:[%s1 + $0x10] sm:$0xff]
    %v745 = vld [vmem:[%s1 + $0x18] sm:$0xff]
    %v746 = vpack.c.bf16 %v743, %v742
    %v747 = vpack.c.bf16 %v745, %v744
    %v748 = vld [vmem:[#allocation2] sm:$0xff]
    %v749 = vld [vmem:[#allocation2 + $0x8] sm:$0xf]
    %v750 = vld [vmem:[#allocation2 + $0xc] sm:$0xff]
    %v751 = vld [vmem:[#allocation2 + $0x14] sm:$0xf]
    %v752 = vld [vmem:[#allocation2 + $0x18] sm:$0xff]
    %v753 = vld [vmem:[#allocation2 + $0x20] sm:$0xf]
    %v754 = vld [vmem:[#allocation2 + $0x24] sm:$0xff]
    %v755 = vld [vmem:[#allocation2 + $0x2c] sm:$0xf]
    %v756 = vld [vmem:[#allocation2 + $0x30] sm:$0xff]
    %v757 = vld [vmem:[#allocation2 + $0x38] sm:$0xf]
    %v758 = vld [vmem:[#allocation2 + $0x3c] sm:$0xff]
    %v759 = vld [vmem:[#allocation2 + $0x44] sm:$0xf]
    %v772 = vunpack.c.l.b16 %v748
    %v773 = vunpack.c.h.b16 %v748
    %v774 = vunpack.c.l.b16 %v749
    %v775 = vunpack.c.l.b16 %v750
    %v776 = vunpack.c.h.b16 %v750
    %v777 = vunpack.c.l.b16 %v751
    %v778 = vunpack.c.l.b16 %v752
    %v779 = vunpack.c.h.b16 %v752
    %v780 = vunpack.c.l.b16 %v753
    %v781 = vunpack.c.l.b16 %v754
    %v782 = vunpack.c.h.b16 %v754
    %v783 = vunpack.c.l.b16 %v755
    %v784 = vunpack.c.l.b16 %v756
    %v785 = vunpack.c.h.b16 %v756
    %v786 = vunpack.c.l.b16 %v757
    %v787 = vunpack.c.l.b16 %v758
    %v788 = vunpack.c.h.b16 %v758
    %v789 = vunpack.c.l.b16 %v759
    %v790 = vpack.c.b16 %v775, %v772
    %v791 = vpack.c.b16 %v776, %v773
    %v792 = vpack.c.b16 %v777, %v774
    %v793 = vpack.c.b16 %v781, %v778
    %v794 = vpack.c.b16 %v782, %v779
    %v795 = vpack.c.b16 %v783, %v780
    %v796 = vpack.c.b16 %v787, %v784
    %v797 = vpack.c.b16 %v788, %v785
    %v798 = vpack.c.b16 %v789, %v786
    %vm808 = vcmask 392192
    %v810 = vsel %vm808, %v746, 0
    %v813 = vsel %vm808, %v747, 0
    %815 = vmatpush.bf16.msra.mxu0 0
    %816 = vmatpush.bf16.msra.mxu0 0
    %817 = vmatpush.bf16.msra.mxu0 0
    %818 = vmatpush.bf16.msra.mxu0 0
    %819 = vmatpush.bf16.msra.mxu0 0
    %820 = vmatpush.bf16.msra.mxu0 %v796
    %821 = vmatpush.bf16.msra.mxu0 %v793
    %822 = vmatpush.bf16.msra.mxu0 %v790
    %823 = vmatmul.bf16.gmra.mxu0 %v810
    %v824 = vpop.f32.mrf.mxu0
    %v825 = vadd.f32 0.0, %v824
    %v826 = vpop.f32.mrf.mxu0
    %v827 = vadd.f32 0.0, %v826
    %828 = vmatmul.bf16.gmra.mxu0 %v813
    %v829 = vpop.f32.mrf.mxu0
    %v830 = vadd.f32 0.0, %v829
    %v831 = vpop.f32.mrf.mxu0
    %v832 = vadd.f32 0.0, %v831
    %833 = vdwg.mxu0
    %834 = vmatpush.bf16.msra.mxu0 0
    %835 = vmatpush.bf16.msra.mxu0 0
    %836 = vmatpush.bf16.msra.mxu0 0
    %837 = vmatpush.bf16.msra.mxu0 0
    %838 = vmatpush.bf16.msra.mxu0 0
    %839 = vmatpush.bf16.msra.mxu0 %v797
    %840 = vmatpush.bf16.msra.mxu0 %v794
    %841 = vmatpush.bf16.msra.mxu0 %v791
    %842 = vmatmul.bf16.gmra.mxu0 %v810
    %v843 = vpop.f32.mrf.mxu0
    %v844 = vadd.f32 0.0, %v843
    %v845 = vpop.f32.mrf.mxu0
    %v846 = vadd.f32 0.0, %v845
    %847 = vmatmul.bf16.gmra.mxu0 %v813
    %v848 = vpop.f32.mrf.mxu0
    %v849 = vadd.f32 0.0, %v848
    %v850 = vpop.f32.mrf.mxu0
    %v851 = vadd.f32 0.0, %v850
    %852 = vdwg.mxu0
    %853 = vmatpush.bf16.msra.mxu0 0
    %854 = vmatpush.bf16.msra.mxu0 0
    %855 = vmatpush.bf16.msra.mxu0 0
    %856 = vmatpush.bf16.msra.mxu0 0
    %857 = vmatpush.bf16.msra.mxu0 0
    %858 = vmatpush.bf16.msra.mxu0 %v798
    %859 = vmatpush.bf16.msra.mxu0 %v795
    %860 = vmatpush.bf16.msra.mxu0 %v792
    %861 = vmatmul.bf16.gmra.mxu0 %v810
    %v862 = vpop.f32.mrf.mxu0
    %v863 = vadd.f32 0.0, %v862
    %v864 = vpop.f32.mrf.mxu0
    %v865 = vadd.f32 0.0, %v864
    %866 = vmatmul.bf16.gmra.mxu0 %v813
    %v867 = vpop.f32.mrf.mxu0
    %v868 = vadd.f32 0.0, %v867
    %v869 = vpop.f32.mrf.mxu0
    %v870 = vadd.f32 0.0, %v869
    %871 = vdwg.mxu0
    %v872 = vld [vmem:[%s5] sm:$0x1]
    %v873 = vlaneseq
    %v874 = vshrl.u32 %v873, 7
    %v875 = vadd.s32 %v874, 8
    %v876 = vadd.s32 %v874, 16
    %v877 = vadd.s32 %v874, 24
    %vm878 = vcmp.lt.s32.totalorder %v874, 0
    %v879 = vsub.s32 0, %v874
    %v880 = vsel %vm878, %v879, %v874
    %v881 = vshrl.u32 %v880, 4
    %v882 = vand.u32 %v880, 15
    %v883 = vsub.s32 0, %v882
    %v884 = vsel %vm878, %v883, %v882
    %vm885 = vcmp.lt.s32.totalorder %v875, 0
    %v886 = vsub.s32 0, %v875
    %v887 = vsel %vm885, %v886, %v875
    %v888 = vshrl.u32 %v887, 4
    %v889 = vand.u32 %v887, 15
    %v890 = vsub.s32 0, %v889
    %v891 = vsel %vm885, %v890, %v889
    %vm892 = vcmp.lt.s32.totalorder %v876, 0
    %v893 = vsub.s32 0, %v876
    %v894 = vsel %vm892, %v893, %v876
    %v895 = vshrl.u32 %v894, 4
    %v896 = vand.u32 %v894, 15
    %v897 = vsub.s32 0, %v896
    %v898 = vsel %vm892, %v897, %v896
    %vm899 = vcmp.lt.s32.totalorder %v877, 0
    %v900 = vsub.s32 0, %v877
    %v901 = vsel %vm899, %v900, %v877
    %v902 = vshrl.u32 %v901, 4
    %v903 = vand.u32 %v901, 15
    %v904 = vsub.s32 0, %v903
    %v905 = vsel %vm899, %v904, %v903
    %vm906 = vcmp.ne.s32.totalorder %v884, 0
    %vm907 = vcmp.ne.s32.totalorder %v891, 0
    %vm908 = vcmp.ne.s32.totalorder %v898, 0
    %vm909 = vcmp.ne.s32.totalorder %v905, 0
    %vm910 = vcmp.lt.s32.totalorder %v884, 0
    %vm911 = vcmp.lt.s32.totalorder %v891, 0
    %vm912 = vcmp.lt.s32.totalorder %v898, 0
    %vm913 = vcmp.lt.s32.totalorder %v905, 0
    %vm914 = vmand %vm910, %vm906
    %vm915 = vmand %vm911, %vm907
    %vm916 = vmand %vm912, %vm908
    %vm917 = vmand %vm913, %vm909
    %v918 = vadd.s32 %v884, 16
    %v919 = vadd.s32 %v891, 16
    %v920 = vadd.s32 %v898, 16
    %v921 = vadd.s32 %v905, 16
    %v922 = vsel %vm914, %v918, %v884
    %v923 = vsel %vm915, %v919, %v891
    %v924 = vsel %vm916, %v920, %v898
    %v925 = vsel %vm917, %v921, %v905
    %vm926 = vcmp.ne.s32.totalorder %v922, 0
    %vm927 = vcmp.ne.s32.totalorder %v923, 0
    %vm928 = vcmp.ne.s32.totalorder %v924, 0
    %vm929 = vcmp.ne.s32.totalorder %v925, 0
    %v930 = vsel %vm926, 1.0, 0.0
    %v931 = vsel %vm927, 1.0, 0.0
    %v932 = vsel %vm928, 1.0, 0.0
    %v933 = vsel %vm929, 1.0, 0.0
    %vm934 = vcmp.ne.s32.totalorder %v922, 15
    %vm935 = vcmp.ne.s32.totalorder %v923, 15
    %vm936 = vcmp.ne.s32.totalorder %v924, 15
    %vm937 = vcmp.ne.s32.totalorder %v925, 15
    %v938 = vsel %vm934, 1.0, 0.0
    %v939 = vsel %vm935, 1.0, 0.0
    %v940 = vsel %vm936, 1.0, 0.0
    %v941 = vsel %vm937, 1.0, 0.0
    %v942 = vrot.slane %v825, 7
    %v943 = vrot.slane %v827, 7
    %v944 = vrot.slane %v830, 7
    %v945 = vrot.slane %v832, 7
    %vm946 = vcmp.lt.s32.totalorder %v874, 1
    %v947 = vsel %vm946, %v944, %v945
    %v948 = vsel %vm946, %v943, %v944
    %v949 = vsel %vm946, %v942, %v943
    %v950 = vsel %vm946, %v945, %v942
    %v951 = vmul.f32 %v930, %v950
    %v952 = vmul.f32 %v931, %v949
    %v953 = vmul.f32 %v932, %v948
    %v954 = vmul.f32 %v933, %v947
    %v955 = vadd.f32 %v844, %v951
    %v956 = vadd.f32 %v846, %v952
    %v957 = vadd.f32 %v849, %v953
    %v958 = vadd.f32 %v851, %v954
    %v959 = vrot.slane %v863, 1
    %v960 = vrot.slane %v865, 1
    %v961 = vrot.slane %v868, 1
    %v962 = vrot.slane %v870, 1
    %vm963 = vcmp.lt.s32.totalorder %v874, 7
    %v964 = vsel %vm963, %v961, %v962
    %v965 = vsel %vm963, %v960, %v961
    %v966 = vsel %vm963, %v959, %v960
    %v967 = vsel %vm963, %v962, %v959
    %v968 = vmul.f32 %v938, %v966
    %v969 = vmul.f32 %v939, %v965
    %v970 = vmul.f32 %v940, %v964
    %v971 = vmul.f32 %v941, %v967
    %v972 = vadd.f32 %v955, %v968
    %v973 = vadd.f32 %v956, %v969
    %v974 = vadd.f32 %v957, %v970
    %v975 = vadd.f32 %v958, %v971
    %v977 = vperm.slane %v872, 0
    %v979 = vadd.f32 %v972, %v977
    %v980 = vadd.f32 %v973, %v977
    %v981 = vadd.f32 %v974, %v977
    %v982 = vadd.f32 %v975, %v977
    %v983 = vmax.f32 %v979, 0.0
    %v984 = vmax.f32 %v980, 0.0
    %v985 = vmax.f32 %v981, 0.0
    %v986 = vmax.f32 %v982, 0.0
    %v987 = vpack.c.bf16 %v984, %v983
    %v988 = vpack.c.bf16 %v986, %v985
    %v989 = vld [vmem:[%s15] sm:$0xff]
    %v990 = vld [vmem:[%s15 + $0x8] sm:$0xff]
    %v991 = vld [vmem:[%s15 + $0x10] sm:$0xff]
    %v992 = vld [vmem:[%s15 + $0x18] sm:$0xff]
    %v993 = vld [vmem:[%s15 + $0x20] sm:$0xff]
    %v994 = vld [vmem:[%s15 + $0x28] sm:$0xff]
    %v995 = vld [vmem:[%s15 + $0x30] sm:$0xff]
    %v996 = vld [vmem:[%s15 + $0x38] sm:$0xff]
    %v997 = vld [vmem:[%s15 + $0x40] sm:$0xff]
    %v998 = vld [vmem:[%s15 + $0x48] sm:$0xff]
    %v999 = vld [vmem:[%s15 + $0x50] sm:$0xff]
    %v1000 = vld [vmem:[%s15 + $0x58] sm:$0xff]
    %v1001 = vld [vmem:[%s15 + $0x60] sm:$0xff]
    %v1002 = vld [vmem:[%s15 + $0x68] sm:$0xff]
    %v1003 = vld [vmem:[%s15 + $0x70] sm:$0xff]
    %v1004 = vld [vmem:[%s15 + $0x78] sm:$0xff]
    %v1005 = vld [vmem:[%s15 + $0x80] sm:$0xff]
    %v1006 = vld [vmem:[%s15 + $0x88] sm:$0xff]
    %v1007 = vld [vmem:[%s15 + $0x90] sm:$0xff]
    %v1008 = vld [vmem:[%s15 + $0x98] sm:$0xff]
    %v1009 = vld [vmem:[%s15 + $0xa0] sm:$0xff]
    %v1010 = vld [vmem:[%s15 + $0xa8] sm:$0xff]
    %v1011 = vld [vmem:[%s15 + $0xb0] sm:$0xff]
    %v1012 = vld [vmem:[%s15 + $0xb8] sm:$0xff]
    %v1013 = vld [vmem:[%s15 + $0xc0] sm:$0xff]
    %v1014 = vld [vmem:[%s15 + $0xc8] sm:$0xff]
    %v1015 = vld [vmem:[%s15 + $0xd0] sm:$0xff]
    %v1016 = vld [vmem:[%s15 + $0xd8] sm:$0xff]
    %v1017 = vld [vmem:[%s15 + $0xe0] sm:$0xff]
    %v1018 = vld [vmem:[%s15 + $0xe8] sm:$0xff]
    %v1019 = vld [vmem:[%s15 + $0xf0] sm:$0xff]
    %v1020 = vld [vmem:[%s15 + $0xf8] sm:$0xff]
    %v1021 = vld [vmem:[%s15 + $0x100] sm:$0xff]
    %v1022 = vld [vmem:[%s15 + $0x108] sm:$0xff]
    %v1023 = vld [vmem:[%s15 + $0x110] sm:$0xff]
    %v1024 = vld [vmem:[%s15 + $0x118] sm:$0xff]
    %v1025 = vld [vmem:[%s15 + $0x120] sm:$0xff]
    %v1026 = vld [vmem:[%s15 + $0x128] sm:$0xff]
    %v1027 = vld [vmem:[%s15 + $0x130] sm:$0xff]
    %v1028 = vld [vmem:[%s15 + $0x138] sm:$0xff]
    %v1029 = vld [vmem:[%s15 + $0x140] sm:$0xff]
    %v1030 = vld [vmem:[%s15 + $0x148] sm:$0xff]
    %v1031 = vld [vmem:[%s15 + $0x150] sm:$0xff]
    %v1032 = vld [vmem:[%s15 + $0x158] sm:$0xff]
    %v1033 = vld [vmem:[%s15 + $0x160] sm:$0xff]
    %v1034 = vld [vmem:[%s15 + $0x168] sm:$0xff]
    %v1035 = vld [vmem:[%s15 + $0x170] sm:$0xff]
    %v1036 = vld [vmem:[%s15 + $0x178] sm:$0xff]
    %v1085 = vunpack.c.l.b16 %v989
    %v1086 = vunpack.c.h.b16 %v989
    %v1087 = vunpack.c.l.b16 %v990
    %v1088 = vunpack.c.h.b16 %v990
    %v1089 = vunpack.c.l.b16 %v991
    %v1090 = vunpack.c.h.b16 %v991
    %v1091 = vunpack.c.l.b16 %v992
    %v1092 = vunpack.c.h.b16 %v992
    %v1093 = vunpack.c.l.b16 %v993
    %v1094 = vunpack.c.h.b16 %v993
    %v1095 = vunpack.c.l.b16 %v994
    %v1096 = vunpack.c.h.b16 %v994
    %v1097 = vunpack.c.l.b16 %v995
    %v1098 = vunpack.c.h.b16 %v995
    %v1099 = vunpack.c.l.b16 %v996
    %v1100 = vunpack.c.h.b16 %v996
    %v1101 = vunpack.c.l.b16 %v997
    %v1102 = vunpack.c.h.b16 %v997
    %v1103 = vunpack.c.l.b16 %v998
    %v1104 = vunpack.c.h.b16 %v998
    %v1105 = vunpack.c.l.b16 %v999
    %v1106 = vunpack.c.h.b16 %v999
    %v1107 = vunpack.c.l.b16 %v1000
    %v1108 = vunpack.c.h.b16 %v1000
    %v1109 = vunpack.c.l.b16 %v1001
    %v1110 = vunpack.c.h.b16 %v1001
    %v1111 = vunpack.c.l.b16 %v1002
    %v1112 = vunpack.c.h.b16 %v1002
    %v1113 = vunpack.c.l.b16 %v1003
    %v1114 = vunpack.c.h.b16 %v1003
    %v1115 = vunpack.c.l.b16 %v1004
    %v1116 = vunpack.c.h.b16 %v1004
    %v1117 = vunpack.c.l.b16 %v1005
    %v1118 = vunpack.c.h.b16 %v1005
    %v1119 = vunpack.c.l.b16 %v1006
    %v1120 = vunpack.c.h.b16 %v1006
    %v1121 = vunpack.c.l.b16 %v1007
    %v1122 = vunpack.c.h.b16 %v1007
    %v1123 = vunpack.c.l.b16 %v1008
    %v1124 = vunpack.c.h.b16 %v1008
    %v1125 = vunpack.c.l.b16 %v1009
    %v1126 = vunpack.c.h.b16 %v1009
    %v1127 = vunpack.c.l.b16 %v1010
    %v1128 = vunpack.c.h.b16 %v1010
    %v1129 = vunpack.c.l.b16 %v1011
    %v1130 = vunpack.c.h.b16 %v1011
    %v1131 = vunpack.c.l.b16 %v1012
    %v1132 = vunpack.c.h.b16 %v1012
    %v1133 = vunpack.c.l.b16 %v1013
    %v1134 = vunpack.c.h.b16 %v1013
    %v1135 = vunpack.c.l.b16 %v1014
    %v1136 = vunpack.c.h.b16 %v1014
    %v1137 = vunpack.c.l.b16 %v1015
    %v1138 = vunpack.c.h.b16 %v1015
    %v1139 = vunpack.c.l.b16 %v1016
    %v1140 = vunpack.c.h.b16 %v1016
    %v1141 = vunpack.c.l.b16 %v1017
    %v1142 = vunpack.c.h.b16 %v1017
    %v1143 = vunpack.c.l.b16 %v1018
    %v1144 = vunpack.c.h.b16 %v1018
    %v1145 = vunpack.c.l.b16 %v1019
    %v1146 = vunpack.c.h.b16 %v1019
    %v1147 = vunpack.c.l.b16 %v1020
    %v1148 = vunpack.c.h.b16 %v1020
    %v1149 = vunpack.c.l.b16 %v1021
    %v1150 = vunpack.c.h.b16 %v1021
    %v1151 = vunpack.c.l.b16 %v1022
    %v1152 = vunpack.c.h.b16 %v1022
    %v1153 = vunpack.c.l.b16 %v1023
    %v1154 = vunpack.c.h.b16 %v1023
    %v1155 = vunpack.c.l.b16 %v1024
    %v1156 = vunpack.c.h.b16 %v1024
    %v1157 = vunpack.c.l.b16 %v1025
    %v1158 = vunpack.c.h.b16 %v1025
    %v1159 = vunpack.c.l.b16 %v1026
    %v1160 = vunpack.c.h.b16 %v1026
    %v1161 = vunpack.c.l.b16 %v1027
    %v1162 = vunpack.c.h.b16 %v1027
    %v1163 = vunpack.c.l.b16 %v1028
    %v1164 = vunpack.c.h.b16 %v1028
    %v1165 = vunpack.c.l.b16 %v1029
    %v1166 = vunpack.c.h.b16 %v1029
    %v1167 = vunpack.c.l.b16 %v1030
    %v1168 = vunpack.c.h.b16 %v1030
    %v1169 = vunpack.c.l.b16 %v1031
    %v1170 = vunpack.c.h.b16 %v1031
    %v1171 = vunpack.c.l.b16 %v1032
    %v1172 = vunpack.c.h.b16 %v1032
    %v1173 = vunpack.c.l.b16 %v1033
    %v1174 = vunpack.c.h.b16 %v1033
    %v1175 = vunpack.c.l.b16 %v1034
    %v1176 = vunpack.c.h.b16 %v1034
    %v1177 = vunpack.c.l.b16 %v1035
    %v1178 = vunpack.c.h.b16 %v1035
    %v1179 = vunpack.c.l.b16 %v1036
    %v1180 = vunpack.c.h.b16 %v1036
    %v1181 = vpack.c.b16 %v1091, %v1085
    %v1182 = vpack.c.b16 %v1092, %v1086
    %v1183 = vpack.c.b16 %v1093, %v1087
    %v1184 = vpack.c.b16 %v1094, %v1088
    %v1185 = vpack.c.b16 %v1095, %v1089
    %v1186 = vpack.c.b16 %v1096, %v1090
    %v1187 = vpack.c.b16 %v1103, %v1097
    %v1188 = vpack.c.b16 %v1104, %v1098
    %v1189 = vpack.c.b16 %v1105, %v1099
    %v1190 = vpack.c.b16 %v1106, %v1100
    %v1191 = vpack.c.b16 %v1107, %v1101
    %v1192 = vpack.c.b16 %v1108, %v1102
    %v1193 = vpack.c.b16 %v1115, %v1109
    %v1194 = vpack.c.b16 %v1116, %v1110
    %v1195 = vpack.c.b16 %v1117, %v1111
    %v1196 = vpack.c.b16 %v1118, %v1112
    %v1197 = vpack.c.b16 %v1119, %v1113
    %v1198 = vpack.c.b16 %v1120, %v1114
    %v1199 = vpack.c.b16 %v1127, %v1121
    %v1200 = vpack.c.b16 %v1128, %v1122
    %v1201 = vpack.c.b16 %v1129, %v1123
    %v1202 = vpack.c.b16 %v1130, %v1124
    %v1203 = vpack.c.b16 %v1131, %v1125
    %v1204 = vpack.c.b16 %v1132, %v1126
    %v1205 = vpack.c.b16 %v1139, %v1133
    %v1206 = vpack.c.b16 %v1140, %v1134
    %v1207 = vpack.c.b16 %v1141, %v1135
    %v1208 = vpack.c.b16 %v1142, %v1136
    %v1209 = vpack.c.b16 %v1143, %v1137
    %v1210 = vpack.c.b16 %v1144, %v1138
    %v1211 = vpack.c.b16 %v1151, %v1145
    %v1212 = vpack.c.b16 %v1152, %v1146
    %v1213 = vpack.c.b16 %v1153, %v1147
    %v1214 = vpack.c.b16 %v1154, %v1148
    %v1215 = vpack.c.b16 %v1155, %v1149
    %v1216 = vpack.c.b16 %v1156, %v1150
    %v1217 = vpack.c.b16 %v1163, %v1157
    %v1218 = vpack.c.b16 %v1164, %v1158
    %v1219 = vpack.c.b16 %v1165, %v1159
    %v1220 = vpack.c.b16 %v1166, %v1160
    %v1221 = vpack.c.b16 %v1167, %v1161
    %v1222 = vpack.c.b16 %v1168, %v1162
    %v1223 = vpack.c.b16 %v1175, %v1169
    %v1224 = vpack.c.b16 %v1176, %v1170
    %v1225 = vpack.c.b16 %v1177, %v1171
    %v1226 = vpack.c.b16 %v1178, %v1172
    %v1227 = vpack.c.b16 %v1179, %v1173
    %v1228 = vpack.c.b16 %v1180, %v1174
    %1277 = vmatpush.bf16.msra.mxu0 %v1223
    %1278 = vmatpush.bf16.msra.mxu0 %v1217
    %1279 = vmatpush.bf16.msra.mxu0 %v1211
    %1280 = vmatpush.bf16.msra.mxu0 %v1205
    %1281 = vmatpush.bf16.msra.mxu0 %v1199
    %1282 = vmatpush.bf16.msra.mxu0 %v1193
    %1283 = vmatpush.bf16.msra.mxu0 %v1187
    %1284 = vmatpush.bf16.msra.mxu0 %v1181
    %1285 = vmatmul.bf16.gmra.mxu0 %v987
    %v1286 = vpop.f32.mrf.mxu0
    %v1287 = vadd.f32 0.0, %v1286
    %v1288 = vpop.f32.mrf.mxu0
    %v1289 = vadd.f32 0.0, %v1288
    %1290 = vmatmul.bf16.gmra.mxu0 %v988
    %v1291 = vpop.f32.mrf.mxu0
    %v1292 = vadd.f32 0.0, %v1291
    %v1293 = vpop.f32.mrf.mxu0
    %v1294 = vadd.f32 0.0, %v1293
    %1295 = vdwg.mxu0
    %1296 = vmatpush.bf16.msra.mxu0 %v1224
    %1297 = vmatpush.bf16.msra.mxu0 %v1218
    %1298 = vmatpush.bf16.msra.mxu0 %v1212
    %1299 = vmatpush.bf16.msra.mxu0 %v1206
    %1300 = vmatpush.bf16.msra.mxu0 %v1200
    %1301 = vmatpush.bf16.msra.mxu0 %v1194
    %1302 = vmatpush.bf16.msra.mxu0 %v1188
    %1303 = vmatpush.bf16.msra.mxu0 %v1182
    %1304 = vmatmul.bf16.gmra.mxu0 %v987
    %v1305 = vpop.f32.mrf.mxu0
    %v1306 = vadd.f32 0.0, %v1305
    %v1307 = vpop.f32.mrf.mxu0
    %v1308 = vadd.f32 0.0, %v1307
    %1309 = vmatmul.bf16.gmra.mxu0 %v988
    %v1310 = vpop.f32.mrf.mxu0
    %v1311 = vadd.f32 0.0, %v1310
    %v1312 = vpop.f32.mrf.mxu0
    %v1313 = vadd.f32 0.0, %v1312
    %1314 = vdwg.mxu0
    %1315 = vmatpush.bf16.msra.mxu0 %v1225
    %1316 = vmatpush.bf16.msra.mxu0 %v1219
    %1317 = vmatpush.bf16.msra.mxu0 %v1213
    %1318 = vmatpush.bf16.msra.mxu0 %v1207
    %1319 = vmatpush.bf16.msra.mxu0 %v1201
    %1320 = vmatpush.bf16.msra.mxu0 %v1195
    %1321 = vmatpush.bf16.msra.mxu0 %v1189
    %1322 = vmatpush.bf16.msra.mxu0 %v1183
    %1323 = vmatmul.bf16.gmra.mxu0 %v987
    %v1324 = vpop.f32.mrf.mxu0
    %v1325 = vadd.f32 0.0, %v1324
    %v1326 = vpop.f32.mrf.mxu0
    %v1327 = vadd.f32 0.0, %v1326
    %1328 = vmatmul.bf16.gmra.mxu0 %v988
    %v1329 = vpop.f32.mrf.mxu0
    %v1330 = vadd.f32 0.0, %v1329
    %v1331 = vpop.f32.mrf.mxu0
    %v1332 = vadd.f32 0.0, %v1331
    %1333 = vdwg.mxu0
    %1334 = vmatpush.bf16.msra.mxu0 %v1226
    %1335 = vmatpush.bf16.msra.mxu0 %v1220
    %1336 = vmatpush.bf16.msra.mxu0 %v1214
    %1337 = vmatpush.bf16.msra.mxu0 %v1208
    %1338 = vmatpush.bf16.msra.mxu0 %v1202
    %1339 = vmatpush.bf16.msra.mxu0 %v1196
    %1340 = vmatpush.bf16.msra.mxu0 %v1190
    %1341 = vmatpush.bf16.msra.mxu0 %v1184
    %1342 = vmatmul.bf16.gmra.mxu0 %v987
    %v1343 = vpop.f32.mrf.mxu0
    %v1344 = vadd.f32 0.0, %v1343
    %v1345 = vpop.f32.mrf.mxu0
    %v1346 = vadd.f32 0.0, %v1345
    %1347 = vmatmul.bf16.gmra.mxu0 %v988
    %v1348 = vpop.f32.mrf.mxu0
    %v1349 = vadd.f32 0.0, %v1348
    %v1350 = vpop.f32.mrf.mxu0
    %v1351 = vadd.f32 0.0, %v1350
    %1352 = vdwg.mxu0
    %1353 = vmatpush.bf16.msra.mxu0 %v1227
    %1354 = vmatpush.bf16.msra.mxu0 %v1221
    %1355 = vmatpush.bf16.msra.mxu0 %v1215
    %1356 = vmatpush.bf16.msra.mxu0 %v1209
    %1357 = vmatpush.bf16.msra.mxu0 %v1203
    %1358 = vmatpush.bf16.msra.mxu0 %v1197
    %1359 = vmatpush.bf16.msra.mxu0 %v1191
    %1360 = vmatpush.bf16.msra.mxu0 %v1185
    %1361 = vmatmul.bf16.gmra.mxu0 %v987
    %v1362 = vpop.f32.mrf.mxu0
    %v1363 = vadd.f32 0.0, %v1362
    %v1364 = vpop.f32.mrf.mxu0
    %v1365 = vadd.f32 0.0, %v1364
    %1366 = vmatmul.bf16.gmra.mxu0 %v988
    %v1367 = vpop.f32.mrf.mxu0
    %v1368 = vadd.f32 0.0, %v1367
    %v1369 = vpop.f32.mrf.mxu0
    %v1370 = vadd.f32 0.0, %v1369
    %1371 = vdwg.mxu0
    %1372 = vmatpush.bf16.msra.mxu0 %v1228
    %1373 = vmatpush.bf16.msra.mxu0 %v1222
    %1374 = vmatpush.bf16.msra.mxu0 %v1216
    %1375 = vmatpush.bf16.msra.mxu0 %v1210
    %1376 = vmatpush.bf16.msra.mxu0 %v1204
    %1377 = vmatpush.bf16.msra.mxu0 %v1198
    %1378 = vmatpush.bf16.msra.mxu0 %v1192
    %1379 = vmatpush.bf16.msra.mxu0 %v1186
    %1380 = vmatmul.bf16.gmra.mxu0 %v987
    %v1381 = vpop.f32.mrf.mxu0
    %v1382 = vadd.f32 0.0, %v1381
    %v1383 = vpop.f32.mrf.mxu0
    %v1384 = vadd.f32 0.0, %v1383
    %1385 = vmatmul.bf16.gmra.mxu0 %v988
    %v1386 = vpop.f32.mrf.mxu0
    %v1387 = vadd.f32 0.0, %v1386
    %v1388 = vpop.f32.mrf.mxu0
    %v1389 = vadd.f32 0.0, %v1388
    %1390 = vdwg.mxu0
    %v1391 = vld [vmem:[%s7] sm:$0x1]
    %v1392 = vrot.slane %v1287, 7
    %v1393 = vrot.slane %v1289, 7
    %v1394 = vrot.slane %v1292, 7
    %v1395 = vrot.slane %v1294, 7
    %v1396 = vsel %vm946, %v1394, %v1395
    %v1397 = vsel %vm946, %v1393, %v1394
    %v1398 = vsel %vm946, %v1392, %v1393
    %v1399 = vsel %vm946, %v1395, %v1392
    %v1400 = vmul.f32 %v930, %v1399
    %v1401 = vmul.f32 %v931, %v1398
    %v1402 = vmul.f32 %v932, %v1397
    %v1403 = vmul.f32 %v933, %v1396
    %v1404 = vadd.f32 %v1306, %v1400
    %v1405 = vadd.f32 %v1308, %v1401
    %v1406 = vadd.f32 %v1311, %v1402
    %v1407 = vadd.f32 %v1313, %v1403
    %v1408 = vrot.slane %v1325, 1
    %v1409 = vrot.slane %v1327, 1
    %v1410 = vrot.slane %v1330, 1
    %v1411 = vrot.slane %v1332, 1
    %v1412 = vsel %vm963, %v1410, %v1411
    %v1413 = vsel %vm963, %v1409, %v1410
    %v1414 = vsel %vm963, %v1408, %v1409
    %v1415 = vsel %vm963, %v1411, %v1408
    %v1416 = vmul.f32 %v938, %v1414
    %v1417 = vmul.f32 %v939, %v1413
    %v1418 = vmul.f32 %v940, %v1412
    %v1419 = vmul.f32 %v941, %v1415
    %v1420 = vadd.f32 %v1404, %v1416
    %v1421 = vadd.f32 %v1405, %v1417
    %v1422 = vadd.f32 %v1406, %v1418
    %v1423 = vadd.f32 %v1407, %v1419
    %v1425 = vperm.slane %v1391, 0
    %v1427 = vadd.f32 %v1420, %v1425
    %v1428 = vadd.f32 %v1421, %v1425
    %v1429 = vadd.f32 %v1422, %v1425
    %v1430 = vadd.f32 %v1423, %v1425
    %v1431 = vmax.f32 %v1427, 0.0
    %v1432 = vmax.f32 %v1428, 0.0
    %v1433 = vmax.f32 %v1429, 0.0
    %v1434 = vmax.f32 %v1430, 0.0
    %v1435 = vpack.c.bf16 %v1432, %v1431
    %v1436 = vpack.c.bf16 %v1434, %v1433
    %v1437 = vld [vmem:[%s17] sm:$0xf]
    %v1438 = vld [vmem:[%s17 + $0x4] sm:$0xf]
    %v1439 = vld [vmem:[%s17 + $0x8] sm:$0xf]
    %v1440 = vld [vmem:[%s17 + $0xc] sm:$0xf]
    %v1441 = vld [vmem:[%s17 + $0x10] sm:$0xf]
    %v1442 = vld [vmem:[%s17 + $0x14] sm:$0xf]
    %v1443 = vld [vmem:[%s17 + $0x18] sm:$0xf]
    %v1444 = vld [vmem:[%s17 + $0x1c] sm:$0xf]
    %v1445 = vld [vmem:[%s17 + $0x20] sm:$0xf]
    %v1446 = vld [vmem:[%s17 + $0x24] sm:$0xf]
    %v1447 = vld [vmem:[%s17 + $0x28] sm:$0xf]
    %v1448 = vld [vmem:[%s17 + $0x2c] sm:$0xf]
    %v1449 = vld [vmem:[%s17 + $0x30] sm:$0xf]
    %v1450 = vld [vmem:[%s17 + $0x34] sm:$0xf]
    %v1451 = vld [vmem:[%s17 + $0x38] sm:$0xf]
    %v1452 = vld [vmem:[%s17 + $0x3c] sm:$0xf]
    %v1453 = vld [vmem:[%s9] sm:$0x1]
    %v1455 = vperm.slane %v1453, 0
    %v1473 = vunpack.c.l.b16 %v1437
    %v1474 = vunpack.c.l.b16 %v1438
    %v1475 = vunpack.c.l.b16 %v1439
    %v1476 = vunpack.c.l.b16 %v1440
    %v1477 = vunpack.c.l.b16 %v1441
    %v1478 = vunpack.c.l.b16 %v1442
    %v1479 = vunpack.c.l.b16 %v1443
    %v1480 = vunpack.c.l.b16 %v1444
    %v1481 = vunpack.c.l.b16 %v1445
    %v1482 = vunpack.c.l.b16 %v1446
    %v1483 = vunpack.c.l.b16 %v1447
    %v1484 = vunpack.c.l.b16 %v1448
    %v1485 = vunpack.c.l.b16 %v1449
    %v1486 = vunpack.c.l.b16 %v1450
    %v1487 = vunpack.c.l.b16 %v1451
    %v1488 = vunpack.c.l.b16 %v1452
    %v1489 = vpack.c.b16 %v1474, %v1473
    %v1490 = vpack.c.b16 %v1476, %v1475
    %v1491 = vpack.c.b16 %v1478, %v1477
    %v1492 = vpack.c.b16 %v1480, %v1479
    %v1493 = vpack.c.b16 %v1482, %v1481
    %v1494 = vpack.c.b16 %v1484, %v1483
    %v1495 = vpack.c.b16 %v1486, %v1485
    %v1496 = vpack.c.b16 %v1488, %v1487
    %1505 = vmatpush.bf16.msra.mxu0 %v1496
    %1506 = vmatpush.bf16.msra.mxu0 %v1495
    %1507 = vmatpush.bf16.msra.mxu0 %v1494
    %1508 = vmatpush.bf16.msra.mxu0 %v1493
    %1509 = vmatpush.bf16.msra.mxu0 %v1492
    %1510 = vmatpush.bf16.msra.mxu0 %v1491
    %1511 = vmatpush.bf16.msra.mxu0 %v1490
    %1512 = vmatpush.bf16.msra.mxu0 %v1489
    %1513 = vmatmul.bf16.gmra.mxu0 %v1435
    %v1514 = vpop.f32.mrf.mxu0
    %v1515 = vadd.f32 %v1455, %v1514
    %v1516 = vpop.f32.mrf.mxu0
    %v1517 = vadd.f32 %v1455, %v1516
    %1518 = vmatmul.bf16.gmra.mxu0 %v1436
    %v1519 = vpop.f32.mrf.mxu0
    %v1520 = vadd.f32 %v1455, %v1519
    %v1521 = vpop.f32.mrf.mxu0
    %v1522 = vadd.f32 %v1455, %v1521
    %1523 = vdwg.mxu0
    %v1524 = vadd.f32 %v979, %v1515
    %v1525 = vadd.f32 %v980, %v1517
    %v1526 = vadd.f32 %v981, %v1520
    %v1527 = vadd.f32 %v982, %v1522
    %v1528 = vld [vmem:[#allocation5] sm:$0x1]
    %v1529 = vrot.slane %v1344, 7
    %v1530 = vrot.slane %v1346, 7
    %v1531 = vrot.slane %v1349, 7
    %v1532 = vrot.slane %v1351, 7
    %v1533 = vsel %vm946, %v1531, %v1532
    %v1534 = vsel %vm946, %v1530, %v1531
    %v1535 = vsel %vm946, %v1529, %v1530
    %v1536 = vsel %vm946, %v1532, %v1529
    %v1537 = vmul.f32 %v930, %v1536
    %v1538 = vmul.f32 %v931, %v1535
    %v1539 = vmul.f32 %v932, %v1534
    %v1540 = vmul.f32 %v933, %v1533
    %v1541 = vadd.f32 %v1363, %v1537
    %v1542 = vadd.f32 %v1365, %v1538
    %v1543 = vadd.f32 %v1368, %v1539
    %v1544 = vadd.f32 %v1370, %v1540
    %v1545 = vrot.slane %v1382, 1
    %v1546 = vrot.slane %v1384, 1
    %v1547 = vrot.slane %v1387, 1
    %v1548 = vrot.slane %v1389, 1
    %v1549 = vsel %vm963, %v1547, %v1548
    %v1550 = vsel %vm963, %v1546, %v1547
    %v1551 = vsel %vm963, %v1545, %v1546
    %v1552 = vsel %vm963, %v1548, %v1545
    %v1553 = vmul.f32 %v938, %v1551
    %v1554 = vmul.f32 %v939, %v1550
    %v1555 = vmul.f32 %v940, %v1549
    %v1556 = vmul.f32 %v941, %v1552
    %v1557 = vadd.f32 %v1541, %v1553
    %v1558 = vadd.f32 %v1542, %v1554
    %v1559 = vadd.f32 %v1543, %v1555
    %v1560 = vadd.f32 %v1544, %v1556
    %v1562 = vperm.slane %v1528, 0
    %v1564 = vadd.f32 %v1557, %v1562
    %v1565 = vadd.f32 %v1558, %v1562
    %v1566 = vadd.f32 %v1559, %v1562
    %v1567 = vadd.f32 %v1560, %v1562
    %v1568 = vadd.f32 %v1564, %v1427
    %v1569 = vadd.f32 %v1565, %v1428
    %v1570 = vadd.f32 %v1566, %v1429
    %v1571 = vadd.f32 %v1567, %v1430
    %v1572 = vmax.f32 %v1524, 0.0
    %v1573 = vmax.f32 %v1525, 0.0
    %v1574 = vmax.f32 %v1526, 0.0
    %v1575 = vmax.f32 %v1527, 0.0
    %v1576 = vpack.c.bf16 %v1573, %v1572
    %v1577 = vpack.c.bf16 %v1575, %v1574
    %v1578 = vld [vmem:[#allocation8] sm:$0xf]
    %v1579 = vld [vmem:[#allocation8 + $0x4] sm:$0xf]
    %v1580 = vld [vmem:[#allocation8 + $0x8] sm:$0xf]
    %v1581 = vld [vmem:[#allocation8 + $0xc] sm:$0xf]
    %v1582 = vld [vmem:[#allocation8 + $0x10] sm:$0xf]
    %v1583 = vld [vmem:[#allocation8 + $0x14] sm:$0xf]
    %v1584 = vld [vmem:[#allocation8 + $0x18] sm:$0xf]
    %v1585 = vld [vmem:[#allocation8 + $0x1c] sm:$0xf]
    %v1586 = vld [vmem:[#allocation8 + $0x20] sm:$0xf]
    %v1587 = vld [vmem:[#allocation8 + $0x24] sm:$0xf]
    %v1588 = vld [vmem:[#allocation8 + $0x28] sm:$0xf]
    %v1589 = vld [vmem:[#allocation8 + $0x2c] sm:$0xf]
    %v1590 = vld [vmem:[#allocation8 + $0x30] sm:$0xf]
    %v1591 = vld [vmem:[#allocation8 + $0x34] sm:$0xf]
    %v1592 = vld [vmem:[#allocation8 + $0x38] sm:$0xf]
    %v1593 = vld [vmem:[#allocation8 + $0x3c] sm:$0xf]
    %v1594 = vld [vmem:[#allocation7] sm:$0x1]
    %v1596 = vperm.slane %v1594, 0
    %v1614 = vunpack.c.l.b16 %v1578
    %v1615 = vunpack.c.l.b16 %v1579
    %v1616 = vunpack.c.l.b16 %v1580
    %v1617 = vunpack.c.l.b16 %v1581
    %v1618 = vunpack.c.l.b16 %v1582
    %v1619 = vunpack.c.l.b16 %v1583
    %v1620 = vunpack.c.l.b16 %v1584
    %v1621 = vunpack.c.l.b16 %v1585
    %v1622 = vunpack.c.l.b16 %v1586
    %v1623 = vunpack.c.l.b16 %v1587
    %v1624 = vunpack.c.l.b16 %v1588
    %v1625 = vunpack.c.l.b16 %v1589
    %v1626 = vunpack.c.l.b16 %v1590
    %v1627 = vunpack.c.l.b16 %v1591
    %v1628 = vunpack.c.l.b16 %v1592
    %v1629 = vunpack.c.l.b16 %v1593
    %v1630 = vpack.c.b16 %v1615, %v1614
    %v1631 = vpack.c.b16 %v1617, %v1616
    %v1632 = vpack.c.b16 %v1619, %v1618
    %v1633 = vpack.c.b16 %v1621, %v1620
    %v1634 = vpack.c.b16 %v1623, %v1622
    %v1635 = vpack.c.b16 %v1625, %v1624
    %v1636 = vpack.c.b16 %v1627, %v1626
    %v1637 = vpack.c.b16 %v1629, %v1628
    %1646 = vmatpush.bf16.msra.mxu0 %v1637
    %1647 = vmatpush.bf16.msra.mxu0 %v1636
    %1648 = vmatpush.bf16.msra.mxu0 %v1635
    %1649 = vmatpush.bf16.msra.mxu0 %v1634
    %1650 = vmatpush.bf16.msra.mxu0 %v1633
    %1651 = vmatpush.bf16.msra.mxu0 %v1632
    %1652 = vmatpush.bf16.msra.mxu0 %v1631
    %1653 = vmatpush.bf16.msra.mxu0 %v1630
    %1654 = vmatmul.bf16.gmra.mxu0 %v1576
    %v1655 = vpop.f32.mrf.mxu0
    %v1656 = vadd.f32 %v1596, %v1655
    %v1657 = vpop.f32.mrf.mxu0
    %v1658 = vadd.f32 %v1596, %v1657
    %1659 = vmatmul.bf16.gmra.mxu0 %v1577
    %v1660 = vpop.f32.mrf.mxu0
    %v1661 = vadd.f32 %v1596, %v1660
    %v1662 = vpop.f32.mrf.mxu0
    %v1663 = vadd.f32 %v1596, %v1662
    %1664 = vdwg.mxu0
    %v1665 = vadd.f32 %v1568, %v1656
    %v1666 = vadd.f32 %v1569, %v1658
    %v1667 = vadd.f32 %v1570, %v1661
    %v1668 = vadd.f32 %v1571, %v1663
    %v1669 = vmax.f32 %v1665, 0.0
    %v1670 = vmax.f32 %v1666, 0.0
    %v1671 = vmax.f32 %v1667, 0.0
    %v1672 = vmax.f32 %v1668, 0.0
    %v1673 = vpack.c.bf16 %v1670, %v1669
    %v1674 = vpack.c.bf16 %v1672, %v1671
    %v1675 = vld [vmem:[#allocation10] sm:$0xff]
    %v1676 = vld [vmem:[#allocation10 + $0x8] sm:$0xf]
    %v1677 = vld [vmem:[#allocation10 + $0xc] sm:$0xff]
    %v1678 = vld [vmem:[#allocation10 + $0x14] sm:$0xf]
    %v1679 = vld [vmem:[#allocation10 + $0x18] sm:$0xff]
    %v1680 = vld [vmem:[#allocation10 + $0x20] sm:$0xf]
    %v1681 = vld [vmem:[#allocation10 + $0x24] sm:$0xff]
    %v1682 = vld [vmem:[#allocation10 + $0x2c] sm:$0xf]
    %v1683 = vld [vmem:[#allocation10 + $0x30] sm:$0xff]
    %v1684 = vld [vmem:[#allocation10 + $0x38] sm:$0xf]
    %v1685 = vld [vmem:[#allocation10 + $0x3c] sm:$0xff]
    %v1686 = vld [vmem:[#allocation10 + $0x44] sm:$0xf]
    %v1687 = vld [vmem:[#allocation10 + $0x48] sm:$0xff]
    %v1688 = vld [vmem:[#allocation10 + $0x50] sm:$0xf]
    %v1689 = vld [vmem:[#allocation10 + $0x54] sm:$0xff]
    %v1690 = vld [vmem:[#allocation10 + $0x5c] sm:$0xf]
    %v1691 = vld [vmem:[#allocation10 + $0x60] sm:$0xff]
    %v1692 = vld [vmem:[#allocation10 + $0x68] sm:$0xf]
    %v1693 = vld [vmem:[#allocation10 + $0x6c] sm:$0xff]
    %v1694 = vld [vmem:[#allocation10 + $0x74] sm:$0xf]
    %v1695 = vld [vmem:[#allocation10 + $0x78] sm:$0xff]
    %v1696 = vld [vmem:[#allocation10 + $0x80] sm:$0xf]
    %v1697 = vld [vmem:[#allocation10 + $0x84] sm:$0xff]
    %v1698 = vld [vmem:[#allocation10 + $0x8c] sm:$0xf]
    %v1699 = vld [vmem:[#allocation10 + $0x90] sm:$0xff]
    %v1700 = vld [vmem:[#allocation10 + $0x98] sm:$0xf]
    %v1701 = vld [vmem:[#allocation10 + $0x9c] sm:$0xff]
    %v1702 = vld [vmem:[#allocation10 + $0xa4] sm:$0xf]
    %v1703 = vld [vmem:[#allocation10 + $0xa8] sm:$0xff]
    %v1704 = vld [vmem:[#allocation10 + $0xb0] sm:$0xf]
    %v1705 = vld [vmem:[#allocation10 + $0xb4] sm:$0xff]
    %v1706 = vld [vmem:[#allocation10 + $0xbc] sm:$0xf]
    %v1739 = vunpack.c.l.b16 %v1675
    %v1740 = vunpack.c.h.b16 %v1675
    %v1741 = vunpack.c.l.b16 %v1676
    %v1742 = vunpack.c.l.b16 %v1677
    %v1743 = vunpack.c.h.b16 %v1677
    %v1744 = vunpack.c.l.b16 %v1678
    %v1745 = vunpack.c.l.b16 %v1679
    %v1746 = vunpack.c.h.b16 %v1679
    %v1747 = vunpack.c.l.b16 %v1680
    %v1748 = vunpack.c.l.b16 %v1681
    %v1749 = vunpack.c.h.b16 %v1681
    %v1750 = vunpack.c.l.b16 %v1682
    %v1751 = vunpack.c.l.b16 %v1683
    %v1752 = vunpack.c.h.b16 %v1683
    %v1753 = vunpack.c.l.b16 %v1684
    %v1754 = vunpack.c.l.b16 %v1685
    %v1755 = vunpack.c.h.b16 %v1685
    %v1756 = vunpack.c.l.b16 %v1686
    %v1757 = vunpack.c.l.b16 %v1687
    %v1758 = vunpack.c.h.b16 %v1687
    %v1759 = vunpack.c.l.b16 %v1688
    %v1760 = vunpack.c.l.b16 %v1689
    %v1761 = vunpack.c.h.b16 %v1689
    %v1762 = vunpack.c.l.b16 %v1690
    %v1763 = vunpack.c.l.b16 %v1691
    %v1764 = vunpack.c.h.b16 %v1691
    %v1765 = vunpack.c.l.b16 %v1692
    %v1766 = vunpack.c.l.b16 %v1693
    %v1767 = vunpack.c.h.b16 %v1693
    %v1768 = vunpack.c.l.b16 %v1694
    %v1769 = vunpack.c.l.b16 %v1695
    %v1770 = vunpack.c.h.b16 %v1695
    %v1771 = vunpack.c.l.b16 %v1696
    %v1772 = vunpack.c.l.b16 %v1697
    %v1773 = vunpack.c.h.b16 %v1697
    %v1774 = vunpack.c.l.b16 %v1698
    %v1775 = vunpack.c.l.b16 %v1699
    %v1776 = vunpack.c.h.b16 %v1699
    %v1777 = vunpack.c.l.b16 %v1700
    %v1778 = vunpack.c.l.b16 %v1701
    %v1779 = vunpack.c.h.b16 %v1701
    %v1780 = vunpack.c.l.b16 %v1702
    %v1781 = vunpack.c.l.b16 %v1703
    %v1782 = vunpack.c.h.b16 %v1703
    %v1783 = vunpack.c.l.b16 %v1704
    %v1784 = vunpack.c.l.b16 %v1705
    %v1785 = vunpack.c.h.b16 %v1705
    %v1786 = vunpack.c.l.b16 %v1706
    %v1787 = vpack.c.b16 %v1742, %v1739
    %v1788 = vpack.c.b16 %v1743, %v1740
    %v1789 = vpack.c.b16 %v1744, %v1741
    %v1790 = vpack.c.b16 %v1748, %v1745
    %v1791 = vpack.c.b16 %v1749, %v1746
    %v1792 = vpack.c.b16 %v1750, %v1747
    %v1793 = vpack.c.b16 %v1754, %v1751
    %v1794 = vpack.c.b16 %v1755, %v1752
    %v1795 = vpack.c.b16 %v1756, %v1753
    %v1796 = vpack.c.b16 %v1760, %v1757
    %v1797 = vpack.c.b16 %v1761, %v1758
    %v1798 = vpack.c.b16 %v1762, %v1759
    %v1799 = vpack.c.b16 %v1766, %v1763
    %v1800 = vpack.c.b16 %v1767, %v1764
    %v1801 = vpack.c.b16 %v1768, %v1765
    %v1802 = vpack.c.b16 %v1772, %v1769
    %v1803 = vpack.c.b16 %v1773, %v1770
    %v1804 = vpack.c.b16 %v1774, %v1771
    %v1805 = vpack.c.b16 %v1778, %v1775
    %v1806 = vpack.c.b16 %v1779, %v1776
    %v1807 = vpack.c.b16 %v1780, %v1777
    %v1808 = vpack.c.b16 %v1784, %v1781
    %v1809 = vpack.c.b16 %v1785, %v1782
    %v1810 = vpack.c.b16 %v1786, %v1783
    %1835 = vmatpush.bf16.msra.mxu0 %v1808
    %1836 = vmatpush.bf16.msra.mxu0 %v1805
    %1837 = vmatpush.bf16.msra.mxu0 %v1802
    %1838 = vmatpush.bf16.msra.mxu0 %v1799
    %1839 = vmatpush.bf16.msra.mxu0 %v1796
    %1840 = vmatpush.bf16.msra.mxu0 %v1793
    %1841 = vmatpush.bf16.msra.mxu0 %v1790
    %1842 = vmatpush.bf16.msra.mxu0 %v1787
    %1843 = vmatmul.bf16.gmra.mxu0 %v1673
    %v1844 = vpop.f32.mrf.mxu0
    %v1845 = vadd.f32 0.0, %v1844
    %v1846 = vpop.f32.mrf.mxu0
    %v1847 = vadd.f32 0.0, %v1846
    %1848 = vmatmul.bf16.gmra.mxu0 %v1674
    %v1849 = vpop.f32.mrf.mxu0
    %v1850 = vadd.f32 0.0, %v1849
    %v1851 = vpop.f32.mrf.mxu0
    %v1852 = vadd.f32 0.0, %v1851
    %1853 = vdwg.mxu0
    %1854 = vmatpush.bf16.msra.mxu0 %v1809
    %1855 = vmatpush.bf16.msra.mxu0 %v1806
    %1856 = vmatpush.bf16.msra.mxu0 %v1803
    %1857 = vmatpush.bf16.msra.mxu0 %v1800
    %1858 = vmatpush.bf16.msra.mxu0 %v1797
    %1859 = vmatpush.bf16.msra.mxu0 %v1794
    %1860 = vmatpush.bf16.msra.mxu0 %v1791
    %1861 = vmatpush.bf16.msra.mxu0 %v1788
    %1862 = vmatmul.bf16.gmra.mxu0 %v1673
    %v1863 = vpop.f32.mrf.mxu0
    %v1864 = vadd.f32 0.0, %v1863
    %v1865 = vpop.f32.mrf.mxu0
    %v1866 = vadd.f32 0.0, %v1865
    %1867 = vmatmul.bf16.gmra.mxu0 %v1674
    %v1868 = vpop.f32.mrf.mxu0
    %v1869 = vadd.f32 0.0, %v1868
    %v1870 = vpop.f32.mrf.mxu0
    %v1871 = vadd.f32 0.0, %v1870
    %1872 = vdwg.mxu0
    %1873 = vmatpush.bf16.msra.mxu0 %v1810
    %1874 = vmatpush.bf16.msra.mxu0 %v1807
    %1875 = vmatpush.bf16.msra.mxu0 %v1804
    %1876 = vmatpush.bf16.msra.mxu0 %v1801
    %1877 = vmatpush.bf16.msra.mxu0 %v1798
    %1878 = vmatpush.bf16.msra.mxu0 %v1795
    %1879 = vmatpush.bf16.msra.mxu0 %v1792
    %1880 = vmatpush.bf16.msra.mxu0 %v1789
    %1881 = vmatmul.bf16.gmra.mxu0 %v1673
    %v1882 = vpop.f32.mrf.mxu0
    %v1883 = vadd.f32 0.0, %v1882
    %v1884 = vpop.f32.mrf.mxu0
    %v1885 = vadd.f32 0.0, %v1884
    %1886 = vmatmul.bf16.gmra.mxu0 %v1674
    %v1887 = vpop.f32.mrf.mxu0
    %v1888 = vadd.f32 0.0, %v1887
    %v1889 = vpop.f32.mrf.mxu0
    %v1890 = vadd.f32 0.0, %v1889
    %1891 = vdwg.mxu0
    %v1892 = vld [vmem:[#allocation13] sm:$0xf]
    %v1893 = vld [vmem:[#allocation13 + $0x4] sm:$0xf]
    %v1894 = vld [vmem:[#allocation11] sm:$0x1]
    %v1895 = vrot.slane %v1845, 7
    %v1896 = vrot.slane %v1847, 7
    %v1897 = vrot.slane %v1850, 7
    %v1898 = vrot.slane %v1852, 7
    %v1899 = vsel %vm946, %v1897, %v1898
    %v1900 = vsel %vm946, %v1896, %v1897
    %v1901 = vsel %vm946, %v1895, %v1896
    %v1902 = vsel %vm946, %v1898, %v1895
    %v1903 = vmul.f32 %v930, %v1902
    %v1904 = vmul.f32 %v931, %v1901
    %v1905 = vmul.f32 %v932, %v1900
    %v1906 = vmul.f32 %v933, %v1899
    %v1907 = vadd.f32 %v1864, %v1903
    %v1908 = vadd.f32 %v1866, %v1904
    %v1909 = vadd.f32 %v1869, %v1905
    %v1910 = vadd.f32 %v1871, %v1906
    %v1911 = vrot.slane %v1883, 1
    %v1912 = vrot.slane %v1885, 1
    %v1913 = vrot.slane %v1888, 1
    %v1914 = vrot.slane %v1890, 1
    %v1915 = vsel %vm963, %v1913, %v1914
    %v1916 = vsel %vm963, %v1912, %v1913
    %v1917 = vsel %vm963, %v1911, %v1912
    %v1918 = vsel %vm963, %v1914, %v1911
    %v1919 = vmul.f32 %v938, %v1917
    %v1920 = vmul.f32 %v939, %v1916
    %v1921 = vmul.f32 %v940, %v1915
    %v1922 = vmul.f32 %v941, %v1918
    %v1923 = vadd.f32 %v1907, %v1919
    %v1924 = vadd.f32 %v1908, %v1920
    %v1925 = vadd.f32 %v1909, %v1921
    %v1926 = vadd.f32 %v1910, %v1922
    %v1927 = vpack.c.bf16 %v1924, %v1923
    %v1928 = vpack.c.bf16 %v1926, %v1925
    %v1930 = vperm.slane %v1894, 0
    %v1934 = vunpack.c.l.b16 %v1892
    %v1935 = vunpack.c.l.b16 %v1893
    %v1936 = vpack.c.b16 %v1935, %v1934
    %vm1937 = vcmask 261120
    %v1939 = vsel %vm1937, %v1936, 0
    %1941 = vmatpush.bf16.msra.mxu0 0
    %1942 = vmatpush.bf16.msra.mxu0 0
    %1943 = vmatpush.bf16.msra.mxu0 0
    %1944 = vmatpush.bf16.msra.mxu0 0
    %1945 = vmatpush.bf16.msra.mxu0 0
    %1946 = vmatpush.bf16.msra.mxu0 0
    %1947 = vmatpush.bf16.msra.mxu0 %v1928
    %1948 = vmatpush.bf16.msra.mxu0 %v1927
    %1949 = vmatmul.bf16.gmra.mxu0 %v1939
    %v1950 = vpop.f32.mrf.mxu0
    %v1951 = vadd.f32 %v1930, %v1950
    %v1952 = vpop.f32.mrf.mxu0
    %v1953 = vadd.f32 %v1930, %v1952
    %1954 = vdwg.mxu0
    %v1955 = vmax.f32 %v1951, 0.0
    %v1956 = vmax.f32 %v1953, 0.0
    %v1957 = vpack.c.bf16 %v1956, %v1955
    %v1958 = vld [vmem:[#allocation14] sm:$0xff]
    %v1959 = vld [vmem:[#allocation14 + $0x8] sm:$0xf]
    %v1960 = vld [vmem:[#allocation14 + $0xc] sm:$0xff]
    %v1961 = vld [vmem:[#allocation14 + $0x14] sm:$0xf]
    %v1962 = vld [vmem:[#allocation14 + $0x18] sm:$0xff]
    %v1963 = vld [vmem:[#allocation14 + $0x20] sm:$0xf]
    %v1964 = vld [vmem:[#allocation14 + $0x24] sm:$0xff]
    %v1965 = vld [vmem:[#allocation14 + $0x2c] sm:$0xf]
    %v1966 = vld [vmem:[#allocation14 + $0x30] sm:$0xff]
    %v1967 = vld [vmem:[#allocation14 + $0x38] sm:$0xf]
    %v1968 = vld [vmem:[#allocation14 + $0x3c] sm:$0xff]
    %v1969 = vld [vmem:[#allocation14 + $0x44] sm:$0xf]
    %v1970 = vld [vmem:[#allocation14 + $0x48] sm:$0xff]
    %v1971 = vld [vmem:[#allocation14 + $0x50] sm:$0xf]
    %v1972 = vld [vmem:[#allocation14 + $0x54] sm:$0xff]
    %v1973 = vld [vmem:[#allocation14 + $0x5c] sm:$0xf]
    %v1974 = vld [vmem:[#allocation14 + $0x60] sm:$0xff]
    %v1975 = vld [vmem:[#allocation14 + $0x68] sm:$0xf]
    %v1976 = vld [vmem:[#allocation14 + $0x6c] sm:$0xff]
    %v1977 = vld [vmem:[#allocation14 + $0x74] sm:$0xf]
    %v1978 = vld [vmem:[#allocation14 + $0x78] sm:$0xff]
    %v1979 = vld [vmem:[#allocation14 + $0x80] sm:$0xf]
    %v1980 = vld [vmem:[#allocation14 + $0x84] sm:$0xff]
    %v1981 = vld [vmem:[#allocation14 + $0x8c] sm:$0xf]
    %v1982 = vld [vmem:[#allocation14 + $0x90] sm:$0xff]
    %v1983 = vld [vmem:[#allocation14 + $0x98] sm:$0xf]
    %v1984 = vld [vmem:[#allocation14 + $0x9c] sm:$0xff]
    %v1985 = vld [vmem:[#allocation14 + $0xa4] sm:$0xf]
    %v1986 = vld [vmem:[#allocation14 + $0xa8] sm:$0xff]
    %v1987 = vld [vmem:[#allocation14 + $0xb0] sm:$0xf]
    %v1988 = vld [vmem:[#allocation14 + $0xb4] sm:$0xff]
    %v1989 = vld [vmem:[#allocation14 + $0xbc] sm:$0xf]
    %v2022 = vunpack.c.l.b16 %v1958
    %v2023 = vunpack.c.h.b16 %v1958
    %v2024 = vunpack.c.l.b16 %v1959
    %v2025 = vunpack.c.l.b16 %v1960
    %v2026 = vunpack.c.h.b16 %v1960
    %v2027 = vunpack.c.l.b16 %v1961
    %v2028 = vunpack.c.l.b16 %v1962
    %v2029 = vunpack.c.h.b16 %v1962
    %v2030 = vunpack.c.l.b16 %v1963
    %v2031 = vunpack.c.l.b16 %v1964
    %v2032 = vunpack.c.h.b16 %v1964
    %v2033 = vunpack.c.l.b16 %v1965
    %v2034 = vunpack.c.l.b16 %v1966
    %v2035 = vunpack.c.h.b16 %v1966
    %v2036 = vunpack.c.l.b16 %v1967
    %v2037 = vunpack.c.l.b16 %v1968
    %v2038 = vunpack.c.h.b16 %v1968
    %v2039 = vunpack.c.l.b16 %v1969
    %v2040 = vunpack.c.l.b16 %v1970
    %v2041 = vunpack.c.h.b16 %v1970
    %v2042 = vunpack.c.l.b16 %v1971
    %v2043 = vunpack.c.l.b16 %v1972
    %v2044 = vunpack.c.h.b16 %v1972
    %v2045 = vunpack.c.l.b16 %v1973
    %v2046 = vunpack.c.l.b16 %v1974
    %v2047 = vunpack.c.h.b16 %v1974
    %v2048 = vunpack.c.l.b16 %v1975
    %v2049 = vunpack.c.l.b16 %v1976
    %v2050 = vunpack.c.h.b16 %v1976
    %v2051 = vunpack.c.l.b16 %v1977
    %v2052 = vunpack.c.l.b16 %v1978
    %v2053 = vunpack.c.h.b16 %v1978
    %v2054 = vunpack.c.l.b16 %v1979
    %v2055 = vunpack.c.l.b16 %v1980
    %v2056 = vunpack.c.h.b16 %v1980
    %v2057 = vunpack.c.l.b16 %v1981
    %v2058 = vunpack.c.l.b16 %v1982
    %v2059 = vunpack.c.h.b16 %v1982
    %v2060 = vunpack.c.l.b16 %v1983
    %v2061 = vunpack.c.l.b16 %v1984
    %v2062 = vunpack.c.h.b16 %v1984
    %v2063 = vunpack.c.l.b16 %v1985
    %v2064 = vunpack.c.l.b16 %v1986
    %v2065 = vunpack.c.h.b16 %v1986
    %v2066 = vunpack.c.l.b16 %v1987
    %v2067 = vunpack.c.l.b16 %v1988
    %v2068 = vunpack.c.h.b16 %v1988
    %v2069 = vunpack.c.l.b16 %v1989
    %v2070 = vpack.c.b16 %v2025, %v2022
    %v2071 = vpack.c.b16 %v2026, %v2023
    %v2072 = vpack.c.b16 %v2027, %v2024
    %v2073 = vpack.c.b16 %v2031, %v2028
    %v2074 = vpack.c.b16 %v2032, %v2029
    %v2075 = vpack.c.b16 %v2033, %v2030
    %v2076 = vpack.c.b16 %v2037, %v2034
    %v2077 = vpack.c.b16 %v2038, %v2035
    %v2078 = vpack.c.b16 %v2039, %v2036
    %v2079 = vpack.c.b16 %v2043, %v2040
    %v2080 = vpack.c.b16 %v2044, %v2041
    %v2081 = vpack.c.b16 %v2045, %v2042
    %v2082 = vpack.c.b16 %v2049, %v2046
    %v2083 = vpack.c.b16 %v2050, %v2047
    %v2084 = vpack.c.b16 %v2051, %v2048
    %v2085 = vpack.c.b16 %v2055, %v2052
    %v2086 = vpack.c.b16 %v2056, %v2053
    %v2087 = vpack.c.b16 %v2057, %v2054
    %v2088 = vpack.c.b16 %v2061, %v2058
    %v2089 = vpack.c.b16 %v2062, %v2059
    %v2090 = vpack.c.b16 %v2063, %v2060
    %v2091 = vpack.c.b16 %v2067, %v2064
    %v2092 = vpack.c.b16 %v2068, %v2065
    %v2093 = vpack.c.b16 %v2069, %v2066
    %2118 = vmatpush.bf16.msra.mxu0 %v2091
    %2119 = vmatpush.bf16.msra.mxu0 %v2088
    %2120 = vmatpush.bf16.msra.mxu0 %v2085
    %2121 = vmatpush.bf16.msra.mxu0 %v2082
    %2122 = vmatpush.bf16.msra.mxu0 %v2079
    %2123 = vmatpush.bf16.msra.mxu0 %v2076
    %2124 = vmatpush.bf16.msra.mxu0 %v2073
    %2125 = vmatpush.bf16.msra.mxu0 %v2070
    %2126 = vmatmul.bf16.gmra.mxu0 %v1957
    %v2127 = vpop.f32.mrf.mxu0
    %v2128 = vadd.f32 0.0, %v2127
    %v2129 = vpop.f32.mrf.mxu0
    %v2130 = vadd.f32 0.0, %v2129
    %2131 = vdwg.mxu0
    %2132 = vmatpush.bf16.msra.mxu0 %v2092
    %2133 = vmatpush.bf16.msra.mxu0 %v2089
    %2134 = vmatpush.bf16.msra.mxu0 %v2086
    %2135 = vmatpush.bf16.msra.mxu0 %v2083
    %2136 = vmatpush.bf16.msra.mxu0 %v2080
    %2137 = vmatpush.bf16.msra.mxu0 %v2077
    %2138 = vmatpush.bf16.msra.mxu0 %v2074
    %2139 = vmatpush.bf16.msra.mxu0 %v2071
    %2140 = vmatmul.bf16.gmra.mxu0 %v1957
    %v2141 = vpop.f32.mrf.mxu0
    %v2142 = vadd.f32 0.0, %v2141
    %v2143 = vpop.f32.mrf.mxu0
    %v2144 = vadd.f32 0.0, %v2143
    %2145 = vdwg.mxu0
    %2146 = vmatpush.bf16.msra.mxu0 %v2093
    %2147 = vmatpush.bf16.msra.mxu0 %v2090
    %2148 = vmatpush.bf16.msra.mxu0 %v2087
    %2149 = vmatpush.bf16.msra.mxu0 %v2084
    %2150 = vmatpush.bf16.msra.mxu0 %v2081
    %2151 = vmatpush.bf16.msra.mxu0 %v2078
    %2152 = vmatpush.bf16.msra.mxu0 %v2075
    %2153 = vmatpush.bf16.msra.mxu0 %v2072
    %2154 = vmatmul.bf16.gmra.mxu0 %v1957
    %v2155 = vpop.f32.mrf.mxu0
    %v2156 = vadd.f32 0.0, %v2155
    %v2157 = vpop.f32.mrf.mxu0
    %v2158 = vadd.f32 0.0, %v2157
    %2159 = vdwg.mxu0
    %v2160 = vld [vmem:[#allocation16] sm:$0x1]
    %vm2161 = vcmp.lt.s32.totalorder %v874, 0
    %v2162 = vsub.s32 0, %v874
    %v2163 = vsel %vm2161, %v2162, %v874
    %v2164 = vshrl.u32 %v2163, 3
    %v2165 = vand.u32 %v2163, 7
    %v2166 = vsub.s32 0, %v2165
    %v2167 = vsel %vm2161, %v2166, %v2165
    %vm2168 = vcmp.lt.s32.totalorder %v875, 0
    %v2169 = vsub.s32 0, %v875
    %v2170 = vsel %vm2168, %v2169, %v875
    %v2171 = vshrl.u32 %v2170, 3
    %v2172 = vand.u32 %v2170, 7
    %v2173 = vsub.s32 0, %v2172
    %v2174 = vsel %vm2168, %v2173, %v2172
    %vm2175 = vcmp.ne.s32.totalorder %v2167, 0
    %vm2176 = vcmp.ne.s32.totalorder %v2174, 0
    %vm2177 = vcmp.lt.s32.totalorder %v2167, 0
    %vm2178 = vcmp.lt.s32.totalorder %v2174, 0
    %vm2179 = vmand %vm2177, %vm2175
    %vm2180 = vmand %vm2178, %vm2176
    %v2181 = vadd.s32 %v2167, 8
    %v2182 = vadd.s32 %v2174, 8
    %v2183 = vsel %vm2179, %v2181, %v2167
    %v2184 = vsel %vm2180, %v2182, %v2174
    %vm2185 = vcmp.ne.s32.totalorder %v2183, 0
    %vm2186 = vcmp.ne.s32.totalorder %v2184, 0
    %v2187 = vsel %vm2185, 1.0, 0.0
    %v2188 = vsel %vm2186, 1.0, 0.0
    %vm2189 = vcmp.ne.s32.totalorder %v2183, 7
    %vm2190 = vcmp.ne.s32.totalorder %v2184, 7
    %v2191 = vsel %vm2189, 1.0, 0.0
    %v2192 = vsel %vm2190, 1.0, 0.0
    %v2193 = vrot.slane %v2128, 7
    %v2194 = vrot.slane %v2130, 7
    %v2195 = vsel %vm946, %v2193, %v2194
    %v2196 = vsel %vm946, %v2194, %v2193
    %v2197 = vmul.f32 %v2187, %v2196
    %v2198 = vmul.f32 %v2188, %v2195
    %v2199 = vadd.f32 %v2142, %v2197
    %v2200 = vadd.f32 %v2144, %v2198
    %v2201 = vrot.slane %v2156, 1
    %v2202 = vrot.slane %v2158, 1
    %v2203 = vsel %vm963, %v2201, %v2202
    %v2204 = vsel %vm963, %v2202, %v2201
    %v2205 = vmul.f32 %v2191, %v2203
    %v2206 = vmul.f32 %v2192, %v2204
    %v2207 = vadd.f32 %v2199, %v2205
    %v2208 = vadd.f32 %v2200, %v2206
    %v2210 = vperm.slane %v2160, 0
    %v2212 = vadd.f32 %v2207, %v2210
    %v2213 = vadd.f32 %v2208, %v2210
    %v2214 = vpack.c.bf16 %v1666, %v1665
    %v2215 = vpack.c.bf16 %v1668, %v1667
    %v2216 = vld [vmem:[#allocation17] sm:$0xf]
    %v2217 = vld [vmem:[#allocation17 + $0x4] sm:$0xf]
    %v2218 = vld [vmem:[#allocation17 + $0x8] sm:$0xf]
    %v2219 = vld [vmem:[#allocation17 + $0xc] sm:$0xf]
    %v2220 = vld [vmem:[#allocation17 + $0x10] sm:$0xf]
    %v2221 = vld [vmem:[#allocation17 + $0x14] sm:$0xf]
    %v2222 = vld [vmem:[#allocation17 + $0x18] sm:$0xf]
    %v2223 = vld [vmem:[#allocation17 + $0x1c] sm:$0xf]
    %v2224 = vld [vmem:[#allocation17 + $0x20] sm:$0xf]
    %v2225 = vld [vmem:[#allocation17 + $0x24] sm:$0xf]
    %v2226 = vld [vmem:[#allocation17 + $0x28] sm:$0xf]
    %v2227 = vld [vmem:[#allocation17 + $0x2c] sm:$0xf]
    %v2228 = vld [vmem:[#allocation17 + $0x30] sm:$0xf]
    %v2229 = vld [vmem:[#allocation17 + $0x34] sm:$0xf]
    %v2230 = vld [vmem:[#allocation17 + $0x38] sm:$0xf]
    %v2231 = vld [vmem:[#allocation17 + $0x3c] sm:$0xf]
    %v2248 = vunpack.c.l.b16 %v2216
    %v2249 = vunpack.c.l.b16 %v2217
    %v2250 = vunpack.c.l.b16 %v2218
    %v2251 = vunpack.c.l.b16 %v2219
    %v2252 = vunpack.c.l.b16 %v2220
    %v2253 = vunpack.c.l.b16 %v2221
    %v2254 = vunpack.c.l.b16 %v2222
    %v2255 = vunpack.c.l.b16 %v2223
    %v2256 = vunpack.c.l.b16 %v2224
    %v2257 = vunpack.c.l.b16 %v2225
    %v2258 = vunpack.c.l.b16 %v2226
    %v2259 = vunpack.c.l.b16 %v2227
    %v2260 = vunpack.c.l.b16 %v2228
    %v2261 = vunpack.c.l.b16 %v2229
    %v2262 = vunpack.c.l.b16 %v2230
    %v2263 = vunpack.c.l.b16 %v2231
    %v2264 = vpack.c.b16 %v2249, %v2248
    %v2265 = vpack.c.b16 %v2251, %v2250
    %v2266 = vpack.c.b16 %v2253, %v2252
    %v2267 = vpack.c.b16 %v2255, %v2254
    %v2268 = vpack.c.b16 %v2257, %v2256
    %v2269 = vpack.c.b16 %v2259, %v2258
    %v2270 = vpack.c.b16 %v2261, %v2260
    %v2271 = vpack.c.b16 %v2263, %v2262
    %2280 = vmatpush.bf16.msra.mxu0 %v2271
    %2281 = vmatpush.bf16.msra.mxu0 %v2270
    %2282 = vmatpush.bf16.msra.mxu0 %v2269
    %2283 = vmatpush.bf16.msra.mxu0 %v2268
    %2284 = vmatpush.bf16.msra.mxu0 %v2267
    %2285 = vmatpush.bf16.msra.mxu0 %v2266
    %2286 = vmatpush.bf16.msra.mxu0 %v2265
    %2287 = vmatpush.bf16.msra.mxu0 %v2264
    %2288 = vmatmul.bf16.gmra.mxu0 %v2214
    %v2289 = vpop.f32.mrf.mxu0
    %v2290 = vadd.f32 0.0, %v2289
    %v2291 = vpop.f32.mrf.mxu0
    %v2292 = vadd.f32 0.0, %v2291
    %2293 = vmatmul.bf16.gmra.mxu0 %v2215
    %v2294 = vpop.f32.mrf.mxu0
    %v2295 = vadd.f32 0.0, %v2294
    %v2296 = vpop.f32.mrf.mxu0
    %v2297 = vadd.f32 0.0, %v2296
    %2298 = vdwg.mxu0
    %v2299 = vld [vmem:[#allocation19] sm:$0xf]
    %v2300 = vld [vmem:[#allocation19 + $0x4] sm:$0xf]
    %v2301 = vpack.c.bf16 %v2292, %v2290
    %v2302 = vpack.c.bf16 %v2297, %v2295
    %v2305 = vunpack.c.l.b16 %v2299
    %v2306 = vunpack.c.l.b16 %v2300
    %v2307 = vpack.c.b16 %v2306, %v2305
    %v2309 = vsel %vm1937, %v2307, 0
    %2311 = vmatpush.bf16.msra.mxu0 0
    %2312 = vmatpush.bf16.msra.mxu0 0
    %2313 = vmatpush.bf16.msra.mxu0 0
    %2314 = vmatpush.bf16.msra.mxu0 0
    %2315 = vmatpush.bf16.msra.mxu0 0
    %2316 = vmatpush.bf16.msra.mxu0 0
    %2317 = vmatpush.bf16.msra.mxu0 %v2302
    %2318 = vmatpush.bf16.msra.mxu0 %v2301
    %2319 = vmatmul.bf16.gmra.mxu0 %v2309
    %v2320 = vpop.f32.mrf.mxu0
    %v2321 = vadd.f32 %v2212, %v2320
    %v2322 = vpop.f32.mrf.mxu0
    %v2323 = vadd.f32 %v2213, %v2322
    %2324 = vdwg.mxu0
    %2325 = vst [vmem:[%s93] sm:$0xff] %v2321
    %2326 = vst [vmem:[%s93 + $0x8] sm:$0xff] %v2323
    %v2327 = vmax.f32 %v2321, 0.0
    %v2328 = vmax.f32 %v2323, 0.0
    %v2329 = vpack.c.bf16 %v2328, %v2327
    %v2330 = vld [vmem:[#allocation26] sm:$0xff]
    %v2331 = vld [vmem:[#allocation26 + $0x8] sm:$0xff]
    %v2332 = vld [vmem:[#allocation26 + $0x10] sm:$0xff]
    %v2333 = vld [vmem:[#allocation26 + $0x18] sm:$0xff]
    %v2334 = vld [vmem:[#allocation26 + $0x20] sm:$0xff]
    %v2335 = vld [vmem:[#allocation26 + $0x28] sm:$0xff]
    %v2336 = vld [vmem:[#allocation26 + $0x30] sm:$0xff]
    %v2337 = vld [vmem:[#allocation26 + $0x38] sm:$0xff]
    %v2338 = vld [vmem:[#allocation26 + $0x40] sm:$0xff]
    %v2339 = vld [vmem:[#allocation26 + $0x48] sm:$0xff]
    %v2340 = vld [vmem:[#allocation26 + $0x50] sm:$0xff]
    %v2341 = vld [vmem:[#allocation26 + $0x58] sm:$0xff]
    %v2342 = vld [vmem:[#allocation26 + $0x60] sm:$0xff]
    %v2343 = vld [vmem:[#allocation26 + $0x68] sm:$0xff]
    %v2344 = vld [vmem:[#allocation26 + $0x70] sm:$0xff]
    %v2345 = vld [vmem:[#allocation26 + $0x78] sm:$0xff]
    %v2346 = vld [vmem:[#allocation26 + $0x80] sm:$0xff]
    %v2347 = vld [vmem:[#allocation26 + $0x88] sm:$0xff]
    %v2348 = vld [vmem:[#allocation26 + $0x90] sm:$0xff]
    %v2349 = vld [vmem:[#allocation26 + $0x98] sm:$0xff]
    %v2350 = vld [vmem:[#allocation26 + $0xa0] sm:$0xff]
    %v2351 = vld [vmem:[#allocation26 + $0xa8] sm:$0xff]
    %v2352 = vld [vmem:[#allocation26 + $0xb0] sm:$0xff]
    %v2353 = vld [vmem:[#allocation26 + $0xb8] sm:$0xff]
    %v2354 = vld [vmem:[#allocation26 + $0xc0] sm:$0xff]
    %v2355 = vld [vmem:[#allocation26 + $0xc8] sm:$0xff]
    %v2356 = vld [vmem:[#allocation26 + $0xd0] sm:$0xff]
    %v2357 = vld [vmem:[#allocation26 + $0xd8] sm:$0xff]
    %v2358 = vld [vmem:[#allocation26 + $0xe0] sm:$0xff]
    %v2359 = vld [vmem:[#allocation26 + $0xe8] sm:$0xff]
    %v2360 = vld [vmem:[#allocation26 + $0xf0] sm:$0xff]
    %v2361 = vld [vmem:[#allocation26 + $0xf8] sm:$0xff]
    %v2362 = vld [vmem:[#allocation26 + $0x100] sm:$0xff]
    %v2363 = vld [vmem:[#allocation26 + $0x108] sm:$0xff]
    %v2364 = vld [vmem:[#allocation26 + $0x110] sm:$0xff]
    %v2365 = vld [vmem:[#allocation26 + $0x118] sm:$0xff]
    %v2366 = vld [vmem:[#allocation26 + $0x120] sm:$0xff]
    %v2367 = vld [vmem:[#allocation26 + $0x128] sm:$0xff]
    %v2368 = vld [vmem:[#allocation26 + $0x130] sm:$0xff]
    %v2369 = vld [vmem:[#allocation26 + $0x138] sm:$0xff]
    %v2370 = vld [vmem:[#allocation26 + $0x140] sm:$0xff]
    %v2371 = vld [vmem:[#allocation26 + $0x148] sm:$0xff]
    %v2372 = vld [vmem:[#allocation26 + $0x150] sm:$0xff]
    %v2373 = vld [vmem:[#allocation26 + $0x158] sm:$0xff]
    %v2374 = vld [vmem:[#allocation26 + $0x160] sm:$0xff]
    %v2375 = vld [vmem:[#allocation26 + $0x168] sm:$0xff]
    %v2376 = vld [vmem:[#allocation26 + $0x170] sm:$0xff]
    %v2377 = vld [vmem:[#allocation26 + $0x178] sm:$0xff]
    %v2426 = vunpack.c.l.b16 %v2330
    %v2427 = vunpack.c.h.b16 %v2330
    %v2428 = vunpack.c.l.b16 %v2331
    %v2429 = vunpack.c.h.b16 %v2331
    %v2430 = vunpack.c.l.b16 %v2332
    %v2431 = vunpack.c.h.b16 %v2332
    %v2432 = vunpack.c.l.b16 %v2333
    %v2433 = vunpack.c.h.b16 %v2333
    %v2434 = vunpack.c.l.b16 %v2334
    %v2435 = vunpack.c.h.b16 %v2334
    %v2436 = vunpack.c.l.b16 %v2335
    %v2437 = vunpack.c.h.b16 %v2335
    %v2438 = vunpack.c.l.b16 %v2336
    %v2439 = vunpack.c.h.b16 %v2336
    %v2440 = vunpack.c.l.b16 %v2337
    %v2441 = vunpack.c.h.b16 %v2337
    %v2442 = vunpack.c.l.b16 %v2338
    %v2443 = vunpack.c.h.b16 %v2338
    %v2444 = vunpack.c.l.b16 %v2339
    %v2445 = vunpack.c.h.b16 %v2339
    %v2446 = vunpack.c.l.b16 %v2340
    %v2447 = vunpack.c.h.b16 %v2340
    %v2448 = vunpack.c.l.b16 %v2341
    %v2449 = vunpack.c.h.b16 %v2341
    %v2450 = vunpack.c.l.b16 %v2342
    %v2451 = vunpack.c.h.b16 %v2342
    %v2452 = vunpack.c.l.b16 %v2343
    %v2453 = vunpack.c.h.b16 %v2343
    %v2454 = vunpack.c.l.b16 %v2344
    %v2455 = vunpack.c.h.b16 %v2344
    %v2456 = vunpack.c.l.b16 %v2345
    %v2457 = vunpack.c.h.b16 %v2345
    %v2458 = vunpack.c.l.b16 %v2346
    %v2459 = vunpack.c.h.b16 %v2346
    %v2460 = vunpack.c.l.b16 %v2347
    %v2461 = vunpack.c.h.b16 %v2347
    %v2462 = vunpack.c.l.b16 %v2348
    %v2463 = vunpack.c.h.b16 %v2348
    %v2464 = vunpack.c.l.b16 %v2349
    %v2465 = vunpack.c.h.b16 %v2349
    %v2466 = vunpack.c.l.b16 %v2350
    %v2467 = vunpack.c.h.b16 %v2350
    %v2468 = vunpack.c.l.b16 %v2351
    %v2469 = vunpack.c.h.b16 %v2351
    %v2470 = vunpack.c.l.b16 %v2352
    %v2471 = vunpack.c.h.b16 %v2352
    %v2472 = vunpack.c.l.b16 %v2353
    %v2473 = vunpack.c.h.b16 %v2353
    %v2474 = vunpack.c.l.b16 %v2354
    %v2475 = vunpack.c.h.b16 %v2354
    %v2476 = vunpack.c.l.b16 %v2355
    %v2477 = vunpack.c.h.b16 %v2355
    %v2478 = vunpack.c.l.b16 %v2356
    %v2479 = vunpack.c.h.b16 %v2356
    %v2480 = vunpack.c.l.b16 %v2357
    %v2481 = vunpack.c.h.b16 %v2357
    %v2482 = vunpack.c.l.b16 %v2358
    %v2483 = vunpack.c.h.b16 %v2358
    %v2484 = vunpack.c.l.b16 %v2359
    %v2485 = vunpack.c.h.b16 %v2359
    %v2486 = vunpack.c.l.b16 %v2360
    %v2487 = vunpack.c.h.b16 %v2360
    %v2488 = vunpack.c.l.b16 %v2361
    %v2489 = vunpack.c.h.b16 %v2361
    %v2490 = vunpack.c.l.b16 %v2362
    %v2491 = vunpack.c.h.b16 %v2362
    %v2492 = vunpack.c.l.b16 %v2363
    %v2493 = vunpack.c.h.b16 %v2363
    %v2494 = vunpack.c.l.b16 %v2364
    %v2495 = vunpack.c.h.b16 %v2364
    %v2496 = vunpack.c.l.b16 %v2365
    %v2497 = vunpack.c.h.b16 %v2365
    %v2498 = vunpack.c.l.b16 %v2366
    %v2499 = vunpack.c.h.b16 %v2366
    %v2500 = vunpack.c.l.b16 %v2367
    %v2501 = vunpack.c.h.b16 %v2367
    %v2502 = vunpack.c.l.b16 %v2368
    %v2503 = vunpack.c.h.b16 %v2368
    %v2504 = vunpack.c.l.b16 %v2369
    %v2505 = vunpack.c.h.b16 %v2369
    %v2506 = vunpack.c.l.b16 %v2370
    %v2507 = vunpack.c.h.b16 %v2370
    %v2508 = vunpack.c.l.b16 %v2371
    %v2509 = vunpack.c.h.b16 %v2371
    %v2510 = vunpack.c.l.b16 %v2372
    %v2511 = vunpack.c.h.b16 %v2372
    %v2512 = vunpack.c.l.b16 %v2373
    %v2513 = vunpack.c.h.b16 %v2373
    %v2514 = vunpack.c.l.b16 %v2374
    %v2515 = vunpack.c.h.b16 %v2374
    %v2516 = vunpack.c.l.b16 %v2375
    %v2517 = vunpack.c.h.b16 %v2375
    %v2518 = vunpack.c.l.b16 %v2376
    %v2519 = vunpack.c.h.b16 %v2376
    %v2520 = vunpack.c.l.b16 %v2377
    %v2521 = vunpack.c.h.b16 %v2377
    %v2522 = vpack.c.b16 %v2432, %v2426
    %v2523 = vpack.c.b16 %v2433, %v2427
    %v2524 = vpack.c.b16 %v2434, %v2428
    %v2525 = vpack.c.b16 %v2435, %v2429
    %v2526 = vpack.c.b16 %v2436, %v2430
    %v2527 = vpack.c.b16 %v2437, %v2431
    %v2528 = vpack.c.b16 %v2444, %v2438
    %v2529 = vpack.c.b16 %v2445, %v2439
    %v2530 = vpack.c.b16 %v2446, %v2440
    %v2531 = vpack.c.b16 %v2447, %v2441
    %v2532 = vpack.c.b16 %v2448, %v2442
    %v2533 = vpack.c.b16 %v2449, %v2443
    %v2534 = vpack.c.b16 %v2456, %v2450
    %v2535 = vpack.c.b16 %v2457, %v2451
    %v2536 = vpack.c.b16 %v2458, %v2452
    %v2537 = vpack.c.b16 %v2459, %v2453
    %v2538 = vpack.c.b16 %v2460, %v2454
    %v2539 = vpack.c.b16 %v2461, %v2455
    %v2540 = vpack.c.b16 %v2468, %v2462
    %v2541 = vpack.c.b16 %v2469, %v2463
    %v2542 = vpack.c.b16 %v2470, %v2464
    %v2543 = vpack.c.b16 %v2471, %v2465
    %v2544 = vpack.c.b16 %v2472, %v2466
    %v2545 = vpack.c.b16 %v2473, %v2467
    %v2546 = vpack.c.b16 %v2480, %v2474
    %v2547 = vpack.c.b16 %v2481, %v2475
    %v2548 = vpack.c.b16 %v2482, %v2476
    %v2549 = vpack.c.b16 %v2483, %v2477
    %v2550 = vpack.c.b16 %v2484, %v2478
    %v2551 = vpack.c.b16 %v2485, %v2479
    %v2552 = vpack.c.b16 %v2492, %v2486
    %v2553 = vpack.c.b16 %v2493, %v2487
    %v2554 = vpack.c.b16 %v2494, %v2488
    %v2555 = vpack.c.b16 %v2495, %v2489
    %v2556 = vpack.c.b16 %v2496, %v2490
    %v2557 = vpack.c.b16 %v2497, %v2491
    %v2558 = vpack.c.b16 %v2504, %v2498
    %v2559 = vpack.c.b16 %v2505, %v2499
    %v2560 = vpack.c.b16 %v2506, %v2500
    %v2561 = vpack.c.b16 %v2507, %v2501
    %v2562 = vpack.c.b16 %v2508, %v2502
    %v2563 = vpack.c.b16 %v2509, %v2503
    %v2564 = vpack.c.b16 %v2516, %v2510
    %v2565 = vpack.c.b16 %v2517, %v2511
    %v2566 = vpack.c.b16 %v2518, %v2512
    %v2567 = vpack.c.b16 %v2519, %v2513
    %v2568 = vpack.c.b16 %v2520, %v2514
    %v2569 = vpack.c.b16 %v2521, %v2515
    %2618 = vmatpush.bf16.msra.mxu0 %v2564
    %2619 = vmatpush.bf16.msra.mxu0 %v2558
    %2620 = vmatpush.bf16.msra.mxu0 %v2552
    %2621 = vmatpush.bf16.msra.mxu0 %v2546
    %2622 = vmatpush.bf16.msra.mxu0 %v2540
    %2623 = vmatpush.bf16.msra.mxu0 %v2534
    %2624 = vmatpush.bf16.msra.mxu0 %v2528
    %2625 = vmatpush.bf16.msra.mxu0 %v2522
    %2626 = vmatmul.bf16.gmra.mxu0 %v2329
    %v2627 = vpop.f32.mrf.mxu0
    %v2628 = vadd.f32 0.0, %v2627
    %v2629 = vpop.f32.mrf.mxu0
    %v2630 = vadd.f32 0.0, %v2629
    %2631 = vdwg.mxu0
    %2632 = vmatpush.bf16.msra.mxu0 %v2565
    %2633 = vmatpush.bf16.msra.mxu0 %v2559
    %2634 = vmatpush.bf16.msra.mxu0 %v2553
    %2635 = vmatpush.bf16.msra.mxu0 %v2547
    %2636 = vmatpush.bf16.msra.mxu0 %v2541
    %2637 = vmatpush.bf16.msra.mxu0 %v2535
    %2638 = vmatpush.bf16.msra.mxu0 %v2529
    %2639 = vmatpush.bf16.msra.mxu0 %v2523
    %2640 = vmatmul.bf16.gmra.mxu0 %v2329
    %v2641 = vpop.f32.mrf.mxu0
    %v2642 = vadd.f32 0.0, %v2641
    %v2643 = vpop.f32.mrf.mxu0
    %v2644 = vadd.f32 0.0, %v2643
    %2645 = vdwg.mxu0
    %2646 = vmatpush.bf16.msra.mxu0 %v2566
    %2647 = vmatpush.bf16.msra.mxu0 %v2560
    %2648 = vmatpush.bf16.msra.mxu0 %v2554
    %2649 = vmatpush.bf16.msra.mxu0 %v2548
    %2650 = vmatpush.bf16.msra.mxu0 %v2542
    %2651 = vmatpush.bf16.msra.mxu0 %v2536
    %2652 = vmatpush.bf16.msra.mxu0 %v2530
    %2653 = vmatpush.bf16.msra.mxu0 %v2524
    %2654 = vmatmul.bf16.gmra.mxu0 %v2329
    %v2655 = vpop.f32.mrf.mxu0
    %v2656 = vadd.f32 0.0, %v2655
    %v2657 = vpop.f32.mrf.mxu0
    %v2658 = vadd.f32 0.0, %v2657
    %2659 = vdwg.mxu0
    %2660 = vmatpush.bf16.msra.mxu0 %v2567
    %2661 = vmatpush.bf16.msra.mxu0 %v2561
    %2662 = vmatpush.bf16.msra.mxu0 %v2555
    %2663 = vmatpush.bf16.msra.mxu0 %v2549
    %2664 = vmatpush.bf16.msra.mxu0 %v2543
    %2665 = vmatpush.bf16.msra.mxu0 %v2537
    %2666 = vmatpush.bf16.msra.mxu0 %v2531
    %2667 = vmatpush.bf16.msra.mxu0 %v2525
    %2668 = vmatmul.bf16.gmra.mxu0 %v2329
    %v2669 = vpop.f32.mrf.mxu0
    %v2670 = vadd.f32 0.0, %v2669
    %v2671 = vpop.f32.mrf.mxu0
    %v2672 = vadd.f32 0.0, %v2671
    %2673 = vdwg.mxu0
    %2674 = vmatpush.bf16.msra.mxu0 %v2568
    %2675 = vmatpush.bf16.msra.mxu0 %v2562
    %2676 = vmatpush.bf16.msra.mxu0 %v2556
    %2677 = vmatpush.bf16.msra.mxu0 %v2550
    %2678 = vmatpush.bf16.msra.mxu0 %v2544
    %2679 = vmatpush.bf16.msra.mxu0 %v2538
    %2680 = vmatpush.bf16.msra.mxu0 %v2532
    %2681 = vmatpush.bf16.msra.mxu0 %v2526
    %2682 = vmatmul.bf16.gmra.mxu0 %v2329
    %v2683 = vpop.f32.mrf.mxu0
    %v2684 = vadd.f32 0.0, %v2683
    %v2685 = vpop.f32.mrf.mxu0
    %v2686 = vadd.f32 0.0, %v2685
    %2687 = vdwg.mxu0
    %2688 = vmatpush.bf16.msra.mxu0 %v2569
    %2689 = vmatpush.bf16.msra.mxu0 %v2563
    %2690 = vmatpush.bf16.msra.mxu0 %v2557
    %2691 = vmatpush.bf16.msra.mxu0 %v2551
    %2692 = vmatpush.bf16.msra.mxu0 %v2545
    %2693 = vmatpush.bf16.msra.mxu0 %v2539
    %2694 = vmatpush.bf16.msra.mxu0 %v2533
    %2695 = vmatpush.bf16.msra.mxu0 %v2527
    %2696 = vmatmul.bf16.gmra.mxu0 %v2329
    %v2697 = vpop.f32.mrf.mxu0
    %v2698 = vadd.f32 0.0, %v2697
    %v2699 = vpop.f32.mrf.mxu0
    %v2700 = vadd.f32 0.0, %v2699
    %2701 = vdwg.mxu0
    %v2702 = vld [vmem:[#allocation20] sm:$0x1]
    %v2703 = vrot.slane %v2628, 7
    %v2704 = vrot.slane %v2630, 7
    %v2705 = vsel %vm946, %v2703, %v2704
    %v2706 = vsel %vm946, %v2704, %v2703
    %v2707 = vmul.f32 %v2187, %v2706
    %v2708 = vmul.f32 %v2188, %v2705
    %v2709 = vadd.f32 %v2642, %v2707
    %v2710 = vadd.f32 %v2644, %v2708
    %v2711 = vrot.slane %v2656, 1
    %v2712 = vrot.slane %v2658, 1
    %v2713 = vsel %vm963, %v2711, %v2712
    %v2714 = vsel %vm963, %v2712, %v2711
    %v2715 = vmul.f32 %v2191, %v2713
    %v2716 = vmul.f32 %v2192, %v2714
    %v2717 = vadd.f32 %v2709, %v2715
    %v2718 = vadd.f32 %v2710, %v2716
    %v2720 = vperm.slane %v2702, 0
    %v2722 = vadd.f32 %v2717, %v2720
    %v2723 = vadd.f32 %v2718, %v2720
    %v2724 = vmax.f32 %v2722, 0.0
    %v2725 = vmax.f32 %v2723, 0.0
    %v2726 = vpack.c.bf16 %v2725, %v2724
    %v2727 = vld [vmem:[#allocation28] sm:$0xf]
    %v2728 = vld [vmem:[#allocation28 + $0x4] sm:$0xf]
    %v2729 = vld [vmem:[#allocation28 + $0x8] sm:$0xf]
    %v2730 = vld [vmem:[#allocation28 + $0xc] sm:$0xf]
    %v2731 = vld [vmem:[#allocation28 + $0x10] sm:$0xf]
    %v2732 = vld [vmem:[#allocation28 + $0x14] sm:$0xf]
    %v2733 = vld [vmem:[#allocation28 + $0x18] sm:$0xf]
    %v2734 = vld [vmem:[#allocation28 + $0x1c] sm:$0xf]
    %v2735 = vld [vmem:[#allocation28 + $0x20] sm:$0xf]
    %v2736 = vld [vmem:[#allocation28 + $0x24] sm:$0xf]
    %v2737 = vld [vmem:[#allocation28 + $0x28] sm:$0xf]
    %v2738 = vld [vmem:[#allocation28 + $0x2c] sm:$0xf]
    %v2739 = vld [vmem:[#allocation28 + $0x30] sm:$0xf]
    %v2740 = vld [vmem:[#allocation28 + $0x34] sm:$0xf]
    %v2741 = vld [vmem:[#allocation28 + $0x38] sm:$0xf]
    %v2742 = vld [vmem:[#allocation28 + $0x3c] sm:$0xf]
    %v2743 = vld [vmem:[#allocation22] sm:$0x1]
    %v2745 = vperm.slane %v2743, 0
    %v2763 = vunpack.c.l.b16 %v2727
    %v2764 = vunpack.c.l.b16 %v2728
    %v2765 = vunpack.c.l.b16 %v2729
    %v2766 = vunpack.c.l.b16 %v2730
    %v2767 = vunpack.c.l.b16 %v2731
    %v2768 = vunpack.c.l.b16 %v2732
    %v2769 = vunpack.c.l.b16 %v2733
    %v2770 = vunpack.c.l.b16 %v2734
    %v2771 = vunpack.c.l.b16 %v2735
    %v2772 = vunpack.c.l.b16 %v2736
    %v2773 = vunpack.c.l.b16 %v2737
    %v2774 = vunpack.c.l.b16 %v2738
    %v2775 = vunpack.c.l.b16 %v2739
    %v2776 = vunpack.c.l.b16 %v2740
    %v2777 = vunpack.c.l.b16 %v2741
    %v2778 = vunpack.c.l.b16 %v2742
    %v2779 = vpack.c.b16 %v2764, %v2763
    %v2780 = vpack.c.b16 %v2766, %v2765
    %v2781 = vpack.c.b16 %v2768, %v2767
    %v2782 = vpack.c.b16 %v2770, %v2769
    %v2783 = vpack.c.b16 %v2772, %v2771
    %v2784 = vpack.c.b16 %v2774, %v2773
    %v2785 = vpack.c.b16 %v2776, %v2775
    %v2786 = vpack.c.b16 %v2778, %v2777
    %2795 = vmatpush.bf16.msra.mxu0 %v2786
    %2796 = vmatpush.bf16.msra.mxu0 %v2785
    %2797 = vmatpush.bf16.msra.mxu0 %v2784
    %2798 = vmatpush.bf16.msra.mxu0 %v2783
    %2799 = vmatpush.bf16.msra.mxu0 %v2782
    %2800 = vmatpush.bf16.msra.mxu0 %v2781
    %2801 = vmatpush.bf16.msra.mxu0 %v2780
    %2802 = vmatpush.bf16.msra.mxu0 %v2779
    %2803 = vmatmul.bf16.gmra.mxu0 %v2726
    %v2804 = vpop.f32.mrf.mxu0
    %v2805 = vadd.f32 %v2745, %v2804
    %v2806 = vpop.f32.mrf.mxu0
    %v2807 = vadd.f32 %v2745, %v2806
    %2808 = vdwg.mxu0
    %v2809 = vadd.f32 %v2321, %v2805
    %v2810 = vadd.f32 %v2323, %v2807
    %v2811 = vld [vmem:[#allocation23] sm:$0x1]
    %v2812 = vrot.slane %v2670, 7
    %v2813 = vrot.slane %v2672, 7
    %v2814 = vsel %vm946, %v2812, %v2813
    %v2815 = vsel %vm946, %v2813, %v2812
    %v2816 = vmul.f32 %v2187, %v2815
    %v2817 = vmul.f32 %v2188, %v2814
    %v2818 = vadd.f32 %v2684, %v2816
    %v2819 = vadd.f32 %v2686, %v2817
    %v2820 = vrot.slane %v2698, 1
    %v2821 = vrot.slane %v2700, 1
    %v2822 = vsel %vm963, %v2820, %v2821
    %v2823 = vsel %vm963, %v2821, %v2820
    %v2824 = vmul.f32 %v2191, %v2822
    %v2825 = vmul.f32 %v2192, %v2823
    %v2826 = vadd.f32 %v2818, %v2824
    %v2827 = vadd.f32 %v2819, %v2825
    %v2829 = vperm.slane %v2811, 0
    %v2831 = vadd.f32 %v2826, %v2829
    %v2832 = vadd.f32 %v2827, %v2829
    %v2833 = vadd.f32 %v2831, %v2722
    %v2834 = vadd.f32 %v2832, %v2723
    %v2835 = vmax.f32 %v2809, 0.0
    %v2836 = vmax.f32 %v2810, 0.0
    %v2837 = vpack.c.bf16 %v2836, %v2835
    %v2838 = vld [vmem:[#allocation29] sm:$0xf]
    %v2839 = vld [vmem:[#allocation29 + $0x4] sm:$0xf]
    %v2840 = vld [vmem:[#allocation29 + $0x8] sm:$0xf]
    %v2841 = vld [vmem:[#allocation29 + $0xc] sm:$0xf]
    %v2842 = vld [vmem:[#allocation29 + $0x10] sm:$0xf]
    %v2843 = vld [vmem:[#allocation29 + $0x14] sm:$0xf]
    %v2844 = vld [vmem:[#allocation29 + $0x18] sm:$0xf]
    %v2845 = vld [vmem:[#allocation29 + $0x1c] sm:$0xf]
    %v2846 = vld [vmem:[#allocation29 + $0x20] sm:$0xf]
    %v2847 = vld [vmem:[#allocation29 + $0x24] sm:$0xf]
    %v2848 = vld [vmem:[#allocation29 + $0x28] sm:$0xf]
    %v2849 = vld [vmem:[#allocation29 + $0x2c] sm:$0xf]
    %v2850 = vld [vmem:[#allocation29 + $0x30] sm:$0xf]
    %v2851 = vld [vmem:[#allocation29 + $0x34] sm:$0xf]
    %v2852 = vld [vmem:[#allocation29 + $0x38] sm:$0xf]
    %v2853 = vld [vmem:[#allocation29 + $0x3c] sm:$0xf]
    %v2854 = vld [vmem:[#allocation25] sm:$0x1]
    %v2856 = vperm.slane %v2854, 0
    %v2874 = vunpack.c.l.b16 %v2838
    %v2875 = vunpack.c.l.b16 %v2839
    %v2876 = vunpack.c.l.b16 %v2840
    %v2877 = vunpack.c.l.b16 %v2841
    %v2878 = vunpack.c.l.b16 %v2842
    %v2879 = vunpack.c.l.b16 %v2843
    %v2880 = vunpack.c.l.b16 %v2844
    %v2881 = vunpack.c.l.b16 %v2845
    %v2882 = vunpack.c.l.b16 %v2846
    %v2883 = vunpack.c.l.b16 %v2847
    %v2884 = vunpack.c.l.b16 %v2848
    %v2885 = vunpack.c.l.b16 %v2849
    %v2886 = vunpack.c.l.b16 %v2850
    %v2887 = vunpack.c.l.b16 %v2851
    %v2888 = vunpack.c.l.b16 %v2852
    %v2889 = vunpack.c.l.b16 %v2853
    %v2890 = vpack.c.b16 %v2875, %v2874
    %v2891 = vpack.c.b16 %v2877, %v2876
    %v2892 = vpack.c.b16 %v2879, %v2878
    %v2893 = vpack.c.b16 %v2881, %v2880
    %v2894 = vpack.c.b16 %v2883, %v2882
    %v2895 = vpack.c.b16 %v2885, %v2884
    %v2896 = vpack.c.b16 %v2887, %v2886
    %v2897 = vpack.c.b16 %v2889, %v2888
    %2906 = vmatpush.bf16.msra.mxu0 %v2897
    %2907 = vmatpush.bf16.msra.mxu0 %v2896
    %2908 = vmatpush.bf16.msra.mxu0 %v2895
    %2909 = vmatpush.bf16.msra.mxu0 %v2894
    %2910 = vmatpush.bf16.msra.mxu0 %v2893
    %2911 = vmatpush.bf16.msra.mxu0 %v2892
    %2912 = vmatpush.bf16.msra.mxu0 %v2891
    %2913 = vmatpush.bf16.msra.mxu0 %v2890
    %2914 = vmatmul.bf16.gmra.mxu0 %v2837
    %v2915 = vpop.f32.mrf.mxu0
    %v2916 = vadd.f32 %v2856, %v2915
    %v2917 = vpop.f32.mrf.mxu0
    %v2918 = vadd.f32 %v2856, %v2917
    %2919 = vdwg.mxu0
    %v2920 = vadd.f32 %v2833, %v2916
    %v2921 = vadd.f32 %v2834, %v2918
    %v2922 = vmax.f32 %v2920, 0.0
    %v2923 = vmax.f32 %v2921, 0.0
    %v2924 = vpack.c.bf16 %v2923, %v2922
    %v2925 = vld [vmem:[#allocation31] sm:$0xff]
    %v2926 = vld [vmem:[#allocation31 + $0x8] sm:$0xf]
    %v2927 = vld [vmem:[#allocation31 + $0xc] sm:$0xff]
    %v2928 = vld [vmem:[#allocation31 + $0x14] sm:$0xf]
    %v2929 = vld [vmem:[#allocation31 + $0x18] sm:$0xff]
    %v2930 = vld [vmem:[#allocation31 + $0x20] sm:$0xf]
    %v2931 = vld [vmem:[#allocation31 + $0x24] sm:$0xff]
    %v2932 = vld [vmem:[#allocation31 + $0x2c] sm:$0xf]
    %v2933 = vld [vmem:[#allocation31 + $0x30] sm:$0xff]
    %v2934 = vld [vmem:[#allocation31 + $0x38] sm:$0xf]
    %v2935 = vld [vmem:[#allocation31 + $0x3c] sm:$0xff]
    %v2936 = vld [vmem:[#allocation31 + $0x44] sm:$0xf]
    %v2937 = vld [vmem:[#allocation31 + $0x48] sm:$0xff]
    %v2938 = vld [vmem:[#allocation31 + $0x50] sm:$0xf]
    %v2939 = vld [vmem:[#allocation31 + $0x54] sm:$0xff]
    %v2940 = vld [vmem:[#allocation31 + $0x5c] sm:$0xf]
    %v2941 = vld [vmem:[#allocation31 + $0x60] sm:$0xff]
    %v2942 = vld [vmem:[#allocation31 + $0x68] sm:$0xf]
    %v2943 = vld [vmem:[#allocation31 + $0x6c] sm:$0xff]
    %v2944 = vld [vmem:[#allocation31 + $0x74] sm:$0xf]
    %v2945 = vld [vmem:[#allocation31 + $0x78] sm:$0xff]
    %v2946 = vld [vmem:[#allocation31 + $0x80] sm:$0xf]
    %v2947 = vld [vmem:[#allocation31 + $0x84] sm:$0xff]
    %v2948 = vld [vmem:[#allocation31 + $0x8c] sm:$0xf]
    %v2949 = vld [vmem:[#allocation31 + $0x90] sm:$0xff]
    %v2950 = vld [vmem:[#allocation31 + $0x98] sm:$0xf]
    %v2951 = vld [vmem:[#allocation31 + $0x9c] sm:$0xff]
    %v2952 = vld [vmem:[#allocation31 + $0xa4] sm:$0xf]
    %v2953 = vld [vmem:[#allocation31 + $0xa8] sm:$0xff]
    %v2954 = vld [vmem:[#allocation31 + $0xb0] sm:$0xf]
    %v2955 = vld [vmem:[#allocation31 + $0xb4] sm:$0xff]
    %v2956 = vld [vmem:[#allocation31 + $0xbc] sm:$0xf]
    %v2989 = vunpack.c.l.b16 %v2925
    %v2990 = vunpack.c.h.b16 %v2925
    %v2991 = vunpack.c.l.b16 %v2926
    %v2992 = vunpack.c.l.b16 %v2927
    %v2993 = vunpack.c.h.b16 %v2927
    %v2994 = vunpack.c.l.b16 %v2928
    %v2995 = vunpack.c.l.b16 %v2929
    %v2996 = vunpack.c.h.b16 %v2929
    %v2997 = vunpack.c.l.b16 %v2930
    %v2998 = vunpack.c.l.b16 %v2931
    %v2999 = vunpack.c.h.b16 %v2931
    %v3000 = vunpack.c.l.b16 %v2932
    %v3001 = vunpack.c.l.b16 %v2933
    %v3002 = vunpack.c.h.b16 %v2933
    %v3003 = vunpack.c.l.b16 %v2934
    %v3004 = vunpack.c.l.b16 %v2935
    %v3005 = vunpack.c.h.b16 %v2935
    %v3006 = vunpack.c.l.b16 %v2936
    %v3007 = vunpack.c.l.b16 %v2937
    %v3008 = vunpack.c.h.b16 %v2937
    %v3009 = vunpack.c.l.b16 %v2938
    %v3010 = vunpack.c.l.b16 %v2939
    %v3011 = vunpack.c.h.b16 %v2939
    %v3012 = vunpack.c.l.b16 %v2940
    %v3013 = vunpack.c.l.b16 %v2941
    %v3014 = vunpack.c.h.b16 %v2941
    %v3015 = vunpack.c.l.b16 %v2942
    %v3016 = vunpack.c.l.b16 %v2943
    %v3017 = vunpack.c.h.b16 %v2943
    %v3018 = vunpack.c.l.b16 %v2944
    %v3019 = vunpack.c.l.b16 %v2945
    %v3020 = vunpack.c.h.b16 %v2945
    %v3021 = vunpack.c.l.b16 %v2946
    %v3022 = vunpack.c.l.b16 %v2947
    %v3023 = vunpack.c.h.b16 %v2947
    %v3024 = vunpack.c.l.b16 %v2948
    %v3025 = vunpack.c.l.b16 %v2949
    %v3026 = vunpack.c.h.b16 %v2949
    %v3027 = vunpack.c.l.b16 %v2950
    %v3028 = vunpack.c.l.b16 %v2951
    %v3029 = vunpack.c.h.b16 %v2951
    %v3030 = vunpack.c.l.b16 %v2952
    %v3031 = vunpack.c.l.b16 %v2953
    %v3032 = vunpack.c.h.b16 %v2953
    %v3033 = vunpack.c.l.b16 %v2954
    %v3034 = vunpack.c.l.b16 %v2955
    %v3035 = vunpack.c.h.b16 %v2955
    %v3036 = vunpack.c.l.b16 %v2956
    %v3037 = vpack.c.b16 %v2992, %v2989
    %v3038 = vpack.c.b16 %v2993, %v2990
    %v3039 = vpack.c.b16 %v2994, %v2991
    %v3040 = vpack.c.b16 %v2998, %v2995
    %v3041 = vpack.c.b16 %v2999, %v2996
    %v3042 = vpack.c.b16 %v3000, %v2997
    %v3043 = vpack.c.b16 %v3004, %v3001
    %v3044 = vpack.c.b16 %v3005, %v3002
    %v3045 = vpack.c.b16 %v3006, %v3003
    %v3046 = vpack.c.b16 %v3010, %v3007
    %v3047 = vpack.c.b16 %v3011, %v3008
    %v3048 = vpack.c.b16 %v3012, %v3009
    %v3049 = vpack.c.b16 %v3016, %v3013
    %v3050 = vpack.c.b16 %v3017, %v3014
    %v3051 = vpack.c.b16 %v3018, %v3015
    %v3052 = vpack.c.b16 %v3022, %v3019
    %v3053 = vpack.c.b16 %v3023, %v3020
    %v3054 = vpack.c.b16 %v3024, %v3021
    %v3055 = vpack.c.b16 %v3028, %v3025
    %v3056 = vpack.c.b16 %v3029, %v3026
    %v3057 = vpack.c.b16 %v3030, %v3027
    %v3058 = vpack.c.b16 %v3034, %v3031
    %v3059 = vpack.c.b16 %v3035, %v3032
    %v3060 = vpack.c.b16 %v3036, %v3033
    %3085 = vmatpush.bf16.msra.mxu0 %v3058
    %3086 = vmatpush.bf16.msra.mxu0 %v3055
    %3087 = vmatpush.bf16.msra.mxu0 %v3052
    %3088 = vmatpush.bf16.msra.mxu0 %v3049
    %3089 = vmatpush.bf16.msra.mxu0 %v3046
    %3090 = vmatpush.bf16.msra.mxu0 %v3043
    %3091 = vmatpush.bf16.msra.mxu0 %v3040
    %3092 = vmatpush.bf16.msra.mxu0 %v3037
    %3093 = vmatmul.bf16.gmra.mxu0 %v2924
    %v3094 = vpop.f32.mrf.mxu0
    %v3095 = vadd.f32 0.0, %v3094
    %v3096 = vpop.f32.mrf.mxu0
    %v3097 = vadd.f32 0.0, %v3096
    %3098 = vdwg.mxu0
    %3099 = vmatpush.bf16.msra.mxu0 %v3059
    %3100 = vmatpush.bf16.msra.mxu0 %v3056
    %3101 = vmatpush.bf16.msra.mxu0 %v3053
    %3102 = vmatpush.bf16.msra.mxu0 %v3050
    %3103 = vmatpush.bf16.msra.mxu0 %v3047
    %3104 = vmatpush.bf16.msra.mxu0 %v3044
    %3105 = vmatpush.bf16.msra.mxu0 %v3041
    %3106 = vmatpush.bf16.msra.mxu0 %v3038
    %3107 = vmatmul.bf16.gmra.mxu0 %v2924
    %v3108 = vpop.f32.mrf.mxu0
    %v3109 = vadd.f32 0.0, %v3108
    %v3110 = vpop.f32.mrf.mxu0
    %v3111 = vadd.f32 0.0, %v3110
    %3112 = vdwg.mxu0
    %3113 = vmatpush.bf16.msra.mxu0 %v3060
    %3114 = vmatpush.bf16.msra.mxu0 %v3057
    %3115 = vmatpush.bf16.msra.mxu0 %v3054
    %3116 = vmatpush.bf16.msra.mxu0 %v3051
    %3117 = vmatpush.bf16.msra.mxu0 %v3048
    %3118 = vmatpush.bf16.msra.mxu0 %v3045
    %3119 = vmatpush.bf16.msra.mxu0 %v3042
    %3120 = vmatpush.bf16.msra.mxu0 %v3039
    %3121 = vmatmul.bf16.gmra.mxu0 %v2924
    %v3122 = vpop.f32.mrf.mxu0
    %v3123 = vadd.f32 0.0, %v3122
    %v3124 = vpop.f32.mrf.mxu0
    %v3125 = vadd.f32 0.0, %v3124
    %3126 = vdwg.mxu0
    %v3127 = vld [vmem:[#allocation34] sm:$0xf]
    %v3128 = vld [vmem:[#allocation32] sm:$0x1]
    %v3129 = vrot.slane %v3095, 7
    %v3130 = vrot.slane %v3097, 7
    %v3131 = vsel %vm946, %v3129, %v3130
    %v3132 = vsel %vm946, %v3130, %v3129
    %v3133 = vmul.f32 %v2187, %v3132
    %v3134 = vmul.f32 %v2188, %v3131
    %v3135 = vadd.f32 %v3109, %v3133
    %v3136 = vadd.f32 %v3111, %v3134
    %v3137 = vrot.slane %v3123, 1
    %v3138 = vrot.slane %v3125, 1
    %v3139 = vsel %vm963, %v3137, %v3138
    %v3140 = vsel %vm963, %v3138, %v3137
    %v3141 = vmul.f32 %v2191, %v3139
    %v3142 = vmul.f32 %v2192, %v3140
    %v3143 = vadd.f32 %v3135, %v3141
    %v3144 = vadd.f32 %v3136, %v3142
    %v3145 = vpack.c.bf16 %v3144, %v3143
    %v3147 = vperm.slane %v3128, 0
    %vm3149 = vcmask 130048
    %v3151 = vsel %vm3149, %v3127, 0
    %3153 = vmatpush.bf16.msra.mxu0 0
    %3154 = vmatpush.bf16.msra.mxu0 0
    %3155 = vmatpush.bf16.msra.mxu0 0
    %3156 = vmatpush.bf16.msra.mxu0 0
    %3157 = vmatpush.bf16.msra.mxu0 0
    %3158 = vmatpush.bf16.msra.mxu0 0
    %3159 = vmatpush.bf16.msra.mxu0 0
    %3160 = vmatpush.bf16.msra.mxu0 %v3145
    %3161 = vmatmul.bf16.gmra.mxu0 %v3151
    %v3162 = vpop.f32.mrf.mxu0
    %v3163 = vadd.f32 %v3147, %v3162
    %v3164 = vpop.f32.mrf.mxu0
    %3165 = vdwg.mxu0
    %v3166 = vmax.f32 %v3163, 0.0
    %v3167 = vpack.c.bf16 %v3166, %v3166
    %v3168 = vld [vmem:[#allocation35] sm:$0xff]
    %v3169 = vld [vmem:[#allocation35 + $0x8] sm:$0xf]
    %v3170 = vld [vmem:[#allocation35 + $0xc] sm:$0xff]
    %v3171 = vld [vmem:[#allocation35 + $0x14] sm:$0xf]
    %v3172 = vld [vmem:[#allocation35 + $0x18] sm:$0xff]
    %v3173 = vld [vmem:[#allocation35 + $0x20] sm:$0xf]
    %v3174 = vld [vmem:[#allocation35 + $0x24] sm:$0xff]
    %v3175 = vld [vmem:[#allocation35 + $0x2c] sm:$0xf]
    %v3176 = vld [vmem:[#allocation35 + $0x30] sm:$0xff]
    %v3177 = vld [vmem:[#allocation35 + $0x38] sm:$0xf]
    %v3178 = vld [vmem:[#allocation35 + $0x3c] sm:$0xff]
    %v3179 = vld [vmem:[#allocation35 + $0x44] sm:$0xf]
    %v3180 = vld [vmem:[#allocation35 + $0x48] sm:$0xff]
    %v3181 = vld [vmem:[#allocation35 + $0x50] sm:$0xf]
    %v3182 = vld [vmem:[#allocation35 + $0x54] sm:$0xff]
    %v3183 = vld [vmem:[#allocation35 + $0x5c] sm:$0xf]
    %v3184 = vld [vmem:[#allocation35 + $0x60] sm:$0xff]
    %v3185 = vld [vmem:[#allocation35 + $0x68] sm:$0xf]
    %v3186 = vld [vmem:[#allocation35 + $0x6c] sm:$0xff]
    %v3187 = vld [vmem:[#allocation35 + $0x74] sm:$0xf]
    %v3188 = vld [vmem:[#allocation35 + $0x78] sm:$0xff]
    %v3189 = vld [vmem:[#allocation35 + $0x80] sm:$0xf]
    %v3190 = vld [vmem:[#allocation35 + $0x84] sm:$0xff]
    %v3191 = vld [vmem:[#allocation35 + $0x8c] sm:$0xf]
    %v3192 = vld [vmem:[#allocation35 + $0x90] sm:$0xff]
    %v3193 = vld [vmem:[#allocation35 + $0x98] sm:$0xf]
    %v3194 = vld [vmem:[#allocation35 + $0x9c] sm:$0xff]
    %v3195 = vld [vmem:[#allocation35 + $0xa4] sm:$0xf]
    %v3196 = vld [vmem:[#allocation35 + $0xa8] sm:$0xff]
    %v3197 = vld [vmem:[#allocation35 + $0xb0] sm:$0xf]
    %v3198 = vld [vmem:[#allocation35 + $0xb4] sm:$0xff]
    %v3199 = vld [vmem:[#allocation35 + $0xbc] sm:$0xf]
    %v3232 = vunpack.c.l.b16 %v3168
    %v3233 = vunpack.c.h.b16 %v3168
    %v3234 = vunpack.c.l.b16 %v3169
    %v3235 = vunpack.c.l.b16 %v3170
    %v3236 = vunpack.c.h.b16 %v3170
    %v3237 = vunpack.c.l.b16 %v3171
    %v3238 = vunpack.c.l.b16 %v3172
    %v3239 = vunpack.c.h.b16 %v3172
    %v3240 = vunpack.c.l.b16 %v3173
    %v3241 = vunpack.c.l.b16 %v3174
    %v3242 = vunpack.c.h.b16 %v3174
    %v3243 = vunpack.c.l.b16 %v3175
    %v3244 = vunpack.c.l.b16 %v3176
    %v3245 = vunpack.c.h.b16 %v3176
    %v3246 = vunpack.c.l.b16 %v3177
    %v3247 = vunpack.c.l.b16 %v3178
    %v3248 = vunpack.c.h.b16 %v3178
    %v3249 = vunpack.c.l.b16 %v3179
    %v3250 = vunpack.c.l.b16 %v3180
    %v3251 = vunpack.c.h.b16 %v3180
    %v3252 = vunpack.c.l.b16 %v3181
    %v3253 = vunpack.c.l.b16 %v3182
    %v3254 = vunpack.c.h.b16 %v3182
    %v3255 = vunpack.c.l.b16 %v3183
    %v3256 = vunpack.c.l.b16 %v3184
    %v3257 = vunpack.c.h.b16 %v3184
    %v3258 = vunpack.c.l.b16 %v3185
    %v3259 = vunpack.c.l.b16 %v3186
    %v3260 = vunpack.c.h.b16 %v3186
    %v3261 = vunpack.c.l.b16 %v3187
    %v3262 = vunpack.c.l.b16 %v3188
    %v3263 = vunpack.c.h.b16 %v3188
    %v3264 = vunpack.c.l.b16 %v3189
    %v3265 = vunpack.c.l.b16 %v3190
    %v3266 = vunpack.c.h.b16 %v3190
    %v3267 = vunpack.c.l.b16 %v3191
    %v3268 = vunpack.c.l.b16 %v3192
    %v3269 = vunpack.c.h.b16 %v3192
    %v3270 = vunpack.c.l.b16 %v3193
    %v3271 = vunpack.c.l.b16 %v3194
    %v3272 = vunpack.c.h.b16 %v3194
    %v3273 = vunpack.c.l.b16 %v3195
    %v3274 = vunpack.c.l.b16 %v3196
    %v3275 = vunpack.c.h.b16 %v3196
    %v3276 = vunpack.c.l.b16 %v3197
    %v3277 = vunpack.c.l.b16 %v3198
    %v3278 = vunpack.c.h.b16 %v3198
    %v3279 = vunpack.c.l.b16 %v3199
    %v3280 = vpack.c.b16 %v3235, %v3232
    %v3281 = vpack.c.b16 %v3236, %v3233
    %v3282 = vpack.c.b16 %v3237, %v3234
    %v3283 = vpack.c.b16 %v3241, %v3238
    %v3284 = vpack.c.b16 %v3242, %v3239
    %v3285 = vpack.c.b16 %v3243, %v3240
    %v3286 = vpack.c.b16 %v3247, %v3244
    %v3287 = vpack.c.b16 %v3248, %v3245
    %v3288 = vpack.c.b16 %v3249, %v3246
    %v3289 = vpack.c.b16 %v3253, %v3250
    %v3290 = vpack.c.b16 %v3254, %v3251
    %v3291 = vpack.c.b16 %v3255, %v3252
    %v3292 = vpack.c.b16 %v3259, %v3256
    %v3293 = vpack.c.b16 %v3260, %v3257
    %v3294 = vpack.c.b16 %v3261, %v3258
    %v3295 = vpack.c.b16 %v3265, %v3262
    %v3296 = vpack.c.b16 %v3266, %v3263
    %v3297 = vpack.c.b16 %v3267, %v3264
    %v3298 = vpack.c.b16 %v3271, %v3268
    %v3299 = vpack.c.b16 %v3272, %v3269
    %v3300 = vpack.c.b16 %v3273, %v3270
    %v3301 = vpack.c.b16 %v3277, %v3274
    %v3302 = vpack.c.b16 %v3278, %v3275
    %v3303 = vpack.c.b16 %v3279, %v3276
    %3328 = vmatpush.bf16.msra.mxu0 %v3301
    %3329 = vmatpush.bf16.msra.mxu0 %v3298
    %3330 = vmatpush.bf16.msra.mxu0 %v3295
    %3331 = vmatpush.bf16.msra.mxu0 %v3292
    %3332 = vmatpush.bf16.msra.mxu0 %v3289
    %3333 = vmatpush.bf16.msra.mxu0 %v3286
    %3334 = vmatpush.bf16.msra.mxu0 %v3283
    %3335 = vmatpush.bf16.msra.mxu0 %v3280
    %3336 = vmatmul.bf16.gmra.mxu0 %v3167
    %v3337 = vpop.f32.mrf.mxu0
    %v3338 = vadd.f32 0.0, %v3337
    %v3339 = vpop.f32.mrf.mxu0
    %3340 = vdwg.mxu0
    %3341 = vmatpush.bf16.msra.mxu0 %v3302
    %3342 = vmatpush.bf16.msra.mxu0 %v3299
    %3343 = vmatpush.bf16.msra.mxu0 %v3296
    %3344 = vmatpush.bf16.msra.mxu0 %v3293
    %3345 = vmatpush.bf16.msra.mxu0 %v3290
    %3346 = vmatpush.bf16.msra.mxu0 %v3287
    %3347 = vmatpush.bf16.msra.mxu0 %v3284
    %3348 = vmatpush.bf16.msra.mxu0 %v3281
    %3349 = vmatmul.bf16.gmra.mxu0 %v3167
    %v3350 = vpop.f32.mrf.mxu0
    %v3351 = vadd.f32 0.0, %v3350
    %v3352 = vpop.f32.mrf.mxu0
    %3353 = vdwg.mxu0
    %3354 = vmatpush.bf16.msra.mxu0 %v3303
    %3355 = vmatpush.bf16.msra.mxu0 %v3300
    %3356 = vmatpush.bf16.msra.mxu0 %v3297
    %3357 = vmatpush.bf16.msra.mxu0 %v3294
    %3358 = vmatpush.bf16.msra.mxu0 %v3291
    %3359 = vmatpush.bf16.msra.mxu0 %v3288
    %3360 = vmatpush.bf16.msra.mxu0 %v3285
    %3361 = vmatpush.bf16.msra.mxu0 %v3282
    %3362 = vmatmul.bf16.gmra.mxu0 %v3167
    %v3363 = vpop.f32.mrf.mxu0
    %v3364 = vadd.f32 0.0, %v3363
    %v3365 = vpop.f32.mrf.mxu0
    %3366 = vdwg.mxu0
    %v3367 = vld [vmem:[#allocation37] sm:$0x1]
    %vm3368 = vcmp.lt.s32.totalorder %v874, 0
    %v3369 = vsub.s32 0, %v874
    %v3370 = vsel %vm3368, %v3369, %v874
    %v3371 = vshrl.u32 %v3370, 2
    %v3372 = vand.u32 %v3370, 3
    %v3373 = vsub.s32 0, %v3372
    %v3374 = vsel %vm3368, %v3373, %v3372
    %vm3375 = vcmp.ne.s32.totalorder %v3374, 0
    %vm3376 = vcmp.lt.s32.totalorder %v3374, 0
    %vm3377 = vmand %vm3376, %vm3375
    %v3378 = vadd.s32 %v3374, 4
    %v3379 = vsel %vm3377, %v3378, %v3374
    %vm3380 = vcmp.ne.s32.totalorder %v3379, 0
    %v3381 = vsel %vm3380, 1.0, 0.0
    %vm3382 = vcmp.ne.s32.totalorder %v3379, 3
    %v3383 = vsel %vm3382, 1.0, 0.0
    %v3384 = vrot.slane %v3338, 7
    %v3385 = vmul.f32 %v3381, %v3384
    %v3386 = vadd.f32 %v3351, %v3385
    %v3387 = vrot.slane %v3364, 1
    %v3388 = vmul.f32 %v3383, %v3387
    %v3389 = vadd.f32 %v3386, %v3388
    %v3391 = vperm.slane %v3367, 0
    %v3393 = vadd.f32 %v3389, %v3391
    %v3394 = vpack.c.bf16 %v2921, %v2920
    %v3395 = vld [vmem:[#allocation38] sm:$0xf]
    %v3396 = vld [vmem:[#allocation38 + $0x4] sm:$0xf]
    %v3397 = vld [vmem:[#allocation38 + $0x8] sm:$0xf]
    %v3398 = vld [vmem:[#allocation38 + $0xc] sm:$0xf]
    %v3399 = vld [vmem:[#allocation38 + $0x10] sm:$0xf]
    %v3400 = vld [vmem:[#allocation38 + $0x14] sm:$0xf]
    %v3401 = vld [vmem:[#allocation38 + $0x18] sm:$0xf]
    %v3402 = vld [vmem:[#allocation38 + $0x1c] sm:$0xf]
    %v3403 = vld [vmem:[#allocation38 + $0x20] sm:$0xf]
    %v3404 = vld [vmem:[#allocation38 + $0x24] sm:$0xf]
    %v3405 = vld [vmem:[#allocation38 + $0x28] sm:$0xf]
    %v3406 = vld [vmem:[#allocation38 + $0x2c] sm:$0xf]
    %v3407 = vld [vmem:[#allocation38 + $0x30] sm:$0xf]
    %v3408 = vld [vmem:[#allocation38 + $0x34] sm:$0xf]
    %v3409 = vld [vmem:[#allocation38 + $0x38] sm:$0xf]
    %v3410 = vld [vmem:[#allocation38 + $0x3c] sm:$0xf]
    %v3427 = vunpack.c.l.b16 %v3395
    %v3428 = vunpack.c.l.b16 %v3396
    %v3429 = vunpack.c.l.b16 %v3397
    %v3430 = vunpack.c.l.b16 %v3398
    %v3431 = vunpack.c.l.b16 %v3399
    %v3432 = vunpack.c.l.b16 %v3400
    %v3433 = vunpack.c.l.b16 %v3401
    %v3434 = vunpack.c.l.b16 %v3402
    %v3435 = vunpack.c.l.b16 %v3403
    %v3436 = vunpack.c.l.b16 %v3404
    %v3437 = vunpack.c.l.b16 %v3405
    %v3438 = vunpack.c.l.b16 %v3406
    %v3439 = vunpack.c.l.b16 %v3407
    %v3440 = vunpack.c.l.b16 %v3408
    %v3441 = vunpack.c.l.b16 %v3409
    %v3442 = vunpack.c.l.b16 %v3410
    %v3443 = vpack.c.b16 %v3428, %v3427
    %v3444 = vpack.c.b16 %v3430, %v3429
    %v3445 = vpack.c.b16 %v3432, %v3431
    %v3446 = vpack.c.b16 %v3434, %v3433
    %v3447 = vpack.c.b16 %v3436, %v3435
    %v3448 = vpack.c.b16 %v3438, %v3437
    %v3449 = vpack.c.b16 %v3440, %v3439
    %v3450 = vpack.c.b16 %v3442, %v3441
    %3459 = vmatpush.bf16.msra.mxu0 %v3450
    %3460 = vmatpush.bf16.msra.mxu0 %v3449
    %3461 = vmatpush.bf16.msra.mxu0 %v3448
    %3462 = vmatpush.bf16.msra.mxu0 %v3447
    %3463 = vmatpush.bf16.msra.mxu0 %v3446
    %3464 = vmatpush.bf16.msra.mxu0 %v3445
    %3465 = vmatpush.bf16.msra.mxu0 %v3444
    %3466 = vmatpush.bf16.msra.mxu0 %v3443
    %3467 = vmatmul.bf16.gmra.mxu0 %v3394
    %v3468 = vpop.f32.mrf.mxu0
    %v3469 = vadd.f32 0.0, %v3468
    %v3470 = vpop.f32.mrf.mxu0
    %v3471 = vadd.f32 0.0, %v3470
    %3472 = vdwg.mxu0
    %v3473 = vld [vmem:[#allocation40] sm:$0xf]
    %v3474 = vpack.c.bf16 %v3471, %v3469
    %v3476 = vsel %vm3149, %v3473, 0
    %3478 = vmatpush.bf16.msra.mxu0 0
    %3479 = vmatpush.bf16.msra.mxu0 0
    %3480 = vmatpush.bf16.msra.mxu0 0
    %3481 = vmatpush.bf16.msra.mxu0 0
    %3482 = vmatpush.bf16.msra.mxu0 0
    %3483 = vmatpush.bf16.msra.mxu0 0
    %3484 = vmatpush.bf16.msra.mxu0 0
    %3485 = vmatpush.bf16.msra.mxu0 %v3474
    %3486 = vmatmul.bf16.gmra.mxu0 %v3476
    %v3487 = vpop.f32.mrf.mxu0
    %v3488 = vadd.f32 %v3393, %v3487
    %v3489 = vpop.f32.mrf.mxu0
    %3490 = vdwg.mxu0
    %3491 = vst [vmem:[%s95] sm:$0xff] %v3488
    %v3492 = vmax.f32 %v3488, 0.0
    %v3493 = vpack.c.bf16 %v3492, %v3492
    %v3494 = vld [vmem:[#allocation47] sm:$0xff]
    %v3495 = vld [vmem:[#allocation47 + $0x8] sm:$0xff]
    %v3496 = vld [vmem:[#allocation47 + $0x10] sm:$0xff]
    %v3497 = vld [vmem:[#allocation47 + $0x18] sm:$0xff]
    %v3498 = vld [vmem:[#allocation47 + $0x20] sm:$0xff]
    %v3499 = vld [vmem:[#allocation47 + $0x28] sm:$0xff]
    %v3500 = vld [vmem:[#allocation47 + $0x30] sm:$0xff]
    %v3501 = vld [vmem:[#allocation47 + $0x38] sm:$0xff]
    %v3502 = vld [vmem:[#allocation47 + $0x40] sm:$0xff]
    %v3503 = vld [vmem:[#allocation47 + $0x48] sm:$0xff]
    %v3504 = vld [vmem:[#allocation47 + $0x50] sm:$0xff]
    %v3505 = vld [vmem:[#allocation47 + $0x58] sm:$0xff]
    %v3506 = vld [vmem:[#allocation47 + $0x60] sm:$0xff]
    %v3507 = vld [vmem:[#allocation47 + $0x68] sm:$0xff]
    %v3508 = vld [vmem:[#allocation47 + $0x70] sm:$0xff]
    %v3509 = vld [vmem:[#allocation47 + $0x78] sm:$0xff]
    %v3510 = vld [vmem:[#allocation47 + $0x80] sm:$0xff]
    %v3511 = vld [vmem:[#allocation47 + $0x88] sm:$0xff]
    %v3512 = vld [vmem:[#allocation47 + $0x90] sm:$0xff]
    %v3513 = vld [vmem:[#allocation47 + $0x98] sm:$0xff]
    %v3514 = vld [vmem:[#allocation47 + $0xa0] sm:$0xff]
    %v3515 = vld [vmem:[#allocation47 + $0xa8] sm:$0xff]
    %v3516 = vld [vmem:[#allocation47 + $0xb0] sm:$0xff]
    %v3517 = vld [vmem:[#allocation47 + $0xb8] sm:$0xff]
    %v3518 = vld [vmem:[#allocation47 + $0xc0] sm:$0xff]
    %v3519 = vld [vmem:[#allocation47 + $0xc8] sm:$0xff]
    %v3520 = vld [vmem:[#allocation47 + $0xd0] sm:$0xff]
    %v3521 = vld [vmem:[#allocation47 + $0xd8] sm:$0xff]
    %v3522 = vld [vmem:[#allocation47 + $0xe0] sm:$0xff]
    %v3523 = vld [vmem:[#allocation47 + $0xe8] sm:$0xff]
    %v3524 = vld [vmem:[#allocation47 + $0xf0] sm:$0xff]
    %v3525 = vld [vmem:[#allocation47 + $0xf8] sm:$0xff]
    %v3526 = vld [vmem:[#allocation47 + $0x100] sm:$0xff]
    %v3527 = vld [vmem:[#allocation47 + $0x108] sm:$0xff]
    %v3528 = vld [vmem:[#allocation47 + $0x110] sm:$0xff]
    %v3529 = vld [vmem:[#allocation47 + $0x118] sm:$0xff]
    %v3530 = vld [vmem:[#allocation47 + $0x120] sm:$0xff]
    %v3531 = vld [vmem:[#allocation47 + $0x128] sm:$0xff]
    %v3532 = vld [vmem:[#allocation47 + $0x130] sm:$0xff]
    %v3533 = vld [vmem:[#allocation47 + $0x138] sm:$0xff]
    %v3534 = vld [vmem:[#allocation47 + $0x140] sm:$0xff]
    %v3535 = vld [vmem:[#allocation47 + $0x148] sm:$0xff]
    %v3536 = vld [vmem:[#allocation47 + $0x150] sm:$0xff]
    %v3537 = vld [vmem:[#allocation47 + $0x158] sm:$0xff]
    %v3538 = vld [vmem:[#allocation47 + $0x160] sm:$0xff]
    %v3539 = vld [vmem:[#allocation47 + $0x168] sm:$0xff]
    %v3540 = vld [vmem:[#allocation47 + $0x170] sm:$0xff]
    %v3541 = vld [vmem:[#allocation47 + $0x178] sm:$0xff]
    %v3590 = vunpack.c.l.b16 %v3494
    %v3591 = vunpack.c.h.b16 %v3494
    %v3592 = vunpack.c.l.b16 %v3495
    %v3593 = vunpack.c.h.b16 %v3495
    %v3594 = vunpack.c.l.b16 %v3496
    %v3595 = vunpack.c.h.b16 %v3496
    %v3596 = vunpack.c.l.b16 %v3497
    %v3597 = vunpack.c.h.b16 %v3497
    %v3598 = vunpack.c.l.b16 %v3498
    %v3599 = vunpack.c.h.b16 %v3498
    %v3600 = vunpack.c.l.b16 %v3499
    %v3601 = vunpack.c.h.b16 %v3499
    %v3602 = vunpack.c.l.b16 %v3500
    %v3603 = vunpack.c.h.b16 %v3500
    %v3604 = vunpack.c.l.b16 %v3501
    %v3605 = vunpack.c.h.b16 %v3501
    %v3606 = vunpack.c.l.b16 %v3502
    %v3607 = vunpack.c.h.b16 %v3502
    %v3608 = vunpack.c.l.b16 %v3503
    %v3609 = vunpack.c.h.b16 %v3503
    %v3610 = vunpack.c.l.b16 %v3504
    %v3611 = vunpack.c.h.b16 %v3504
    %v3612 = vunpack.c.l.b16 %v3505
    %v3613 = vunpack.c.h.b16 %v3505
    %v3614 = vunpack.c.l.b16 %v3506
    %v3615 = vunpack.c.h.b16 %v3506
    %v3616 = vunpack.c.l.b16 %v3507
    %v3617 = vunpack.c.h.b16 %v3507
    %v3618 = vunpack.c.l.b16 %v3508
    %v3619 = vunpack.c.h.b16 %v3508
    %v3620 = vunpack.c.l.b16 %v3509
    %v3621 = vunpack.c.h.b16 %v3509
    %v3622 = vunpack.c.l.b16 %v3510
    %v3623 = vunpack.c.h.b16 %v3510
    %v3624 = vunpack.c.l.b16 %v3511
    %v3625 = vunpack.c.h.b16 %v3511
    %v3626 = vunpack.c.l.b16 %v3512
    %v3627 = vunpack.c.h.b16 %v3512
    %v3628 = vunpack.c.l.b16 %v3513
    %v3629 = vunpack.c.h.b16 %v3513
    %v3630 = vunpack.c.l.b16 %v3514
    %v3631 = vunpack.c.h.b16 %v3514
    %v3632 = vunpack.c.l.b16 %v3515
    %v3633 = vunpack.c.h.b16 %v3515
    %v3634 = vunpack.c.l.b16 %v3516
    %v3635 = vunpack.c.h.b16 %v3516
    %v3636 = vunpack.c.l.b16 %v3517
    %v3637 = vunpack.c.h.b16 %v3517
    %v3638 = vunpack.c.l.b16 %v3518
    %v3639 = vunpack.c.h.b16 %v3518
    %v3640 = vunpack.c.l.b16 %v3519
    %v3641 = vunpack.c.h.b16 %v3519
    %v3642 = vunpack.c.l.b16 %v3520
    %v3643 = vunpack.c.h.b16 %v3520
    %v3644 = vunpack.c.l.b16 %v3521
    %v3645 = vunpack.c.h.b16 %v3521
    %v3646 = vunpack.c.l.b16 %v3522
    %v3647 = vunpack.c.h.b16 %v3522
    %v3648 = vunpack.c.l.b16 %v3523
    %v3649 = vunpack.c.h.b16 %v3523
    %v3650 = vunpack.c.l.b16 %v3524
    %v3651 = vunpack.c.h.b16 %v3524
    %v3652 = vunpack.c.l.b16 %v3525
    %v3653 = vunpack.c.h.b16 %v3525
    %v3654 = vunpack.c.l.b16 %v3526
    %v3655 = vunpack.c.h.b16 %v3526
    %v3656 = vunpack.c.l.b16 %v3527
    %v3657 = vunpack.c.h.b16 %v3527
    %v3658 = vunpack.c.l.b16 %v3528
    %v3659 = vunpack.c.h.b16 %v3528
    %v3660 = vunpack.c.l.b16 %v3529
    %v3661 = vunpack.c.h.b16 %v3529
    %v3662 = vunpack.c.l.b16 %v3530
    %v3663 = vunpack.c.h.b16 %v3530
    %v3664 = vunpack.c.l.b16 %v3531
    %v3665 = vunpack.c.h.b16 %v3531
    %v3666 = vunpack.c.l.b16 %v3532
    %v3667 = vunpack.c.h.b16 %v3532
    %v3668 = vunpack.c.l.b16 %v3533
    %v3669 = vunpack.c.h.b16 %v3533
    %v3670 = vunpack.c.l.b16 %v3534
    %v3671 = vunpack.c.h.b16 %v3534
    %v3672 = vunpack.c.l.b16 %v3535
    %v3673 = vunpack.c.h.b16 %v3535
    %v3674 = vunpack.c.l.b16 %v3536
    %v3675 = vunpack.c.h.b16 %v3536
    %v3676 = vunpack.c.l.b16 %v3537
    %v3677 = vunpack.c.h.b16 %v3537
    %v3678 = vunpack.c.l.b16 %v3538
    %v3679 = vunpack.c.h.b16 %v3538
    %v3680 = vunpack.c.l.b16 %v3539
    %v3681 = vunpack.c.h.b16 %v3539
    %v3682 = vunpack.c.l.b16 %v3540
    %v3683 = vunpack.c.h.b16 %v3540
    %v3684 = vunpack.c.l.b16 %v3541
    %v3685 = vunpack.c.h.b16 %v3541
    %v3686 = vpack.c.b16 %v3596, %v3590
    %v3687 = vpack.c.b16 %v3597, %v3591
    %v3688 = vpack.c.b16 %v3598, %v3592
    %v3689 = vpack.c.b16 %v3599, %v3593
    %v3690 = vpack.c.b16 %v3600, %v3594
    %v3691 = vpack.c.b16 %v3601, %v3595
    %v3692 = vpack.c.b16 %v3608, %v3602
    %v3693 = vpack.c.b16 %v3609, %v3603
    %v3694 = vpack.c.b16 %v3610, %v3604
    %v3695 = vpack.c.b16 %v3611, %v3605
    %v3696 = vpack.c.b16 %v3612, %v3606
    %v3697 = vpack.c.b16 %v3613, %v3607
    %v3698 = vpack.c.b16 %v3620, %v3614
    %v3699 = vpack.c.b16 %v3621, %v3615
    %v3700 = vpack.c.b16 %v3622, %v3616
    %v3701 = vpack.c.b16 %v3623, %v3617
    %v3702 = vpack.c.b16 %v3624, %v3618
    %v3703 = vpack.c.b16 %v3625, %v3619
    %v3704 = vpack.c.b16 %v3632, %v3626
    %v3705 = vpack.c.b16 %v3633, %v3627
    %v3706 = vpack.c.b16 %v3634, %v3628
    %v3707 = vpack.c.b16 %v3635, %v3629
    %v3708 = vpack.c.b16 %v3636, %v3630
    %v3709 = vpack.c.b16 %v3637, %v3631
    %v3710 = vpack.c.b16 %v3644, %v3638
    %v3711 = vpack.c.b16 %v3645, %v3639
    %v3712 = vpack.c.b16 %v3646, %v3640
    %v3713 = vpack.c.b16 %v3647, %v3641
    %v3714 = vpack.c.b16 %v3648, %v3642
    %v3715 = vpack.c.b16 %v3649, %v3643
    %v3716 = vpack.c.b16 %v3656, %v3650
    %v3717 = vpack.c.b16 %v3657, %v3651
    %v3718 = vpack.c.b16 %v3658, %v3652
    %v3719 = vpack.c.b16 %v3659, %v3653
    %v3720 = vpack.c.b16 %v3660, %v3654
    %v3721 = vpack.c.b16 %v3661, %v3655
    %v3722 = vpack.c.b16 %v3668, %v3662
    %v3723 = vpack.c.b16 %v3669, %v3663
    %v3724 = vpack.c.b16 %v3670, %v3664
    %v3725 = vpack.c.b16 %v3671, %v3665
    %v3726 = vpack.c.b16 %v3672, %v3666
    %v3727 = vpack.c.b16 %v3673, %v3667
    %v3728 = vpack.c.b16 %v3680, %v3674
    %v3729 = vpack.c.b16 %v3681, %v3675
    %v3730 = vpack.c.b16 %v3682, %v3676
    %v3731 = vpack.c.b16 %v3683, %v3677
    %v3732 = vpack.c.b16 %v3684, %v3678
    %v3733 = vpack.c.b16 %v3685, %v3679
    %3782 = vmatpush.bf16.msra.mxu0 %v3728
    %3783 = vmatpush.bf16.msra.mxu0 %v3722
    %3784 = vmatpush.bf16.msra.mxu0 %v3716
    %3785 = vmatpush.bf16.msra.mxu0 %v3710
    %3786 = vmatpush.bf16.msra.mxu0 %v3704
    %3787 = vmatpush.bf16.msra.mxu0 %v3698
    %3788 = vmatpush.bf16.msra.mxu0 %v3692
    %3789 = vmatpush.bf16.msra.mxu0 %v3686
    %3790 = vmatmul.bf16.gmra.mxu0 %v3493
    %v3791 = vpop.f32.mrf.mxu0
    %v3792 = vadd.f32 0.0, %v3791
    %v3793 = vpop.f32.mrf.mxu0
    %3794 = vdwg.mxu0
    %3795 = vmatpush.bf16.msra.mxu0 %v3729
    %3796 = vmatpush.bf16.msra.mxu0 %v3723
    %3797 = vmatpush.bf16.msra.mxu0 %v3717
    %3798 = vmatpush.bf16.msra.mxu0 %v3711
    %3799 = vmatpush.bf16.msra.mxu0 %v3705
    %3800 = vmatpush.bf16.msra.mxu0 %v3699
    %3801 = vmatpush.bf16.msra.mxu0 %v3693
    %3802 = vmatpush.bf16.msra.mxu0 %v3687
    %3803 = vmatmul.bf16.gmra.mxu0 %v3493
    %v3804 = vpop.f32.mrf.mxu0
    %v3805 = vadd.f32 0.0, %v3804
    %v3806 = vpop.f32.mrf.mxu0
    %3807 = vdwg.mxu0
    %3808 = vmatpush.bf16.msra.mxu0 %v3730
    %3809 = vmatpush.bf16.msra.mxu0 %v3724
    %3810 = vmatpush.bf16.msra.mxu0 %v3718
    %3811 = vmatpush.bf16.msra.mxu0 %v3712
    %3812 = vmatpush.bf16.msra.mxu0 %v3706
    %3813 = vmatpush.bf16.msra.mxu0 %v3700
    %3814 = vmatpush.bf16.msra.mxu0 %v3694
    %3815 = vmatpush.bf16.msra.mxu0 %v3688
    %3816 = vmatmul.bf16.gmra.mxu0 %v3493
    %v3817 = vpop.f32.mrf.mxu0
    %v3818 = vadd.f32 0.0, %v3817
    %v3819 = vpop.f32.mrf.mxu0
    %3820 = vdwg.mxu0
    %3821 = vmatpush.bf16.msra.mxu0 %v3731
    %3822 = vmatpush.bf16.msra.mxu0 %v3725
    %3823 = vmatpush.bf16.msra.mxu0 %v3719
    %3824 = vmatpush.bf16.msra.mxu0 %v3713
    %3825 = vmatpush.bf16.msra.mxu0 %v3707
    %3826 = vmatpush.bf16.msra.mxu0 %v3701
    %3827 = vmatpush.bf16.msra.mxu0 %v3695
    %3828 = vmatpush.bf16.msra.mxu0 %v3689
    %3829 = vmatmul.bf16.gmra.mxu0 %v3493
    %v3830 = vpop.f32.mrf.mxu0
    %v3831 = vadd.f32 0.0, %v3830
    %v3832 = vpop.f32.mrf.mxu0
    %3833 = vdwg.mxu0
    %3834 = vmatpush.bf16.msra.mxu0 %v3732
    %3835 = vmatpush.bf16.msra.mxu0 %v3726
    %3836 = vmatpush.bf16.msra.mxu0 %v3720
    %3837 = vmatpush.bf16.msra.mxu0 %v3714
    %3838 = vmatpush.bf16.msra.mxu0 %v3708
    %3839 = vmatpush.bf16.msra.mxu0 %v3702
    %3840 = vmatpush.bf16.msra.mxu0 %v3696
    %3841 = vmatpush.bf16.msra.mxu0 %v3690
    %3842 = vmatmul.bf16.gmra.mxu0 %v3493
    %v3843 = vpop.f32.mrf.mxu0
    %v3844 = vadd.f32 0.0, %v3843
    %v3845 = vpop.f32.mrf.mxu0
    %3846 = vdwg.mxu0
    %3847 = vmatpush.bf16.msra.mxu0 %v3733
    %3848 = vmatpush.bf16.msra.mxu0 %v3727
    %3849 = vmatpush.bf16.msra.mxu0 %v3721
    %3850 = vmatpush.bf16.msra.mxu0 %v3715
    %3851 = vmatpush.bf16.msra.mxu0 %v3709
    %3852 = vmatpush.bf16.msra.mxu0 %v3703
    %3853 = vmatpush.bf16.msra.mxu0 %v3697
    %3854 = vmatpush.bf16.msra.mxu0 %v3691
    %3855 = vmatmul.bf16.gmra.mxu0 %v3493
    %v3856 = vpop.f32.mrf.mxu0
    %v3857 = vadd.f32 0.0, %v3856
    %v3858 = vpop.f32.mrf.mxu0
    %3859 = vdwg.mxu0
    %v3860 = vld [vmem:[#allocation41] sm:$0x1]
    %v3861 = vrot.slane %v3792, 7
    %v3862 = vmul.f32 %v3381, %v3861
    %v3863 = vadd.f32 %v3805, %v3862
    %v3864 = vrot.slane %v3818, 1
    %v3865 = vmul.f32 %v3383, %v3864
    %v3866 = vadd.f32 %v3863, %v3865
    %v3868 = vperm.slane %v3860, 0
    %v3870 = vadd.f32 %v3866, %v3868
    %v3871 = vmax.f32 %v3870, 0.0
    %v3872 = vpack.c.bf16 %v3871, %v3871
    %v3873 = vld [vmem:[#allocation49] sm:$0xf]
    %v3874 = vld [vmem:[#allocation49 + $0x4] sm:$0xf]
    %v3875 = vld [vmem:[#allocation49 + $0x8] sm:$0xf]
    %v3876 = vld [vmem:[#allocation49 + $0xc] sm:$0xf]
    %v3877 = vld [vmem:[#allocation49 + $0x10] sm:$0xf]
    %v3878 = vld [vmem:[#allocation49 + $0x14] sm:$0xf]
    %v3879 = vld [vmem:[#allocation49 + $0x18] sm:$0xf]
    %v3880 = vld [vmem:[#allocation49 + $0x1c] sm:$0xf]
    %v3881 = vld [vmem:[#allocation49 + $0x20] sm:$0xf]
    %v3882 = vld [vmem:[#allocation49 + $0x24] sm:$0xf]
    %v3883 = vld [vmem:[#allocation49 + $0x28] sm:$0xf]
    %v3884 = vld [vmem:[#allocation49 + $0x2c] sm:$0xf]
    %v3885 = vld [vmem:[#allocation49 + $0x30] sm:$0xf]
    %v3886 = vld [vmem:[#allocation49 + $0x34] sm:$0xf]
    %v3887 = vld [vmem:[#allocation49 + $0x38] sm:$0xf]
    %v3888 = vld [vmem:[#allocation49 + $0x3c] sm:$0xf]
    %v3889 = vld [vmem:[#allocation43] sm:$0x1]
    %v3891 = vperm.slane %v3889, 0
    %v3909 = vunpack.c.l.b16 %v3873
    %v3910 = vunpack.c.l.b16 %v3874
    %v3911 = vunpack.c.l.b16 %v3875
    %v3912 = vunpack.c.l.b16 %v3876
    %v3913 = vunpack.c.l.b16 %v3877
    %v3914 = vunpack.c.l.b16 %v3878
    %v3915 = vunpack.c.l.b16 %v3879
    %v3916 = vunpack.c.l.b16 %v3880
    %v3917 = vunpack.c.l.b16 %v3881
    %v3918 = vunpack.c.l.b16 %v3882
    %v3919 = vunpack.c.l.b16 %v3883
    %v3920 = vunpack.c.l.b16 %v3884
    %v3921 = vunpack.c.l.b16 %v3885
    %v3922 = vunpack.c.l.b16 %v3886
    %v3923 = vunpack.c.l.b16 %v3887
    %v3924 = vunpack.c.l.b16 %v3888
    %v3925 = vpack.c.b16 %v3910, %v3909
    %v3926 = vpack.c.b16 %v3912, %v3911
    %v3927 = vpack.c.b16 %v3914, %v3913
    %v3928 = vpack.c.b16 %v3916, %v3915
    %v3929 = vpack.c.b16 %v3918, %v3917
    %v3930 = vpack.c.b16 %v3920, %v3919
    %v3931 = vpack.c.b16 %v3922, %v3921
    %v3932 = vpack.c.b16 %v3924, %v3923
    %3941 = vmatpush.bf16.msra.mxu0 %v3932
    %3942 = vmatpush.bf16.msra.mxu0 %v3931
    %3943 = vmatpush.bf16.msra.mxu0 %v3930
    %3944 = vmatpush.bf16.msra.mxu0 %v3929
    %3945 = vmatpush.bf16.msra.mxu0 %v3928
    %3946 = vmatpush.bf16.msra.mxu0 %v3927
    %3947 = vmatpush.bf16.msra.mxu0 %v3926
    %3948 = vmatpush.bf16.msra.mxu0 %v3925
    %3949 = vmatmul.bf16.gmra.mxu0 %v3872
    %v3950 = vpop.f32.mrf.mxu0
    %v3951 = vadd.f32 %v3891, %v3950
    %v3952 = vpop.f32.mrf.mxu0
    %3953 = vdwg.mxu0
    %v3954 = vadd.f32 %v3488, %v3951
    %v3955 = vld [vmem:[#allocation44] sm:$0x1]
    %v3956 = vrot.slane %v3831, 7
    %v3957 = vmul.f32 %v3381, %v3956
    %v3958 = vadd.f32 %v3844, %v3957
    %v3959 = vrot.slane %v3857, 1
    %v3960 = vmul.f32 %v3383, %v3959
    %v3961 = vadd.f32 %v3958, %v3960
    %v3963 = vperm.slane %v3955, 0
    %v3965 = vadd.f32 %v3961, %v3963
    %v3966 = vadd.f32 %v3965, %v3870
    %v3967 = vmax.f32 %v3954, 0.0
    %v3968 = vpack.c.bf16 %v3967, %v3967
    %v3969 = vld [vmem:[#allocation50] sm:$0xf]
    %v3970 = vld [vmem:[#allocation50 + $0x4] sm:$0xf]
    %v3971 = vld [vmem:[#allocation50 + $0x8] sm:$0xf]
    %v3972 = vld [vmem:[#allocation50 + $0xc] sm:$0xf]
    %v3973 = vld [vmem:[#allocation50 + $0x10] sm:$0xf]
    %v3974 = vld [vmem:[#allocation50 + $0x14] sm:$0xf]
    %v3975 = vld [vmem:[#allocation50 + $0x18] sm:$0xf]
    %v3976 = vld [vmem:[#allocation50 + $0x1c] sm:$0xf]
    %v3977 = vld [vmem:[#allocation50 + $0x20] sm:$0xf]
    %v3978 = vld [vmem:[#allocation50 + $0x24] sm:$0xf]
    %v3979 = vld [vmem:[#allocation50 + $0x28] sm:$0xf]
    %v3980 = vld [vmem:[#allocation50 + $0x2c] sm:$0xf]
    %v3981 = vld [vmem:[#allocation50 + $0x30] sm:$0xf]
    %v3982 = vld [vmem:[#allocation50 + $0x34] sm:$0xf]
    %v3983 = vld [vmem:[#allocation50 + $0x38] sm:$0xf]
    %v3984 = vld [vmem:[#allocation50 + $0x3c] sm:$0xf]
    %v3985 = vld [vmem:[#allocation46] sm:$0x1]
    %v3987 = vperm.slane %v3985, 0
    %v4005 = vunpack.c.l.b16 %v3969
    %v4006 = vunpack.c.l.b16 %v3970
    %v4007 = vunpack.c.l.b16 %v3971
    %v4008 = vunpack.c.l.b16 %v3972
    %v4009 = vunpack.c.l.b16 %v3973
    %v4010 = vunpack.c.l.b16 %v3974
    %v4011 = vunpack.c.l.b16 %v3975
    %v4012 = vunpack.c.l.b16 %v3976
    %v4013 = vunpack.c.l.b16 %v3977
    %v4014 = vunpack.c.l.b16 %v3978
    %v4015 = vunpack.c.l.b16 %v3979
    %v4016 = vunpack.c.l.b16 %v3980
    %v4017 = vunpack.c.l.b16 %v3981
    %v4018 = vunpack.c.l.b16 %v3982
    %v4019 = vunpack.c.l.b16 %v3983
    %v4020 = vunpack.c.l.b16 %v3984
    %v4021 = vpack.c.b16 %v4006, %v4005
    %v4022 = vpack.c.b16 %v4008, %v4007
    %v4023 = vpack.c.b16 %v4010, %v4009
    %v4024 = vpack.c.b16 %v4012, %v4011
    %v4025 = vpack.c.b16 %v4014, %v4013
    %v4026 = vpack.c.b16 %v4016, %v4015
    %v4027 = vpack.c.b16 %v4018, %v4017
    %v4028 = vpack.c.b16 %v4020, %v4019
    %4037 = vmatpush.bf16.msra.mxu0 %v4028
    %4038 = vmatpush.bf16.msra.mxu0 %v4027
    %4039 = vmatpush.bf16.msra.mxu0 %v4026
    %4040 = vmatpush.bf16.msra.mxu0 %v4025
    %4041 = vmatpush.bf16.msra.mxu0 %v4024
    %4042 = vmatpush.bf16.msra.mxu0 %v4023
    %4043 = vmatpush.bf16.msra.mxu0 %v4022
    %4044 = vmatpush.bf16.msra.mxu0 %v4021
    %4045 = vmatmul.bf16.gmra.mxu0 %v3968
    %v4046 = vpop.f32.mrf.mxu0
    %v4047 = vadd.f32 %v3987, %v4046
    %v4048 = vpop.f32.mrf.mxu0
    %4049 = vdwg.mxu0
    %v4050 = vadd.f32 %v3966, %v4047
    %v4051 = vld [vmem:[#allocation52] sm:$0x1]
    %v4053 = vperm.slane %v4051, 0
    %v4055 = vmul.f32 %v4050, %v4053
    %v4056 = vld [vmem:[#allocation53] sm:$0x1]
    %v4058 = vperm.slane %v4056, 0
    %v4060 = vadd.f32 %v4055, %v4058
    %v4061 = vmax.f32 %v4060, 0.0
    %v4062 = vpack.c.bf16 %v4061, %v4061
    %v4063 = vld [vmem:[#allocation56] sm:$0xf]
    %v4064 = vld [vmem:[#allocation56 + $0x4] sm:$0xf]
    %v4065 = vld [vmem:[#allocation56 + $0x8] sm:$0xf]
    %v4066 = vld [vmem:[#allocation56 + $0xc] sm:$0xf]
    %v4067 = vld [vmem:[#allocation56 + $0x10] sm:$0xf]
    %v4068 = vld [vmem:[#allocation56 + $0x14] sm:$0xf]
    %v4069 = vld [vmem:[#allocation56 + $0x18] sm:$0xf]
    %v4070 = vld [vmem:[#allocation56 + $0x1c] sm:$0xf]
    %v4071 = vld [vmem:[#allocation56 + $0x20] sm:$0xf]
    %v4072 = vld [vmem:[#allocation56 + $0x24] sm:$0xf]
    %v4073 = vld [vmem:[#allocation56 + $0x28] sm:$0xf]
    %v4074 = vld [vmem:[#allocation56 + $0x2c] sm:$0xf]
    %v4075 = vld [vmem:[#allocation56 + $0x30] sm:$0xf]
    %v4076 = vld [vmem:[#allocation56 + $0x34] sm:$0xf]
    %v4077 = vld [vmem:[#allocation56 + $0x38] sm:$0xf]
    %v4078 = vld [vmem:[#allocation56 + $0x3c] sm:$0xf]
    %v4095 = vunpack.c.l.b16 %v4063
    %v4096 = vunpack.c.l.b16 %v4064
    %v4097 = vunpack.c.l.b16 %v4065
    %v4098 = vunpack.c.l.b16 %v4066
    %v4099 = vunpack.c.l.b16 %v4067
    %v4100 = vunpack.c.l.b16 %v4068
    %v4101 = vunpack.c.l.b16 %v4069
    %v4102 = vunpack.c.l.b16 %v4070
    %v4103 = vunpack.c.l.b16 %v4071
    %v4104 = vunpack.c.l.b16 %v4072
    %v4105 = vunpack.c.l.b16 %v4073
    %v4106 = vunpack.c.l.b16 %v4074
    %v4107 = vunpack.c.l.b16 %v4075
    %v4108 = vunpack.c.l.b16 %v4076
    %v4109 = vunpack.c.l.b16 %v4077
    %v4110 = vunpack.c.l.b16 %v4078
    %v4111 = vpack.c.b16 %v4096, %v4095
    %v4112 = vpack.c.b16 %v4098, %v4097
    %v4113 = vpack.c.b16 %v4100, %v4099
    %v4114 = vpack.c.b16 %v4102, %v4101
    %v4115 = vpack.c.b16 %v4104, %v4103
    %v4116 = vpack.c.b16 %v4106, %v4105
    %v4117 = vpack.c.b16 %v4108, %v4107
    %v4118 = vpack.c.b16 %v4110, %v4109
    %4127 = vmatpush.bf16.msra.mxu0 %v4118
    %4128 = vmatpush.bf16.msra.mxu0 %v4117
    %4129 = vmatpush.bf16.msra.mxu0 %v4116
    %4130 = vmatpush.bf16.msra.mxu0 %v4115
    %4131 = vmatpush.bf16.msra.mxu0 %v4114
    %4132 = vmatpush.bf16.msra.mxu0 %v4113
    %4133 = vmatpush.bf16.msra.mxu0 %v4112
    %4134 = vmatpush.bf16.msra.mxu0 %v4111
    %4135 = vmatmul.bf16.gmra.mxu0 %v4062
    %v4136 = vpop.f32.mrf.mxu0
    %v4137 = vadd.f32 0.0, %v4136
    %v4138 = vpop.f32.mrf.mxu0
    %4139 = vdwg.mxu0
    %v4140 = vld [vmem:[#allocation55] sm:$0x1]
    %v4141 = vpack.c.bf16 %v4137, %v4137
    %vm4142 = vcmask 64512
    %v4144 = vsel %vm4142, %v4140, 0
    %vm4146 = vcmask 1043456
    %v4148 = vsel %vm4146, %v4141, 0
    %4150 = vmatpush.bf16.msra.mxu0 0
    %4151 = vmatpush.bf16.msra.mxu0 0
    %4152 = vmatpush.bf16.msra.mxu0 0
    %4153 = vmatpush.bf16.msra.mxu0 0
    %4154 = vmatpush.bf16.msra.mxu0 0
    %4155 = vmatpush.bf16.msra.mxu0 0
    %4156 = vmatpush.bf16.msra.mxu0 0
    %4157 = vmatpush.bf16.msra.mxu0 %v4148
    %4158 = vmatmul.bf16.gmra.mxu0 %v4144
    %v4159 = vpop.f32.mrf.mxu0
    %v4160 = vadd.f32 0.0, %v4159
    %v4161 = vpop.f32.mrf.mxu0
    %4162 = vdwg.mxu0
    %vm4163 = vcmask 254976
    %4164 = vst.msk [vmem:[#allocation61] sm:$0x3] %vm4163, %v4160
    %v4165 = vld [vmem:[#allocation58] sm:$0xff]
    %v4166 = vld [vmem:[#allocation58 + $0x8] sm:$0xff]
    %v4167 = vld [vmem:[#allocation58 + $0x10] sm:$0xff]
    %v4168 = vld [vmem:[#allocation58 + $0x18] sm:$0xff]
    %v4169 = vld [vmem:[#allocation59] sm:$0x1]
    %v4171 = vperm.slane %v4169, 0
    %v4174 = vsel %vm1937, %v4160, 0
    %4176 = vmatpush.msra.mxu0 0.0
    %4177 = vmatpush.msra.mxu0 0.0
    %4178 = vmatpush.msra.mxu0 0.0
    %4179 = vmatpush.msra.mxu0 0.0
    %4180 = vmatpush.msra.mxu0 0.0
    %4181 = vmatpush.msra.mxu0 0.0
    %4182 = vmatpush.msra.mxu0 0.0
    %4183 = vmatpush.msra.mxu0 0.0
    %4184 = vmatpush.msra.mxu0 0.0
    %4185 = vmatpush.msra.mxu0 0.0
    %4186 = vmatpush.msra.mxu0 0.0
    %4187 = vmatpush.msra.mxu0 0.0
    %4188 = vmatpush.msra.mxu0 %v4168
    %4189 = vmatpush.msra.mxu0 %v4167
    %4190 = vmatpush.msra.mxu0 %v4166
    %4191 = vmatpush.msra.mxu0 %v4165
    %4192 = vmatmul.f32.gmra.mxu0 %v4174
    %v4193 = vpop.f32.mrf.mxu0
    %v4194 = vadd.f32 %v4171, %v4193
    %4195 = vdwg.mxu0
    %vm4196 = vcmask 74752
    %4197 = vst.msk [vmem:[#allocation62] sm:$0x3] %vm4196, %v4194
    // Predicated region
    $region330: #{forward.1} parent=1 // pred_check
      _
    $region331: #{forward.1} parent=1 // pred_check_branch
      %4199 = sbr.rel (0) target = $region333
    $region332: #{forward.1} parent=1 // pred_region
      %4201 = vsyncadd [#allocation4], 0
      %s4203 = sshll.u32 [#allocation61], 4
      %s4204 = int_to_ptr.vmem [resolvable:$true] %s4203
      %s4205 = sshll.u32 %s89, 4
      %s4206 = int_to_ptr.hbm [resolvable:$true] %s4205
      %4208 = dma.vmem_to_hbm [thread:$0]  %s4204, 32, %s4206, [#allocation4]
    $region333: #{forward.1} parent=1 // pred_fallthru
      _
    // Predicated region
    $region334: #{forward.1} parent=1 // pred_check
      _
    $region335: #{forward.1} parent=1 // pred_check_branch
      %4210 = sbr.rel (0) target = $region337
    $region336: #{forward.1} parent=1 // pred_region
      %4212 = vsyncadd [#allocation63], 0
      %s4214 = sshll.u32 [#allocation62], 4
      %s4215 = int_to_ptr.vmem [resolvable:$true] %s4214
      %s4216 = sshll.u32 %s91, 4
      %s4217 = int_to_ptr.hbm [resolvable:$true] %s4216
      %4219 = dma.vmem_to_hbm [thread:$0]  %s4215, 32, %s4217, [#allocation63]
    $region337: #{forward.1} parent=1 // pred_fallthru
      _
    // Predicated region
    $region338: #{forward.1} parent=1 // pred_check
      _
    $region339: #{forward.1} parent=1 // pred_check_branch
      %4221 = sbr.rel (0) target = $region341
    $region340: #{forward.1} parent=1 // pred_region
      _
    $region341: #{forward.1} parent=1 // pred_fallthru
      _
    // Predicated region
    $region342: #{forward.1} parent=1 // pred_check
      _
    $region343: #{forward.1} parent=1 // pred_check_branch
      %4223 = sbr.rel (0) target = $region345
    $region344: #{forward.1} parent=1 // pred_region
      _
    $region345: #{forward.1} parent=1 // pred_fallthru
      _
    // Predicated region
    $region346: #{forward.1} parent=1 // pred_check
      _
    $region347: #{forward.1} parent=1 // pred_check_branch
      %4225 = sbr.rel (0) target = $region349
    $region348: #{forward.1} parent=1 // pred_region
      %4227 = dma.done [#allocation4], 32
    $region349: #{forward.1} parent=1 // pred_fallthru
      _
    // Predicated region
    $region350: #{forward.1} parent=1 // pred_check
      _
    $region351: #{forward.1} parent=1 // pred_check_branch
      %4229 = sbr.rel (0) target = $region353
    $region352: #{forward.1} parent=1 // pred_region
      %4231 = dma.done [#allocation63], 32
    $region353: #{forward.1} parent=1 // pred_fallthru
      _
    // Predicated region
    $region354: #{forward.1} parent=1 // pred_check
      _
    $region355: #{forward.1} parent=1 // pred_check_branch
      %4233 = sbr.rel (0) target = $region357
    $region356: #{forward.1} parent=1 // pred_region
      _
    $region357: #{forward.1} parent=1 // pred_fallthru
      _
    // Predicated region
    $region358: #{forward.1} parent=1 // pred_check
      _
    $region359: #{forward.1} parent=1 // pred_check_branch
      %4235 = sbr.rel (0) target = $region361
    $region360: #{forward.1} parent=1 // pred_region
      _
    $region361: #{forward.1} parent=1 // pred_fallthru
      _
    %4236 = vsyncpa [#allocation3], 1
    %4237 = vsyncpa [#allocation6], 1
    %4238 = vsyncpa [#allocation9], 1
    %4239 = vsyncpa [#allocation12], 1
    %4240 = vsyncpa [#allocation15], 1
    %4241 = vsyncpa [#allocation18], 1
    %4242 = vsyncpa [#allocation21], 1
    %4243 = vsyncpa [#allocation24], 1
    %4244 = vsyncpa [#allocation27], 1
    %4245 = vsyncpa [#allocation30], 1
    %4246 = vsyncpa [#allocation33], 1
    %4247 = vsyncpa [#allocation36], 1
    %4248 = vsyncpa [#allocation39], 1
    %4249 = vsyncpa [#allocation42], 1
    %4250 = vsyncpa [#allocation45], 1
    %4251 = vsyncpa [#allocation48], 1
    %4252 = vsyncpa [#allocation51], 1
    %4253 = vsyncpa [#allocation54], 1
    %4254 = vsyncpa [#allocation57], 1
    %4255 = vsyncpa [#allocation60], 1
    %4256 = vsyncpa [#allocation4], 1
    %4257 = vsyncpa [#allocation63], 1

</llo_original>
